<compile_context>
chip_gen: v7x
topology: tpu7x:2x2x1
jax: 0.10.0
libtpu: 0.0.40
codegen_flags: <defaults>
</compile_context>

<pallas_src>
import functools

import jax
import jax.numpy as jnp
from jax import lax
from jax.experimental import pallas as pl
from jax.experimental.pallas import tpu as pltpu

_EPS = 1e-5
_LANE = 128
_SUB = 8


def _round_up(x, m):
    return (x + m - 1) // m * m


# ----------------------------------------------------------------------------
# In-kernel 3x3 conv: unrolled per-tap-pair accumulating MXU passes.
# ----------------------------------------------------------------------------
def _conv3x3_taps(p_ref, w_ref, cin, dout, ho, wo, stride):
    """3x3 conv over a 1-pixel-padded scratch ref, K = 2*cin per MXU pass.

    The im2col slab is never materialised; each pass reads one (or two) tap
    windows, casts to bf16 and accumulates into a single f32 accumulator.
    # TODO(synk): on v5e (128-deep MXU) single-tap K=cin passes are enough.
    """
    def tap(kh, kw):
        if stride == 1:
            win = p_ref[kh:kh + ho, kw:kw + wo, :]
        else:
            win = p_ref[pl.ds(kh, ho, stride=stride),
                        pl.ds(kw, wo, stride=stride), :]
        return win.reshape(ho * wo, cin).astype(jnp.bfloat16)

    offs = [(kh, kw) for kh in range(3) for kw in range(3)]
    acc = jnp.zeros((ho * wo, dout), jnp.float32)
    t = 0
    while t < 9:
        if t + 1 < 9:                      # pair of taps -> K = 2*cin
            lhs = jnp.concatenate([tap(*offs[t]), tap(*offs[t + 1])], axis=-1)
            rhs = w_ref[t * cin:(t + 2) * cin, :]
            t += 2
        else:                              # 9th tap alone, K = cin
            lhs = tap(*offs[t])
            rhs = w_ref[t * cin:(t + 1) * cin, :]
            t += 1
        acc += jnp.dot(lhs, rhs, preferred_element_type=jnp.float32)
    return acc


# ----------------------------------------------------------------------------
# Pallas kernel: one batch element per grid step ("parallel" axis).
# ----------------------------------------------------------------------------
def _bottleneck_kernel(*refs, stride, has_conv_shortcut):
    if has_conv_shortcut:
        (x_ref, w1_ref, w2_ref, s1_ref, b1_ref, alpha_ref, b2_ref,
         wsc_ref, bsc_ref, o_ref, p1_ref, p2_ref) = refs
    else:
        (x_ref, w1_ref, w2_ref, s1_ref, b1_ref, alpha_ref, b2_ref,
         o_ref, p1_ref, p2_ref) = refs

    H, W, Cp = x_ref.shape
    Dp = w1_ref.shape[-1]
    Ho, Wo, _ = o_ref.shape
    f32 = jnp.float32
    bf16 = jnp.bfloat16

    # Zero only the 1-pixel halo of the padded scratch buffers; the (H, W)
    # interior is fully overwritten below on every grid step (done each step
    # so the batch axis can safely be "parallel" across TensorCores).
    for ref in (p1_ref, p2_ref):
        _, wp2, c = ref.shape
        dt = ref.dtype
        ref[0:1, :, :] = jnp.zeros((1, wp2, c), dt)
        ref[H + 1:H + 2, :, :] = jnp.zeros((1, wp2, c), dt)
        ref[1:H + 1, 0:1, :] = jnp.zeros((H, 1, c), dt)
        ref[1:H + 1, W + 1:W + 2, :] = jnp.zeros((H, 1, c), dt)

    x = x_ref[...]                                         # (H, W, Cp) f32

    # ---- residual branch -----------------------------------------------------
    # BN1 (inference, folded to per-channel scale/bias), f32; store bf16.
    y = x.reshape(H * W, Cp) * s1_ref[...] + b1_ref[...]
    p1_ref[1:H + 1, 1:W + 1, :] = y.reshape(H, W, Cp).astype(p1_ref.dtype)

    # conv1: 3x3, stride 1, pad 1 (accumulating tap-pair matmuls).
    acc1 = _conv3x3_taps(p1_ref, w1_ref, Cp, Dp, H, W, 1)

    # PReLU with per-channel alpha (f32); store to padded scratch.
    z = jnp.where(acc1 > 0, acc1, acc1 * alpha_ref[...])
    p2_ref[1:H + 1, 1:W + 1, :] = z.reshape(H, W, Dp).astype(p2_ref.dtype)

    # conv2: 3x3, stride s, pad 1, evaluated only at output positions.
    # BN2 scale is folded into w2; only the bias add remains.
    res = _conv3x3_taps(p2_ref, w2_ref, Dp, Dp, Ho, Wo, stride) + b2_ref[...]

    # ---- shortcut branch -------------------------------------------------------
    if stride == 1:
        x_sub = x.reshape(Ho * Wo, Cp)
    else:
        x_sub = x_ref[pl.ds(0, Ho, stride=stride),
                      pl.ds(0, Wo, stride=stride), :].reshape(Ho * Wo, Cp)

    if has_conv_shortcut:
        # 1x1 strided conv with shortcut-BN scale folded into the weight.
        sc = jnp.dot(x_sub.astype(bf16), wsc_ref[...],
                     preferred_element_type=f32) + bsc_ref[...]
    else:
        # in_channel == depth: MaxPool2d(1, stride) == pure subsample (exact).
        sc = x_sub

    o_ref[...] = (res + sc).reshape(Ho, Wo, Dp)


# ----------------------------------------------------------------------------
# Wrapper: parameter folding / channel padding / layout conversion.
# ----------------------------------------------------------------------------
def _bn_fold(bn):
    gamma, beta, mean, var = bn
    inv = gamma / jnp.sqrt(var + _EPS)
    return inv.astype(jnp.float32), (beta - mean * inv).astype(jnp.float32)


def _pad_row(v, c_pad, fill=0.0):
    c = v.shape[0]
    return jnp.pad(v, (0, c_pad - c), constant_values=fill).reshape(1, c_pad)


def _pack_conv3x3(w_oihw, c_pad, d_pad, out_scale=None):
    d, c = w_oihw.shape[0], w_oihw.shape[1]
    w = w_oihw
    if out_scale is not None:                       # fold BN scale (per out ch)
        w = w * out_scale[:, None, None, None]
    w = jnp.transpose(w, (2, 3, 1, 0)).reshape(9, c, d)   # (tap, cin, cout)
    w = jnp.pad(w, ((0, 0), (0, c_pad - c), (0, d_pad - d)))
    return w.reshape(9 * c_pad, d_pad).astype(jnp.bfloat16)


def bottleneck_ir_forward(x_nchw, params, stride):
    N, Cin, H, W = x_nchw.shape
    D = params["w1"].shape[0]
    Ho = (H - 1) // stride + 1
    Wo = (W - 1) // stride + 1
    Cp = _round_up(Cin, _LANE)
    Dp = _round_up(D, _LANE)
    Wp2 = _round_up(W + 2, _SUB)            # scratch width: sublane multiple

    s1, b1 = _bn_fold(params["bn1"])
    s1 = _pad_row(s1, Cp, 1.0)
    b1 = _pad_row(b1, Cp)
    s2, b2 = _bn_fold(params["bn2"])
    b2 = _pad_row(b2, Dp)
    alpha = _pad_row(params["prelu"].astype(jnp.float32), Dp)

    w1 = _pack_conv3x3(params["w1"], Cp, Dp)                     # (9*Cp, Dp)
    w2 = _pack_conv3x3(params["w2"], Dp, Dp, out_scale=s2)       # BN2 folded

    has_conv_shortcut = params["shortcut"] is not None
    extra = []
    if has_conv_shortcut:
        wsc_oihw, bn_sc = params["shortcut"]
        ssc, bsc = _bn_fold(bn_sc)
        wsc = wsc_oihw.reshape(D, Cin) * ssc[:, None]            # fold BN scale
        wsc = jnp.pad(wsc.T.astype(jnp.float32),
                      ((0, Cp - Cin), (0, Dp - D))).astype(jnp.bfloat16)
        extra = [wsc, _pad_row(bsc, Dp)]

    # NCHW -> NHWC, zero-pad channels to the 128-lane width (lane-dense).
    # x stays f32 so the identity shortcut is exact and strided reads stay on
    # a 32-bit ref.
    x_nhwc = jnp.transpose(x_nchw, (0, 2, 3, 1)).astype(jnp.float32)
    x_nhwc = jnp.pad(x_nhwc, ((0, 0), (0, 0), (0, 0), (0, Cp - Cin)))

    # bf16 scratch; the stride-2 conv2 scratch stays f32 (strided pl.ds reads
    # on a packed dtype are avoided).
    p1_dtype = jnp.bfloat16
    p2_dtype = jnp.bfloat16 if stride == 1 else jnp.float32

    # Explicit VMEM budget: double-buffered in/out blocks + weights + scratch
    # + generous headroom for in-kernel temporaries (accs, tap-pair operands).
    blocks = 2 * (H * W * Cp * 4 + Ho * Wo * Dp * 4)
    weights = 2 * 2 * (9 * Cp * Dp + 9 * Dp * Dp
                       + (Cp * Dp if has_conv_shortcut else 0))
    scratch = ((H + 2) * Wp2 * Cp * 2
               + (H + 2) * Wp2 * Dp * (2 if stride == 1 else 4))
    temps = 6 * H * W * max(Cp, Dp) * 4
    vmem_limit = int(min(max(blocks + weights + scratch + temps + (4 << 20),
                             32 << 20), 64 << 20))

    def const_spec(a):
        return pl.BlockSpec(a.shape, lambda n, nd=a.ndim: (0,) * nd)

    ins = [x_nhwc, w1, w2, s1, b1, alpha, b2] + extra
    in_specs = ([pl.BlockSpec((None, H, W, Cp), lambda n: (n, 0, 0, 0))]
                + [const_spec(a) for a in ins[1:]])
    out_spec = pl.BlockSpec((None, Ho, Wo, Dp), lambda n: (n, 0, 0, 0))

    kernel = functools.partial(_bottleneck_kernel, stride=stride,
                               has_conv_shortcut=has_conv_shortcut)

    out_nhwc = pl.pallas_call(
        kernel,
        out_shape=jax.ShapeDtypeStruct((N, Ho, Wo, Dp), jnp.float32),
        grid_spec=pltpu.PrefetchScalarGridSpec(
            num_scalar_prefetch=0,
            grid=(N,),
            in_specs=in_specs,
            out_specs=out_spec,
            scratch_shapes=[
                pltpu.VMEM((H + 2, Wp2, Cp), p1_dtype),   # padded BN1(x)
                pltpu.VMEM((H + 2, Wp2, Dp), p2_dtype),   # padded PReLU out
            ],
        ),
        compiler_params=pltpu.CompilerParams(
            dimension_semantics=("parallel",),            # v7x: 2 TCs
            vmem_limit_bytes=vmem_limit),
    )(*ins)

    # NOTE: downstream consumers that accept NHWC / padded-channel / bf16
    # layouts can skip this epilogue (it is an extra HBM pass); we keep NCHW
    # f32 here to match the PyTorch module's contract exactly.
    out = out_nhwc[:, :, :, :D]
    return jnp.transpose(out, (0, 3, 1, 2))


# ----------------------------------------------------------------------------
# Deterministic synthetic parameters (shapes follow BottleNeckIr.__init__).
# ----------------------------------------------------------------------------
def init_params(key, in_channel, depth):
    ks = jax.random.split(key, 6)

    def bn_params(k, c):
        k1, k2, k3, k4 = jax.random.split(k, 4)
        gamma = 1.0 + 0.1 * jax.random.normal(k1, (c,), jnp.float32)
        beta = 0.1 * jax.random.normal(k2, (c,), jnp.float32)
        mean = 0.1 * jax.random.normal(k3, (c,), jnp.float32)
        var = jnp.abs(1.0 + 0.1 * jax.random.normal(k4, (c,), jnp.float32))
        return gamma, beta, mean, var

    p = {
        "bn1": bn_params(ks[0], in_channel),
        "w1": 0.1 * jax.random.normal(ks[1], (depth, in_channel, 3, 3),
                                      jnp.float32),
        "prelu": 0.25 * jnp.ones((depth,), jnp.float32),   # PyTorch PReLU init
        "w2": 0.1 * jax.random.normal(ks[2], (depth, depth, 3, 3), jnp.float32),
        "bn2": bn_params(ks[3], depth),
    }
    if in_channel == depth:
        p["shortcut"] = None
    else:
        wsc = 0.1 * jax.random.normal(ks[4], (depth, in_channel, 1, 1),
                                      jnp.float32)
        p["shortcut"] = (wsc, bn_params(ks[5], depth))
    return p


# ----------------------------------------------------------------------------
# Pure-JAX reference (eval-mode BN), for correctness checking.
# ----------------------------------------------------------------------------
def reference_forward(x, params, stride):
    def bn(t, bnp):
        gamma, beta, mean, var = bnp
        inv = gamma / jnp.sqrt(var + _EPS)
        return ((t - mean[None, :, None, None]) * inv[None, :, None, None]
                + beta[None, :, None, None])

    dn = ("NCHW", "OIHW", "NCHW")
    if params["shortcut"] is None:
        sc = x[:, :, ::stride, ::stride]                 # MaxPool2d(1, stride)
    else:
        wsc, bn_sc = params["shortcut"]
        sc = lax.conv_general_dilated(x, wsc, (stride, stride), "VALID",
                                      dimension_numbers=dn)
        sc = bn(sc, bn_sc)

    r = bn(x, params["bn1"])
    r = lax.conv_general_dilated(r, params["w1"], (1, 1), ((1, 1), (1, 1)),
                                 dimension_numbers=dn)
    a = params["prelu"][None, :, None, None]
    r = jnp.where(r > 0, r, a * r)
    r = lax.conv_general_dilated(r, params["w2"], (stride, stride),
                                 ((1, 1), (1, 1)), dimension_numbers=dn)
    r = bn(r, params["bn2"])
    return r + sc


if __name__ == "__main__":
    key = jax.random.PRNGKey(0)
    N, H, W = 2, 16, 16
    configs = [
        dict(in_channel=4, depth=8, stride=2),   # conv+BN shortcut, stride 2
        dict(in_channel=8, depth=8, stride=1),   # MaxPool(1,1) (identity) shortcut
    ]

    for i, cfg in enumerate(configs):
        kx, kp = jax.random.split(jax.random.fold_in(key, i))
        x = jax.random.normal(kx, (N, cfg["in_channel"], H, W), jnp.float32)
        params = init_params(kp, cfg["in_channel"], cfg["depth"])

        out = bottleneck_ir_forward(x, params, cfg["stride"])
        out = jax.block_until_ready(out)

        ref = reference_forward(x, params, cfg["stride"])
        assert out.shape == ref.shape, (out.shape, ref.shape)
        max_err = float(jnp.max(jnp.abs(out - ref)))
        assert jnp.allclose(out, ref, atol=2e-2, rtol=2e-2), max_err

    print("KERNEL_OK")
</pallas_src>

<mosaic_0001>
module attributes {stable_mosaic.version = 11 : i64} {
  func.func @_bottleneck_kernel(%arg0: i32, %arg1: memref<1x16x16x128xf32, #tpu.memory_space<vmem>>, %arg2: memref<1152x128xbf16, #tpu.memory_space<vmem>>, %arg3: memref<1152x128xbf16, #tpu.memory_space<vmem>>, %arg4: memref<1x128xf32, #tpu.memory_space<vmem>>, %arg5: memref<1x128xf32, #tpu.memory_space<vmem>>, %arg6: memref<1x128xf32, #tpu.memory_space<vmem>>, %arg7: memref<1x128xf32, #tpu.memory_space<vmem>>, %arg8: memref<128x128xbf16, #tpu.memory_space<vmem>>, %arg9: memref<1x128xf32, #tpu.memory_space<vmem>>, %arg10: memref<1x8x8x128xf32, #tpu.memory_space<vmem>>, %arg11: memref<18x24x128xbf16, #tpu.memory_space<vmem>>, %arg12: memref<18x24x128xf32, #tpu.memory_space<vmem>>) attributes {dimension_semantics = [#tpu.dimension_semantics<parallel>], iteration_bounds = array<i64: 2>, scalar_prefetch = 0 : i64, scratch_operands = 2 : i64, tpu.core_type = #tpu.core_type<tc>, window_params = [{transform_indices = @transform_0, window_bounds = array<i64: 1, 16, 16, 128>}, {pipeline_mode = #tpu.pipeline_mode<synchronous>, transform_indices = @transform_1, window_bounds = array<i64: 1152, 128>}, {pipeline_mode = #tpu.pipeline_mode<synchronous>, transform_indices = @transform_2, window_bounds = array<i64: 1152, 128>}, {pipeline_mode = #tpu.pipeline_mode<synchronous>, transform_indices = @transform_3, window_bounds = array<i64: 1, 128>}, {pipeline_mode = #tpu.pipeline_mode<synchronous>, transform_indices = @transform_4, window_bounds = array<i64: 1, 128>}, {pipeline_mode = #tpu.pipeline_mode<synchronous>, transform_indices = @transform_5, window_bounds = array<i64: 1, 128>}, {pipeline_mode = #tpu.pipeline_mode<synchronous>, transform_indices = @transform_6, window_bounds = array<i64: 1, 128>}, {pipeline_mode = #tpu.pipeline_mode<synchronous>, transform_indices = @transform_7, window_bounds = array<i64: 128, 128>}, {pipeline_mode = #tpu.pipeline_mode<synchronous>, transform_indices = @transform_8, window_bounds = array<i64: 1, 128>}, {transform_indices = @transform_9, window_bounds = array<i64: 1, 8, 8, 128>}]} {
    %cst = arith.constant 0.000000e+00 : bf16
    %0 = vector.broadcast %cst : bf16 to vector<1x24x128xbf16>
    %c0 = arith.constant 0 : index
    %c0_0 = arith.constant 0 : index
    %c0_1 = arith.constant 0 : index
    %1 = vector.load %arg11[%c0, %c0_0, %c0_1] : memref<18x24x128xbf16, #tpu.memory_space<vmem>>, vector<1x24x128xbf16>
    tpu.vector_store %arg11[%c0, %c0_0, %c0_1], %0 {strides = array<i32>} : memref<18x24x128xbf16, #tpu.memory_space<vmem>>, vector<1x24x128xbf16>,
    %cst_2 = arith.constant 0.000000e+00 : bf16
    %2 = vector.broadcast %cst_2 : bf16 to vector<1x24x128xbf16>
    %c17 = arith.constant 17 : index
    %c0_3 = arith.constant 0 : index
    %c0_4 = arith.constant 0 : index
    %3 = vector.load %arg11[%c17, %c0_3, %c0_4] : memref<18x24x128xbf16, #tpu.memory_space<vmem>>, vector<1x24x128xbf16>
    tpu.vector_store %arg11[%c17, %c0_3, %c0_4], %2 {strides = array<i32>} : memref<18x24x128xbf16, #tpu.memory_space<vmem>>, vector<1x24x128xbf16>,
    %cst_5 = arith.constant 0.000000e+00 : bf16
    %4 = vector.broadcast %cst_5 : bf16 to vector<16x1x128xbf16>
    %c1 = arith.constant 1 : index
    %c0_6 = arith.constant 0 : index
    %c0_7 = arith.constant 0 : index
    %5 = vector.load %arg11[%c1, %c0_6, %c0_7] : memref<18x24x128xbf16, #tpu.memory_space<vmem>>, vector<16x1x128xbf16>
    tpu.vector_store %arg11[%c1, %c0_6, %c0_7], %4 {strides = array<i32>} : memref<18x24x128xbf16, #tpu.memory_space<vmem>>, vector<16x1x128xbf16>,
    %cst_8 = arith.constant 0.000000e+00 : bf16
    %6 = vector.broadcast %cst_8 : bf16 to vector<16x1x128xbf16>
    %c1_9 = arith.constant 1 : index
    %c17_10 = arith.constant 17 : index
    %c0_11 = arith.constant 0 : index
    %7 = vector.load %arg11[%c1_9, %c17_10, %c0_11] : memref<18x24x128xbf16, #tpu.memory_space<vmem>>, vector<16x1x128xbf16>
    tpu.vector_store %arg11[%c1_9, %c17_10, %c0_11], %6 {strides = array<i32>} : memref<18x24x128xbf16, #tpu.memory_space<vmem>>, vector<16x1x128xbf16>,
    %cst_12 = arith.constant 0.000000e+00 : f32
    %8 = vector.broadcast %cst_12 : f32 to vector<1x24x128xf32>
    %c0_13 = arith.constant 0 : index
    %c0_14 = arith.constant 0 : index
    %c0_15 = arith.constant 0 : index
    %9 = vector.load %arg12[%c0_13, %c0_14, %c0_15] : memref<18x24x128xf32, #tpu.memory_space<vmem>>, vector<1x24x128xf32>
    tpu.vector_store %arg12[%c0_13, %c0_14, %c0_15], %8 {strides = array<i32>} : memref<18x24x128xf32, #tpu.memory_space<vmem>>, vector<1x24x128xf32>,
    %cst_16 = arith.constant 0.000000e+00 : f32
    %10 = vector.broadcast %cst_16 : f32 to vector<1x24x128xf32>
    %c17_17 = arith.constant 17 : index
    %c0_18 = arith.constant 0 : index
    %c0_19 = arith.constant 0 : index
    %11 = vector.load %arg12[%c17_17, %c0_18, %c0_19] : memref<18x24x128xf32, #tpu.memory_space<vmem>>, vector<1x24x128xf32>
    tpu.vector_store %arg12[%c17_17, %c0_18, %c0_19], %10 {strides = array<i32>} : memref<18x24x128xf32, #tpu.memory_space<vmem>>, vector<1x24x128xf32>,
    %cst_20 = arith.constant 0.000000e+00 : f32
    %12 = vector.broadcast %cst_20 : f32 to vector<16x1x128xf32>
    %c1_21 = arith.constant 1 : index
    %c0_22 = arith.constant 0 : index
    %c0_23 = arith.constant 0 : index
    %13 = vector.load %arg12[%c1_21, %c0_22, %c0_23] : memref<18x24x128xf32, #tpu.memory_space<vmem>>, vector<16x1x128xf32>
    tpu.vector_store %arg12[%c1_21, %c0_22, %c0_23], %12 {strides = array<i32>} : memref<18x24x128xf32, #tpu.memory_space<vmem>>, vector<16x1x128xf32>,
    %cst_24 = arith.constant 0.000000e+00 : f32
    %14 = vector.broadcast %cst_24 : f32 to vector<16x1x128xf32>
    %c1_25 = arith.constant 1 : index
    %c17_26 = arith.constant 17 : index
    %c0_27 = arith.constant 0 : index
    %15 = vector.load %arg12[%c1_25, %c17_26, %c0_27] : memref<18x24x128xf32, #tpu.memory_space<vmem>>, vector<16x1x128xf32>
    tpu.vector_store %arg12[%c1_25, %c17_26, %c0_27], %14 {strides = array<i32>} : memref<18x24x128xf32, #tpu.memory_space<vmem>>, vector<16x1x128xf32>,
    %c0_28 = arith.constant 0 : index
    %c0_29 = arith.constant 0 : index
    %c0_30 = arith.constant 0 : index
    %c0_31 = arith.constant 0 : index
    %16 = vector.load %arg1[%c0_28, %c0_29, %c0_30, %c0_31] : memref<1x16x16x128xf32, #tpu.memory_space<vmem>>, vector<1x16x16x128xf32>
    %17 = vector.shape_cast %16 : vector<1x16x16x128xf32> to vector<16x16x128xf32>
    %18 = vector.shape_cast %17 : vector<16x16x128xf32> to vector<256x128xf32>
    %c0_32 = arith.constant 0 : index
    %c0_33 = arith.constant 0 : index
    %19 = vector.load %arg4[%c0_32, %c0_33] : memref<1x128xf32, #tpu.memory_space<vmem>>, vector<1x128xf32>
    %20 = vector.broadcast %19 : vector<1x128xf32> to vector<256x128xf32>
    %21 = arith.mulf %18, %20 : vector<256x128xf32>
    %c0_34 = arith.constant 0 : index
    %c0_35 = arith.constant 0 : index
    %22 = vector.load %arg5[%c0_34, %c0_35] : memref<1x128xf32, #tpu.memory_space<vmem>>, vector<1x128xf32>
    %23 = vector.broadcast %22 : vector<1x128xf32> to vector<256x128xf32>
    %24 = arith.addf %21, %23 : vector<256x128xf32>
    %25 = vector.shape_cast %24 : vector<256x128xf32> to vector<16x16x128xf32>
    %26 = arith.truncf %25 : vector<16x16x128xf32> to vector<16x16x128xbf16>
    %c1_36 = arith.constant 1 : index
    %c1_37 = arith.constant 1 : index
    %c0_38 = arith.constant 0 : index
    %27 = vector.load %arg11[%c1_36, %c1_37, %c0_38] : memref<18x24x128xbf16, #tpu.memory_space<vmem>>, vector<16x16x128xbf16>
    tpu.vector_store %arg11[%c1_36, %c1_37, %c0_38], %26 {strides = array<i32>} : memref<18x24x128xbf16, #tpu.memory_space<vmem>>, vector<16x16x128xbf16>,
    %cst_39 = arith.constant 0.000000e+00 : f32
    %28 = vector.broadcast %cst_39 : f32 to vector<256x128xf32>
    %c0_40 = arith.constant 0 : index
    %c0_41 = arith.constant 0 : index
    %c0_42 = arith.constant 0 : index
    %29 = vector.load %arg11[%c0_40, %c0_41, %c0_42] : memref<18x24x128xbf16, #tpu.memory_space<vmem>>, vector<16x16x128xbf16>
    %30 = vector.shape_cast %29 : vector<16x16x128xbf16> to vector<256x128xbf16>
    %c0_43 = arith.constant 0 : index
    %c1_44 = arith.constant 1 : index
    %c0_45 = arith.constant 0 : index
    %31 = vector.load %arg11[%c0_43, %c1_44, %c0_45] : memref<18x24x128xbf16, #tpu.memory_space<vmem>>, vector<16x16x128xbf16>
    %32 = vector.shape_cast %31 : vector<16x16x128xbf16> to vector<256x128xbf16>
    %33 = tpu.concatenate %30, %32 in 1 : vector<256x128xbf16>, vector<256x128xbf16> -> vector<256x256xbf16>
    %c0_46 = arith.constant 0 : index
    %c0_47 = arith.constant 0 : index
    %34 = vector.load %arg2[%c0_46, %c0_47] : memref<1152x128xbf16, #tpu.memory_space<vmem>>, vector<256x128xbf16>
    %cst_48 = arith.constant dense<0.000000e+00> : vector<256x128xf32>
    %35 = tpu.matmul %33, %34, %cst_48 {dimension_numbers = #tpu.dot_dimension_numbers<[1], [0], [0], [1], [0, 0, 1, 1], [], []>} : vector<256x256xbf16>, vector<256x128xbf16>, vector<256x128xf32> -> vector<256x128xf32>
    %36 = arith.addf %28, %35 : vector<256x128xf32>
    %c0_49 = arith.constant 0 : index
    %c2 = arith.constant 2 : index
    %c0_50 = arith.constant 0 : index
    %37 = vector.load %arg11[%c0_49, %c2, %c0_50] : memref<18x24x128xbf16, #tpu.memory_space<vmem>>, vector<16x16x128xbf16>
    %38 = vector.shape_cast %37 : vector<16x16x128xbf16> to vector<256x128xbf16>
    %c1_51 = arith.constant 1 : index
    %c0_52 = arith.constant 0 : index
    %c0_53 = arith.constant 0 : index
    %39 = vector.load %arg11[%c1_51, %c0_52, %c0_53] : memref<18x24x128xbf16, #tpu.memory_space<vmem>>, vector<16x16x128xbf16>
    %40 = vector.shape_cast %39 : vector<16x16x128xbf16> to vector<256x128xbf16>
    %41 = tpu.concatenate %38, %40 in 1 : vector<256x128xbf16>, vector<256x128xbf16> -> vector<256x256xbf16>
    %c256 = arith.constant 256 : index
    %c0_54 = arith.constant 0 : index
    %42 = vector.load %arg2[%c256, %c0_54] : memref<1152x128xbf16, #tpu.memory_space<vmem>>, vector<256x128xbf16>
    %cst_55 = arith.constant dense<0.000000e+00> : vector<256x128xf32>
    %43 = tpu.matmul %41, %42, %cst_55 {dimension_numbers = #tpu.dot_dimension_numbers<[1], [0], [0], [1], [0, 0, 1, 1], [], []>} : vector<256x256xbf16>, vector<256x128xbf16>, vector<256x128xf32> -> vector<256x128xf32>
    %44 = arith.addf %36, %43 : vector<256x128xf32>
    %c1_56 = arith.constant 1 : index
    %c1_57 = arith.constant 1 : index
    %c0_58 = arith.constant 0 : index
    %45 = vector.load %arg11[%c1_56, %c1_57, %c0_58] : memref<18x24x128xbf16, #tpu.memory_space<vmem>>, vector<16x16x128xbf16>
    %46 = vector.shape_cast %45 : vector<16x16x128xbf16> to vector<256x128xbf16>
    %c1_59 = arith.constant 1 : index
    %c2_60 = arith.constant 2 : index
    %c0_61 = arith.constant 0 : index
    %47 = vector.load %arg11[%c1_59, %c2_60, %c0_61] : memref<18x24x128xbf16, #tpu.memory_space<vmem>>, vector<16x16x128xbf16>
    %48 = vector.shape_cast %47 : vector<16x16x128xbf16> to vector<256x128xbf16>
    %49 = tpu.concatenate %46, %48 in 1 : vector<256x128xbf16>, vector<256x128xbf16> -> vector<256x256xbf16>
    %c512 = arith.constant 512 : index
    %c0_62 = arith.constant 0 : index
    %50 = vector.load %arg2[%c512, %c0_62] : memref<1152x128xbf16, #tpu.memory_space<vmem>>, vector<256x128xbf16>
    %cst_63 = arith.constant dense<0.000000e+00> : vector<256x128xf32>
    %51 = tpu.matmul %49, %50, %cst_63 {dimension_numbers = #tpu.dot_dimension_numbers<[1], [0], [0], [1], [0, 0, 1, 1], [], []>} : vector<256x256xbf16>, vector<256x128xbf16>, vector<256x128xf32> -> vector<256x128xf32>
    %52 = arith.addf %44, %51 : vector<256x128xf32>
    %c2_64 = arith.constant 2 : index
    %c0_65 = arith.constant 0 : index
    %c0_66 = arith.constant 0 : index
    %53 = vector.load %arg11[%c2_64, %c0_65, %c0_66] : memref<18x24x128xbf16, #tpu.memory_space<vmem>>, vector<16x16x128xbf16>
    %54 = vector.shape_cast %53 : vector<16x16x128xbf16> to vector<256x128xbf16>
    %c2_67 = arith.constant 2 : index
    %c1_68 = arith.constant 1 : index
    %c0_69 = arith.constant 0 : index
    %55 = vector.load %arg11[%c2_67, %c1_68, %c0_69] : memref<18x24x128xbf16, #tpu.memory_space<vmem>>, vector<16x16x128xbf16>
    %56 = vector.shape_cast %55 : vector<16x16x128xbf16> to vector<256x128xbf16>
    %57 = tpu.concatenate %54, %56 in 1 : vector<256x128xbf16>, vector<256x128xbf16> -> vector<256x256xbf16>
    %c768 = arith.constant 768 : index
    %c0_70 = arith.constant 0 : index
    %58 = vector.load %arg2[%c768, %c0_70] : memref<1152x128xbf16, #tpu.memory_space<vmem>>, vector<256x128xbf16>
    %cst_71 = arith.constant dense<0.000000e+00> : vector<256x128xf32>
    %59 = tpu.matmul %57, %58, %cst_71 {dimension_numbers = #tpu.dot_dimension_numbers<[1], [0], [0], [1], [0, 0, 1, 1], [], []>} : vector<256x256xbf16>, vector<256x128xbf16>, vector<256x128xf32> -> vector<256x128xf32>
    %60 = arith.addf %52, %59 : vector<256x128xf32>
    %c2_72 = arith.constant 2 : index
    %c2_73 = arith.constant 2 : index
    %c0_74 = arith.constant 0 : index
    %61 = vector.load %arg11[%c2_72, %c2_73, %c0_74] : memref<18x24x128xbf16, #tpu.memory_space<vmem>>, vector<16x16x128xbf16>
    %62 = vector.shape_cast %61 : vector<16x16x128xbf16> to vector<256x128xbf16>
    %c1024 = arith.constant 1024 : index
    %c0_75 = arith.constant 0 : index
    %63 = vector.load %arg2[%c1024, %c0_75] : memref<1152x128xbf16, #tpu.memory_space<vmem>>, vector<128x128xbf16>
    %cst_76 = arith.constant dense<0.000000e+00> : vector<256x128xf32>
    %64 = tpu.matmul %62, %63, %cst_76 {dimension_numbers = #tpu.dot_dimension_numbers<[1], [0], [0], [1], [0, 0, 1, 1], [], []>} : vector<256x128xbf16>, vector<128x128xbf16>, vector<256x128xf32> -> vector<256x128xf32>
    %65 = arith.addf %60, %64 : vector<256x128xf32>
    %cst_77 = arith.constant 0.000000e+00 : f32
    %66 = vector.broadcast %cst_77 : f32 to vector<256x128xf32>
    %67 = arith.cmpf ogt, %65, %66 : vector<256x128xf32>
    %c0_78 = arith.constant 0 : index
    %c0_79 = arith.constant 0 : index
    %68 = vector.load %arg6[%c0_78, %c0_79] : memref<1x128xf32, #tpu.memory_space<vmem>>, vector<1x128xf32>
    %69 = vector.broadcast %68 : vector<1x128xf32> to vector<256x128xf32>
    %70 = arith.mulf %65, %69 : vector<256x128xf32>
    %71 = arith.select %67, %65, %70 : vector<256x128xi1>, vector<256x128xf32>
    %72 = vector.shape_cast %71 : vector<256x128xf32> to vector<16x16x128xf32>
    %c1_80 = arith.constant 1 : index
    %c1_81 = arith.constant 1 : index
    %c0_82 = arith.constant 0 : index
    %73 = vector.load %arg12[%c1_80, %c1_81, %c0_82] : memref<18x24x128xf32, #tpu.memory_space<vmem>>, vector<16x16x128xf32>
    tpu.vector_store %arg12[%c1_80, %c1_81, %c0_82], %72 {strides = array<i32>} : memref<18x24x128xf32, #tpu.memory_space<vmem>>, vector<16x16x128xf32>,
    %cst_83 = arith.constant 0.000000e+00 : f32
    %74 = vector.broadcast %cst_83 : f32 to vector<64x128xf32>
    %c0_84 = arith.constant 0 : index
    %c0_85 = arith.constant 0 : index
    %c0_86 = arith.constant 0 : index
    %75 = tpu.strided_load %arg12[%c0_84, %c0_85, %c0_86] {strides = array<i32: 2, 2, 1>} : memref<18x24x128xf32, #tpu.memory_space<vmem>>, vector<8x8x128xf32>
    %76 = vector.shape_cast %75 : vector<8x8x128xf32> to vector<64x128xf32>
    %77 = arith.truncf %76 : vector<64x128xf32> to vector<64x128xbf16>
    %c0_87 = arith.constant 0 : index
    %c1_88 = arith.constant 1 : index
    %c0_89 = arith.constant 0 : index
    %78 = tpu.strided_load %arg12[%c0_87, %c1_88, %c0_89] {strides = array<i32: 2, 2, 1>} : memref<18x24x128xf32, #tpu.memory_space<vmem>>, vector<8x8x128xf32>
    %79 = vector.shape_cast %78 : vector<8x8x128xf32> to vector<64x128xf32>
    %80 = arith.truncf %79 : vector<64x128xf32> to vector<64x128xbf16>
    %81 = tpu.concatenate %77, %80 in 1 : vector<64x128xbf16>, vector<64x128xbf16> -> vector<64x256xbf16>
    %c0_90 = arith.constant 0 : index
    %c0_91 = arith.constant 0 : index
    %82 = vector.load %arg3[%c0_90, %c0_91] : memref<1152x128xbf16, #tpu.memory_space<vmem>>, vector<256x128xbf16>
    %cst_92 = arith.constant dense<0.000000e+00> : vector<64x128xf32>
    %83 = tpu.matmul %81, %82, %cst_92 {dimension_numbers = #tpu.dot_dimension_numbers<[1], [0], [0], [1], [0, 0, 1, 1], [], []>} : vector<64x256xbf16>, vector<256x128xbf16>, vector<64x128xf32> -> vector<64x128xf32>
    %84 = arith.addf %74, %83 : vector<64x128xf32>
    %c0_93 = arith.constant 0 : index
    %c2_94 = arith.constant 2 : index
    %c0_95 = arith.constant 0 : index
    %85 = tpu.strided_load %arg12[%c0_93, %c2_94, %c0_95] {strides = array<i32: 2, 2, 1>} : memref<18x24x128xf32, #tpu.memory_space<vmem>>, vector<8x8x128xf32>
    %86 = vector.shape_cast %85 : vector<8x8x128xf32> to vector<64x128xf32>
    %87 = arith.truncf %86 : vector<64x128xf32> to vector<64x128xbf16>
    %c1_96 = arith.constant 1 : index
    %c0_97 = arith.constant 0 : index
    %c0_98 = arith.constant 0 : index
    %88 = tpu.strided_load %arg12[%c1_96, %c0_97, %c0_98] {strides = array<i32: 2, 2, 1>} : memref<18x24x128xf32, #tpu.memory_space<vmem>>, vector<8x8x128xf32>
    %89 = vector.shape_cast %88 : vector<8x8x128xf32> to vector<64x128xf32>
    %90 = arith.truncf %89 : vector<64x128xf32> to vector<64x128xbf16>
    %91 = tpu.concatenate %87, %90 in 1 : vector<64x128xbf16>, vector<64x128xbf16> -> vector<64x256xbf16>
    %c256_99 = arith.constant 256 : index
    %c0_100 = arith.constant 0 : index
    %92 = vector.load %arg3[%c256_99, %c0_100] : memref<1152x128xbf16, #tpu.memory_space<vmem>>, vector<256x128xbf16>
    %cst_101 = arith.constant dense<0.000000e+00> : vector<64x128xf32>
    %93 = tpu.matmul %91, %92, %cst_101 {dimension_numbers = #tpu.dot_dimension_numbers<[1], [0], [0], [1], [0, 0, 1, 1], [], []>} : vector<64x256xbf16>, vector<256x128xbf16>, vector<64x128xf32> -> vector<64x128xf32>
    %94 = arith.addf %84, %93 : vector<64x128xf32>
    %c1_102 = arith.constant 1 : index
    %c1_103 = arith.constant 1 : index
    %c0_104 = arith.constant 0 : index
    %95 = tpu.strided_load %arg12[%c1_102, %c1_103, %c0_104] {strides = array<i32: 2, 2, 1>} : memref<18x24x128xf32, #tpu.memory_space<vmem>>, vector<8x8x128xf32>
    %96 = vector.shape_cast %95 : vector<8x8x128xf32> to vector<64x128xf32>
    %97 = arith.truncf %96 : vector<64x128xf32> to vector<64x128xbf16>
    %c1_105 = arith.constant 1 : index
    %c2_106 = arith.constant 2 : index
    %c0_107 = arith.constant 0 : index
    %98 = tpu.strided_load %arg12[%c1_105, %c2_106, %c0_107] {strides = array<i32: 2, 2, 1>} : memref<18x24x128xf32, #tpu.memory_space<vmem>>, vector<8x8x128xf32>
    %99 = vector.shape_cast %98 : vector<8x8x128xf32> to vector<64x128xf32>
    %100 = arith.truncf %99 : vector<64x128xf32> to vector<64x128xbf16>
    %101 = tpu.concatenate %97, %100 in 1 : vector<64x128xbf16>, vector<64x128xbf16> -> vector<64x256xbf16>
    %c512_108 = arith.constant 512 : index
    %c0_109 = arith.constant 0 : index
    %102 = vector.load %arg3[%c512_108, %c0_109] : memref<1152x128xbf16, #tpu.memory_space<vmem>>, vector<256x128xbf16>
    %cst_110 = arith.constant dense<0.000000e+00> : vector<64x128xf32>
    %103 = tpu.matmul %101, %102, %cst_110 {dimension_numbers = #tpu.dot_dimension_numbers<[1], [0], [0], [1], [0, 0, 1, 1], [], []>} : vector<64x256xbf16>, vector<256x128xbf16>, vector<64x128xf32> -> vector<64x128xf32>
    %104 = arith.addf %94, %103 : vector<64x128xf32>
    %c2_111 = arith.constant 2 : index
    %c0_112 = arith.constant 0 : index
    %c0_113 = arith.constant 0 : index
    %105 = tpu.strided_load %arg12[%c2_111, %c0_112, %c0_113] {strides = array<i32: 2, 2, 1>} : memref<18x24x128xf32, #tpu.memory_space<vmem>>, vector<8x8x128xf32>
    %106 = vector.shape_cast %105 : vector<8x8x128xf32> to vector<64x128xf32>
    %107 = arith.truncf %106 : vector<64x128xf32> to vector<64x128xbf16>
    %c2_114 = arith.constant 2 : index
    %c1_115 = arith.constant 1 : index
    %c0_116 = arith.constant 0 : index
    %108 = tpu.strided_load %arg12[%c2_114, %c1_115, %c0_116] {strides = array<i32: 2, 2, 1>} : memref<18x24x128xf32, #tpu.memory_space<vmem>>, vector<8x8x128xf32>
    %109 = vector.shape_cast %108 : vector<8x8x128xf32> to vector<64x128xf32>
    %110 = arith.truncf %109 : vector<64x128xf32> to vector<64x128xbf16>
    %111 = tpu.concatenate %107, %110 in 1 : vector<64x128xbf16>, vector<64x128xbf16> -> vector<64x256xbf16>
    %c768_117 = arith.constant 768 : index
    %c0_118 = arith.constant 0 : index
    %112 = vector.load %arg3[%c768_117, %c0_118] : memref<1152x128xbf16, #tpu.memory_space<vmem>>, vector<256x128xbf16>
    %cst_119 = arith.constant dense<0.000000e+00> : vector<64x128xf32>
    %113 = tpu.matmul %111, %112, %cst_119 {dimension_numbers = #tpu.dot_dimension_numbers<[1], [0], [0], [1], [0, 0, 1, 1], [], []>} : vector<64x256xbf16>, vector<256x128xbf16>, vector<64x128xf32> -> vector<64x128xf32>
    %114 = arith.addf %104, %113 : vector<64x128xf32>
    %c2_120 = arith.constant 2 : index
    %c2_121 = arith.constant 2 : index
    %c0_122 = arith.constant 0 : index
    %115 = tpu.strided_load %arg12[%c2_120, %c2_121, %c0_122] {strides = array<i32: 2, 2, 1>} : memref<18x24x128xf32, #tpu.memory_space<vmem>>, vector<8x8x128xf32>
    %116 = vector.shape_cast %115 : vector<8x8x128xf32> to vector<64x128xf32>
    %117 = arith.truncf %116 : vector<64x128xf32> to vector<64x128xbf16>
    %c1024_123 = arith.constant 1024 : index
    %c0_124 = arith.constant 0 : index
    %118 = vector.load %arg3[%c1024_123, %c0_124] : memref<1152x128xbf16, #tpu.memory_space<vmem>>, vector<128x128xbf16>
    %cst_125 = arith.constant dense<0.000000e+00> : vector<64x128xf32>
    %119 = tpu.matmul %117, %118, %cst_125 {dimension_numbers = #tpu.dot_dimension_numbers<[1], [0], [0], [1], [0, 0, 1, 1], [], []>} : vector<64x128xbf16>, vector<128x128xbf16>, vector<64x128xf32> -> vector<64x128xf32>
    %120 = arith.addf %114, %119 : vector<64x128xf32>
    %c0_126 = arith.constant 0 : index
    %c0_127 = arith.constant 0 : index
    %121 = vector.load %arg7[%c0_126, %c0_127] : memref<1x128xf32, #tpu.memory_space<vmem>>, vector<1x128xf32>
    %122 = vector.broadcast %121 : vector<1x128xf32> to vector<64x128xf32>
    %123 = arith.addf %120, %122 : vector<64x128xf32>
    %c0_128 = arith.constant 0 : index
    %c0_129 = arith.constant 0 : index
    %c0_130 = arith.constant 0 : index
    %c0_131 = arith.constant 0 : index
    %124 = tpu.strided_load %arg1[%c0_128, %c0_129, %c0_130, %c0_131] {strides = array<i32: 1, 2, 2, 1>} : memref<1x16x16x128xf32, #tpu.memory_space<vmem>>, vector<1x8x8x128xf32>
    %125 = vector.shape_cast %124 : vector<1x8x8x128xf32> to vector<8x8x128xf32>
    %126 = vector.shape_cast %125 : vector<8x8x128xf32> to vector<64x128xf32>
    %127 = arith.truncf %126 : vector<64x128xf32> to vector<64x128xbf16>
    %c0_132 = arith.constant 0 : index
    %c0_133 = arith.constant 0 : index
    %128 = vector.load %arg8[%c0_132, %c0_133] : memref<128x128xbf16, #tpu.memory_space<vmem>>, vector<128x128xbf16>
    %cst_134 = arith.constant dense<0.000000e+00> : vector<64x128xf32>
    %129 = tpu.matmul %127, %128, %cst_134 {dimension_numbers = #tpu.dot_dimension_numbers<[1], [0], [0], [1], [0, 0, 1, 1], [], []>} : vector<64x128xbf16>, vector<128x128xbf16>, vector<64x128xf32> -> vector<64x128xf32>
    %c0_135 = arith.constant 0 : index
    %c0_136 = arith.constant 0 : index
    %130 = vector.load %arg9[%c0_135, %c0_136] : memref<1x128xf32, #tpu.memory_space<vmem>>, vector<1x128xf32>
    %131 = vector.broadcast %130 : vector<1x128xf32> to vector<64x128xf32>
    %132 = arith.addf %129, %131 : vector<64x128xf32>
    %133 = arith.addf %123, %132 : vector<64x128xf32>
    %134 = vector.shape_cast %133 : vector<64x128xf32> to vector<8x8x128xf32>
    %c0_137 = arith.constant 0 : index
    %c0_138 = arith.constant 0 : index
    %c0_139 = arith.constant 0 : index
    %c0_140 = arith.constant 0 : index
    %135 = vector.load %arg10[%c0_137, %c0_138, %c0_139, %c0_140] : memref<1x8x8x128xf32, #tpu.memory_space<vmem>>, vector<1x8x8x128xf32>
    %136 = vector.shape_cast %135 : vector<1x8x8x128xf32> to vector<8x8x128xf32>
    %137 = vector.shape_cast %134 : vector<8x8x128xf32> to vector<1x8x8x128xf32>
    tpu.vector_store %arg10[%c0_137, %c0_138, %c0_139, %c0_140], %137 {strides = array<i32>} : memref<1x8x8x128xf32, #tpu.memory_space<vmem>>, vector<1x8x8x128xf32>,
    return
  }
  func.func @transform_0(%arg0: i32) -> (i32, i32, i32, i32) {
    %c0_i32 = arith.constant 0 : i32
    %c0_i32_0 = arith.constant 0 : i32
    %c0_i32_1 = arith.constant 0 : i32
    %c0_i32_2 = arith.constant 0 : i32
    return %arg0, %c0_i32, %c0_i32_0, %c0_i32_1 : i32, i32, i32, i32
  }
  func.func @transform_1(%arg0: i32) -> (i32, i32) {
    %c0_i32 = arith.constant 0 : i32
    %c0_i32_0 = arith.constant 0 : i32
    %c0_i32_1 = arith.constant 0 : i32
    return %c0_i32, %c0_i32_0 : i32, i32
  }
  func.func @transform_2(%arg0: i32) -> (i32, i32) {
    %c0_i32 = arith.constant 0 : i32
    %c0_i32_0 = arith.constant 0 : i32
    %c0_i32_1 = arith.constant 0 : i32
    return %c0_i32, %c0_i32_0 : i32, i32
  }
  func.func @transform_3(%arg0: i32) -> (i32, i32) {
    %c0_i32 = arith.constant 0 : i32
    %c0_i32_0 = arith.constant 0 : i32
    %c0_i32_1 = arith.constant 0 : i32
    return %c0_i32, %c0_i32_0 : i32, i32
  }
  func.func @transform_4(%arg0: i32) -> (i32, i32) {
    %c0_i32 = arith.constant 0 : i32
    %c0_i32_0 = arith.constant 0 : i32
    %c0_i32_1 = arith.constant 0 : i32
    return %c0_i32, %c0_i32_0 : i32, i32
  }
  func.func @transform_5(%arg0: i32) -> (i32, i32) {
    %c0_i32 = arith.constant 0 : i32
    %c0_i32_0 = arith.constant 0 : i32
    %c0_i32_1 = arith.constant 0 : i32
    return %c0_i32, %c0_i32_0 : i32, i32
  }
  func.func @transform_6(%arg0: i32) -> (i32, i32) {
    %c0_i32 = arith.constant 0 : i32
    %c0_i32_0 = arith.constant 0 : i32
    %c0_i32_1 = arith.constant 0 : i32
    return %c0_i32, %c0_i32_0 : i32, i32
  }
  func.func @transform_7(%arg0: i32) -> (i32, i32) {
    %c0_i32 = arith.constant 0 : i32
    %c0_i32_0 = arith.constant 0 : i32
    %c0_i32_1 = arith.constant 0 : i32
    return %c0_i32, %c0_i32_0 : i32, i32
  }
  func.func @transform_8(%arg0: i32) -> (i32, i32) {
    %c0_i32 = arith.constant 0 : i32
    %c0_i32_0 = arith.constant 0 : i32
    %c0_i32_1 = arith.constant 0 : i32
    return %c0_i32, %c0_i32_0 : i32, i32
  }
  func.func @transform_9(%arg0: i32) -> (i32, i32, i32, i32) {
    %c0_i32 = arith.constant 0 : i32
    %c0_i32_0 = arith.constant 0 : i32
    %c0_i32_1 = arith.constant 0 : i32
    %c0_i32_2 = arith.constant 0 : i32
    return %arg0, %c0_i32, %c0_i32_0, %c0_i32_1 : i32, i32, i32, i32
  }
}

</mosaic_0001>

<llo_original>
// kernel: tpu_custom_call.1
$region0: #{tpu_custom_call.1}
  #allocation0 [shape = 'u32[]', space=smem, size = 0x4, offset = 0x4, fixed_abs, tag = 'smem constant byte address 0x4 - core index']
  #allocation1 [shape = 'u32[144,128]{1,0:T(1,128)}', space=vmem, size = 0x12000, scoped, tag = 'internal scratch']
  #allocation2 [shape = 'bf16[18,24,128]{2,1,0:T(8,128)(2,1)}', space=vmem, size = 0x1b000, scoped, tag = 'scratch operand']
  #allocation3 [shape = 'f32[18,24,128]{2,1,0:T(8,128)}', space=vmem, size = 0x36000, scoped, tag = 'scratch operand']
  %s0 = inlined_call_operand.hbm [shape: f32[2,16,16,128], index: 0, kind: input, shape index: {}]
  %s1 = inlined_call_operand.hbm [shape: bf16[1152,128], index: 1, kind: input, shape index: {}]
  %s2 = inlined_call_operand.hbm [shape: bf16[1152,128], index: 2, kind: input, shape index: {}]
  %s3 = inlined_call_operand.vmem [shape: f32[1,128], index: 3, kind: input, shape index: {}]
  %s4 = inlined_call_operand.vmem [shape: f32[1,128], index: 4, kind: input, shape index: {}]
  %s5 = inlined_call_operand.vmem [shape: f32[1,128], index: 5, kind: input, shape index: {}]
  %s6 = inlined_call_operand.vmem [shape: f32[1,128], index: 6, kind: input, shape index: {}]
  %s7 = inlined_call_operand.hbm [shape: bf16[128,128], index: 7, kind: input, shape index: {}]
  %s8 = inlined_call_operand.vmem [shape: f32[1,128], index: 8, kind: input, shape index: {}]
  %s9 = inlined_call_operand.hbm [shape: f32[2,8,8,128], index: 9, kind: output, shape index: {}]
  %s10 = sld [smem:[#allocation0]]
  $region85: #{tpu_custom_call.1} parent=0
    _
  %s12 = ssub.s32 1, %s10
  %s13 = scalar_select 0, %s12, %s10
  $region1: #{tpu_custom_call.1} parent=0
    #allocation4 [shape = 'u8[262144]{0}', space=vmem, size = 0x40000, scoped, tag = 'input window, operand 0']
    #allocation5 [shape = 's32[2]{0}', space=sflag, size = 0x8, scoped, tag = 'scoped memory for tpu_custom_call.1']
    #allocation6 [shape = 's32[2]{0}', space=sflag, size = 0x8, scoped, tag = 'scoped memory for tpu_custom_call.1']
    #allocation7 [shape = 'u8[294912]{0}', space=vmem, size = 0x48000, scoped, tag = 'input window, operand 1, single buffered']
    #allocation8 [shape = 's32[1]{0}', space=sflag, size = 0x4, scoped, tag = 'scoped memory for tpu_custom_call.1']
    #allocation9 [shape = 'u8[294912]{0}', space=vmem, size = 0x48000, scoped, tag = 'input window, operand 2, single buffered']
    #allocation10 [shape = 'u8[32768]{0}', space=vmem, size = 0x8000, scoped, tag = 'input window, operand 7, single buffered']
    #allocation11 [shape = 's32[1]{0}', space=sflag, size = 0x4, scoped, tag = 'scoped memory for tpu_custom_call.1']
    #allocation12 [shape = 'u8[65536]{0}', space=vmem, size = 0x10000, scoped, tag = 'output window, operand 0']
    %14 = vsyncpa [#allocation5], 0
    %s15 = scalar_lea.sflag [#allocation5], 1
    %16 = vsyncpa %s15, 0
    %17 = vsyncpa [#allocation8], 0
    %18 = vsyncpa [#allocation11], 0
    %19 = vsyncpa [#allocation6], 0
    %s20 = scalar_lea.sflag [#allocation6], 1
    %21 = vsyncpa %s20, 0
    loop: start=0, step=1, limit=4
    $region2: #{tpu_custom_call.1} parent=1 // loop_pre_header
      _
    $region3: #{tpu_custom_call.1} parent=1 // loop_header
      %s23 = sphi 0, %s27
      %p24 = scmp.ge.s32.totalorder %s23, 4
      %s33 = sphi 0, %s35
      %s36 = sphi 0, %s33
      %s37 = sphi 0, %s36
      %s53 = sphi 0, %s37
      %s57 = sphi 0, %s57
      %s59 = sphi 0, %s57
      %s60 = sphi 0, %s59
      %s74 = sphi 0, %s60
      %s78 = sphi 0, %s78
      %s80 = sphi 0, %s78
      %s81 = sphi 0, %s80
      %s95 = sphi 0, %s81
      %s99 = sphi 0, %s99
      %s101 = sphi 0, %s99
      %s102 = sphi 0, %s101
      %s116 = sphi 0, %s102
      %s120 = sphi 0, %s120
      %s122 = sphi 0, %s120
      %s123 = sphi 0, %s122
      %s137 = sphi 0, %s123
      %s141 = sphi 0, %s141
      %s143 = sphi 0, %s141
      %s144 = sphi 0, %s143
      %s158 = sphi 0, %s144
      %s162 = sphi 0, %s162
      %s164 = sphi 0, %s162
      %s165 = sphi 0, %s164
      %s179 = sphi 0, %s165
      %s183 = sphi 0, %s183
      %s185 = sphi 0, %s183
      %s186 = sphi 0, %s185
      %s200 = sphi 0, %s186
      %s204 = sphi 0, %s204
      %s206 = sphi 0, %s204
      %s207 = sphi 0, %s206
      %s221 = sphi 0, %s207
      %s227 = sphi 0, %s229
      %s230 = sphi 0, %s227
      %s231 = sphi 0, %s230
      %s247 = sphi 0, %s231
    $region4: #{tpu_custom_call.1} parent=1 // loop_header_branch
      %26 = sbr.rel (%p24) target = $region8
    $region5: #{tpu_custom_call.1} parent=1 // loop_body
      %s28 = ssub.s32 %s23, 1
      %s29 = ssub.s32 %s23, 2
      %s30 = sadd.s32 %s23, 1
      %s31 = ssub.s32 %s23, %s30
      %p32 = scmp.eq.s32.totalorder %s31, 0
      %s34 = sadd.s32 %s33, 1
      %s35 = scalar_select %p32, %s33, %s34
      %p38 = pneg %p32
      %p39 = scmp.eq.s32.totalorder %s23, 1
      %p40 = por %p38, %p39
      %p41 = scmp.ne.s32.totalorder %s33, %s36
      %p42 = scmp.eq.s32.totalorder %s23, 0
      %p43 = por %p41, %p42
      %p44 = scmp.ne.s32.totalorder %s33, %s36
      %p45 = scmp.eq.s32.totalorder %s28, 1
      %p46 = por %p44, %p45
      %p47 = scmp.ne.s32.totalorder %s36, %s37
      %p48 = scmp.eq.s32.totalorder %s28, 0
      %p49 = por %p47, %p48
      %p50 = scmp.ne.s32.totalorder %s36, %s37
      %p51 = scmp.eq.s32.totalorder %s29, 1
      %p52 = por %p50, %p51
      %p54 = scmp.ne.s32.totalorder %s37, %s53
      %p55 = scmp.eq.s32.totalorder %s29, 0
      %p56 = por %p54, %p55
      %s58 = sadd.s32 %s57, 1
      %p61 = scmp.eq.s32.totalorder %s23, 1
      %p62 = scmp.ne.s32.totalorder %s57, %s59
      %p63 = scmp.eq.s32.totalorder %s23, 0
      %p64 = por %p62, %p63
      %p65 = scmp.ne.s32.totalorder %s57, %s59
      %p66 = scmp.eq.s32.totalorder %s28, 1
      %p67 = por %p65, %p66
      %p68 = scmp.ne.s32.totalorder %s59, %s60
      %p69 = scmp.eq.s32.totalorder %s28, 0
      %p70 = por %p68, %p69
      %p71 = scmp.ne.s32.totalorder %s59, %s60
      %p72 = scmp.eq.s32.totalorder %s29, 1
      %p73 = por %p71, %p72
      %p75 = scmp.ne.s32.totalorder %s60, %s74
      %p76 = scmp.eq.s32.totalorder %s29, 0
      %p77 = por %p75, %p76
      %s79 = sadd.s32 %s78, 1
      %p82 = scmp.eq.s32.totalorder %s23, 1
      %p83 = scmp.ne.s32.totalorder %s78, %s80
      %p84 = scmp.eq.s32.totalorder %s23, 0
      %p85 = por %p83, %p84
      %p86 = scmp.ne.s32.totalorder %s78, %s80
      %p87 = scmp.eq.s32.totalorder %s28, 1
      %p88 = por %p86, %p87
      %p89 = scmp.ne.s32.totalorder %s80, %s81
      %p90 = scmp.eq.s32.totalorder %s28, 0
      %p91 = por %p89, %p90
      %p92 = scmp.ne.s32.totalorder %s80, %s81
      %p93 = scmp.eq.s32.totalorder %s29, 1
      %p94 = por %p92, %p93
      %p96 = scmp.ne.s32.totalorder %s81, %s95
      %p97 = scmp.eq.s32.totalorder %s29, 0
      %p98 = por %p96, %p97
      %s100 = sadd.s32 %s99, 1
      %p103 = scmp.eq.s32.totalorder %s23, 1
      %p104 = scmp.ne.s32.totalorder %s99, %s101
      %p105 = scmp.eq.s32.totalorder %s23, 0
      %p106 = por %p104, %p105
      %p107 = scmp.ne.s32.totalorder %s99, %s101
      %p108 = scmp.eq.s32.totalorder %s28, 1
      %p109 = por %p107, %p108
      %p110 = scmp.ne.s32.totalorder %s101, %s102
      %p111 = scmp.eq.s32.totalorder %s28, 0
      %p112 = por %p110, %p111
      %p113 = scmp.ne.s32.totalorder %s101, %s102
      %p114 = scmp.eq.s32.totalorder %s29, 1
      %p115 = por %p113, %p114
      %p117 = scmp.ne.s32.totalorder %s102, %s116
      %p118 = scmp.eq.s32.totalorder %s29, 0
      %p119 = por %p117, %p118
      %s121 = sadd.s32 %s120, 1
      %p124 = scmp.eq.s32.totalorder %s23, 1
      %p125 = scmp.ne.s32.totalorder %s120, %s122
      %p126 = scmp.eq.s32.totalorder %s23, 0
      %p127 = por %p125, %p126
      %p128 = scmp.ne.s32.totalorder %s120, %s122
      %p129 = scmp.eq.s32.totalorder %s28, 1
      %p130 = por %p128, %p129
      %p131 = scmp.ne.s32.totalorder %s122, %s123
      %p132 = scmp.eq.s32.totalorder %s28, 0
      %p133 = por %p131, %p132
      %p134 = scmp.ne.s32.totalorder %s122, %s123
      %p135 = scmp.eq.s32.totalorder %s29, 1
      %p136 = por %p134, %p135
      %p138 = scmp.ne.s32.totalorder %s123, %s137
      %p139 = scmp.eq.s32.totalorder %s29, 0
      %p140 = por %p138, %p139
      %s142 = sadd.s32 %s141, 1
      %p145 = scmp.eq.s32.totalorder %s23, 1
      %p146 = scmp.ne.s32.totalorder %s141, %s143
      %p147 = scmp.eq.s32.totalorder %s23, 0
      %p148 = por %p146, %p147
      %p149 = scmp.ne.s32.totalorder %s141, %s143
      %p150 = scmp.eq.s32.totalorder %s28, 1
      %p151 = por %p149, %p150
      %p152 = scmp.ne.s32.totalorder %s143, %s144
      %p153 = scmp.eq.s32.totalorder %s28, 0
      %p154 = por %p152, %p153
      %p155 = scmp.ne.s32.totalorder %s143, %s144
      %p156 = scmp.eq.s32.totalorder %s29, 1
      %p157 = por %p155, %p156
      %p159 = scmp.ne.s32.totalorder %s144, %s158
      %p160 = scmp.eq.s32.totalorder %s29, 0
      %p161 = por %p159, %p160
      %s163 = sadd.s32 %s162, 1
      %p166 = scmp.eq.s32.totalorder %s23, 1
      %p167 = scmp.ne.s32.totalorder %s162, %s164
      %p168 = scmp.eq.s32.totalorder %s23, 0
      %p169 = por %p167, %p168
      %p170 = scmp.ne.s32.totalorder %s162, %s164
      %p171 = scmp.eq.s32.totalorder %s28, 1
      %p172 = por %p170, %p171
      %p173 = scmp.ne.s32.totalorder %s164, %s165
      %p174 = scmp.eq.s32.totalorder %s28, 0
      %p175 = por %p173, %p174
      %p176 = scmp.ne.s32.totalorder %s164, %s165
      %p177 = scmp.eq.s32.totalorder %s29, 1
      %p178 = por %p176, %p177
      %p180 = scmp.ne.s32.totalorder %s165, %s179
      %p181 = scmp.eq.s32.totalorder %s29, 0
      %p182 = por %p180, %p181
      %s184 = sadd.s32 %s183, 1
      %p187 = scmp.eq.s32.totalorder %s23, 1
      %p188 = scmp.ne.s32.totalorder %s183, %s185
      %p189 = scmp.eq.s32.totalorder %s23, 0
      %p190 = por %p188, %p189
      %p191 = scmp.ne.s32.totalorder %s183, %s185
      %p192 = scmp.eq.s32.totalorder %s28, 1
      %p193 = por %p191, %p192
      %p194 = scmp.ne.s32.totalorder %s185, %s186
      %p195 = scmp.eq.s32.totalorder %s28, 0
      %p196 = por %p194, %p195
      %p197 = scmp.ne.s32.totalorder %s185, %s186
      %p198 = scmp.eq.s32.totalorder %s29, 1
      %p199 = por %p197, %p198
      %p201 = scmp.ne.s32.totalorder %s186, %s200
      %p202 = scmp.eq.s32.totalorder %s29, 0
      %p203 = por %p201, %p202
      %s205 = sadd.s32 %s204, 1
      %p208 = scmp.eq.s32.totalorder %s23, 1
      %p209 = scmp.ne.s32.totalorder %s204, %s206
      %p210 = scmp.eq.s32.totalorder %s23, 0
      %p211 = por %p209, %p210
      %p212 = scmp.ne.s32.totalorder %s204, %s206
      %p213 = scmp.eq.s32.totalorder %s28, 1
      %p214 = por %p212, %p213
      %p215 = scmp.ne.s32.totalorder %s206, %s207
      %p216 = scmp.eq.s32.totalorder %s28, 0
      %p217 = por %p215, %p216
      %p218 = scmp.ne.s32.totalorder %s206, %s207
      %p219 = scmp.eq.s32.totalorder %s29, 1
      %p220 = por %p218, %p219
      %p222 = scmp.ne.s32.totalorder %s207, %s221
      %p223 = scmp.eq.s32.totalorder %s29, 0
      %p224 = por %p222, %p223
      %s225 = ssub.s32 %s23, %s30
      %p226 = scmp.eq.s32.totalorder %s225, 0
      %s228 = sadd.s32 %s227, 1
      %s229 = scalar_select %p226, %s227, %s228
      %p232 = pneg %p226
      %p233 = scmp.eq.s32.totalorder %s23, 1
      %p234 = por %p232, %p233
      %p235 = scmp.ne.s32.totalorder %s227, %s230
      %p236 = scmp.eq.s32.totalorder %s23, 0
      %p237 = por %p235, %p236
      %p238 = scmp.ne.s32.totalorder %s227, %s230
      %p239 = scmp.eq.s32.totalorder %s28, 1
      %p240 = por %p238, %p239
      %p241 = scmp.ne.s32.totalorder %s230, %s231
      %p242 = scmp.eq.s32.totalorder %s28, 0
      %p243 = por %p241, %p242
      %p244 = scmp.ne.s32.totalorder %s230, %s231
      %p245 = scmp.eq.s32.totalorder %s29, 1
      %p246 = por %p244, %p245
      %p248 = scmp.ne.s32.totalorder %s231, %s247
      %p249 = scmp.eq.s32.totalorder %s29, 0
      %p250 = por %p248, %p249
      %p251 = scmp.le.s32.totalorder 1, %s23
      %p252 = scmp.lt.s32.totalorder %s23, 3
      %p253 = pnand %p251, %p252
      %p254 = pneg %p253
      // Predicated region
      $region9: #{tpu_custom_call.1} parent=5 // pred_check
        _
      $region10: #{tpu_custom_call.1} parent=5 // pred_check_branch
        %256 = sbr.rel (%p253) target = $region12
      $region11: #{tpu_custom_call.1} parent=5 // pred_region
        %s257 = ssub.s32 %s23, 1
        // Predicated region
        $region13: #{tpu_custom_call.1} parent=11 // pred_check
          %p258 = pneg %p70
        $region14: #{tpu_custom_call.1} parent=11 // pred_check_branch
          %260 = sbr.rel (%p258) target = $region16
        $region15: #{tpu_custom_call.1} parent=11 // pred_region
          %s262 = ssub.s32 9216, 9216
          %263 = vsyncadd [#allocation8], %s262
          %s264 = sshll.u32 [#allocation7], 4
          %s265 = int_to_ptr.vmem [resolvable:$true] %s264
          %270 = dma.hbm_to_vmem [thread:$0]  %s1, 9216, %s265, [#allocation8], 64, 64, 4
        $region16: #{tpu_custom_call.1} parent=11 // pred_fallthru
          _
        // Predicated region
        $region17: #{tpu_custom_call.1} parent=11 // pred_check
          %p271 = pneg %p91
        $region18: #{tpu_custom_call.1} parent=11 // pred_check_branch
          %273 = sbr.rel (%p271) target = $region20
        $region19: #{tpu_custom_call.1} parent=11 // pred_region
          %s275 = ssub.s32 9216, 9216
          %276 = vsyncadd [#allocation8], %s275
          %s277 = sshll.u32 [#allocation9], 4
          %s278 = int_to_ptr.vmem [resolvable:$true] %s277
          %283 = dma.hbm_to_vmem [thread:$0]  %s2, 9216, %s278, [#allocation8], 64, 64, 4
        $region20: #{tpu_custom_call.1} parent=11 // pred_fallthru
          _
        // Predicated region
        $region21: #{tpu_custom_call.1} parent=11 // pred_check
          %p284 = pneg %p112
        $region22: #{tpu_custom_call.1} parent=11 // pred_check_branch
          %286 = sbr.rel (%p284) target = $region24
        $region23: #{tpu_custom_call.1} parent=11 // pred_region
          _
        $region24: #{tpu_custom_call.1} parent=11 // pred_fallthru
          _
        // Predicated region
        $region25: #{tpu_custom_call.1} parent=11 // pred_check
          %p287 = pneg %p133
        $region26: #{tpu_custom_call.1} parent=11 // pred_check_branch
          %289 = sbr.rel (%p287) target = $region28
        $region27: #{tpu_custom_call.1} parent=11 // pred_region
          _
        $region28: #{tpu_custom_call.1} parent=11 // pred_fallthru
          _
        // Predicated region
        $region29: #{tpu_custom_call.1} parent=11 // pred_check
          %p290 = pneg %p154
        $region30: #{tpu_custom_call.1} parent=11 // pred_check_branch
          %292 = sbr.rel (%p290) target = $region32
        $region31: #{tpu_custom_call.1} parent=11 // pred_region
          _
        $region32: #{tpu_custom_call.1} parent=11 // pred_fallthru
          _
        // Predicated region
        $region33: #{tpu_custom_call.1} parent=11 // pred_check
          %p293 = pneg %p175
        $region34: #{tpu_custom_call.1} parent=11 // pred_check_branch
          %295 = sbr.rel (%p293) target = $region36
        $region35: #{tpu_custom_call.1} parent=11 // pred_region
          _
        $region36: #{tpu_custom_call.1} parent=11 // pred_fallthru
          _
        // Predicated region
        $region37: #{tpu_custom_call.1} parent=11 // pred_check
          %p296 = pneg %p196
        $region38: #{tpu_custom_call.1} parent=11 // pred_check_branch
          %298 = sbr.rel (%p296) target = $region40
        $region39: #{tpu_custom_call.1} parent=11 // pred_region
          %s300 = ssub.s32 1024, 1024
          %301 = vsyncadd [#allocation11], %s300
          %s302 = sshll.u32 [#allocation10], 4
          %s303 = int_to_ptr.vmem [resolvable:$true] %s302
          %308 = dma.hbm_to_vmem [thread:$0]  %s7, 1024, %s303, [#allocation11], 64, 64, 4
        $region40: #{tpu_custom_call.1} parent=11 // pred_fallthru
          _
        // Predicated region
        $region41: #{tpu_custom_call.1} parent=11 // pred_check
          %p309 = pneg %p217
        $region42: #{tpu_custom_call.1} parent=11 // pred_check_branch
          %311 = sbr.rel (%p309) target = $region44
        $region43: #{tpu_custom_call.1} parent=11 // pred_region
          _
        $region44: #{tpu_custom_call.1} parent=11 // pred_fallthru
          _
      $region12: #{tpu_custom_call.1} parent=5 // pred_fallthru
        _
      %p312 = scmp.lt.s32.totalorder %s23, 2
      // Predicated region
      $region45: #{tpu_custom_call.1} parent=5 // pred_check
        %p313 = pneg %p312
      $region46: #{tpu_custom_call.1} parent=5 // pred_check_branch
        %315 = sbr.rel (%p313) target = $region48
      $region47: #{tpu_custom_call.1} parent=5 // pred_region
        // Predicated region
        $region49: #{tpu_custom_call.1} parent=47 // pred_check
          %p316 = pneg %p43
        $region50: #{tpu_custom_call.1} parent=47 // pred_check_branch
          %318 = sbr.rel (%p316) target = $region52
        $region51: #{tpu_custom_call.1} parent=47 // pred_region
          %s319 = sand.u32 %s33, 1
          %s320 = scalar_lea.sflag [#allocation5], %s319
          %s321 = sand.u32 %s33, 1
          %s322 = smul.addr %s321, 256
          %s323 = scalar_lea.vmem [#allocation4], %s322
          %s325 = ssub.s32 4096, 4096
          %326 = vsyncadd %s320, %s325
          %s327 = smul.addr %s23, 32
          %s328 = smul.addr %s327, 128
          %s329 = scalar_lea.hbm %s0, %s328
          %s330 = sshll.u32 %s323, 4
          %s331 = int_to_ptr.vmem [resolvable:$true] %s330
          %336 = dma.hbm_to_vmem [thread:$0]  %s329, 4096, %s331, %s320, 128, 128, 8
        $region52: #{tpu_custom_call.1} parent=47 // pred_fallthru
          _
      $region48: #{tpu_custom_call.1} parent=5 // pred_fallthru
        _
      %p337 = scmp.le.s32.totalorder 1, %s23
      %p338 = scmp.lt.s32.totalorder %s23, 3
      %p339 = pnand %p337, %p338
      %p340 = pneg %p339
      // Predicated region
      $region53: #{tpu_custom_call.1} parent=5 // pred_check
        _
      $region54: #{tpu_custom_call.1} parent=5 // pred_check_branch
        %342 = sbr.rel (%p339) target = $region56
      $region55: #{tpu_custom_call.1} parent=5 // pred_region
        %s343 = ssub.s32 %s23, 1
        %s344 = sand.u32 %s36, 1
        %s345 = scalar_lea.sflag [#allocation5], %s344
        %s346 = sand.u32 %s36, 1
        %s347 = smul.addr %s346, 256
        %s348 = scalar_lea.vmem [#allocation4], %s347
        // Predicated region
        $region57: #{tpu_custom_call.1} parent=55 // pred_check
          %p349 = pneg %p49
        $region58: #{tpu_custom_call.1} parent=55 // pred_check_branch
          %351 = sbr.rel (%p349) target = $region60
        $region59: #{tpu_custom_call.1} parent=55 // pred_region
          %352 = dma.done %s345, 4096
        $region60: #{tpu_custom_call.1} parent=55 // pred_fallthru
          _
        // Predicated region
        $region61: #{tpu_custom_call.1} parent=55 // pred_check
          %p353 = pneg %p70
        $region62: #{tpu_custom_call.1} parent=55 // pred_check_branch
          %355 = sbr.rel (%p353) target = $region64
        $region63: #{tpu_custom_call.1} parent=55 // pred_region
          %356 = dma.done [#allocation8], 9216
        $region64: #{tpu_custom_call.1} parent=55 // pred_fallthru
          _
        // Predicated region
        $region65: #{tpu_custom_call.1} parent=55 // pred_check
          %p357 = pneg %p91
        $region66: #{tpu_custom_call.1} parent=55 // pred_check_branch
          %359 = sbr.rel (%p357) target = $region68
        $region67: #{tpu_custom_call.1} parent=55 // pred_region
          %360 = dma.done [#allocation8], 9216
        $region68: #{tpu_custom_call.1} parent=55 // pred_fallthru
          _
        // Predicated region
        $region69: #{tpu_custom_call.1} parent=55 // pred_check
          %p361 = pneg %p196
        $region70: #{tpu_custom_call.1} parent=55 // pred_check_branch
          %363 = sbr.rel (%p361) target = $region72
        $region71: #{tpu_custom_call.1} parent=55 // pred_region
          %364 = dma.done [#allocation11], 1024
        $region72: #{tpu_custom_call.1} parent=55 // pred_fallthru
          _
        %s365 = sand.u32 %s36, 1
        %s366 = scalar_lea.sflag [#allocation5], %s365
        %s367 = sand.u32 %s36, 1
        %s368 = smul.addr %s367, 256
        %s369 = scalar_lea.vmem [#allocation4], %s368
        %p370 = pneg %p49
        %p371 = pneg %p46
        %p372 = pneg %p70
        %p373 = pneg %p67
        %p374 = pneg %p91
        %p375 = pneg %p88
        %p376 = pneg %p112
        %p377 = pneg %p109
        %p378 = pneg %p133
        %p379 = pneg %p130
        %p380 = pneg %p154
        %p381 = pneg %p151
        %p382 = pneg %p175
        %p383 = pneg %p172
        %p384 = pneg %p196
        %p385 = pneg %p193
        %p386 = pneg %p217
        %p387 = pneg %p214
        %p388 = pneg %p243
        %p389 = pneg %p240
        %s390 = sand.u32 %s230, 1
        %s391 = scalar_lea.sflag [#allocation6], %s390
        %s392 = sand.u32 %s230, 1
        %s393 = smul.addr %s392, 64
        %s394 = scalar_lea.vmem [#allocation12], %s393
        %396 = vst [vmem:[#allocation2] sm:$0xf] 0
        %397 = vst [vmem:[#allocation2 + $0x4] sm:$0xf] 0
        %398 = vst [vmem:[#allocation2 + $0x8] sm:$0xf] 0
        %s399 = scalar_lea.vmem [#allocation2], 204
        %400 = vst [vmem:[%s399] sm:$0xf] 0
        %401 = vst [vmem:[%s399 + $0x4] sm:$0xf] 0
        %402 = vst [vmem:[%s399 + $0x8] sm:$0xf] 0
        %s403 = scalar_lea.vmem [#allocation2], 12
        %vm404 = vcmask 1040384
        %vm405 = vsmask.f32 256
        %vm406 = vmand %vm404, %vm405
        %v407 = vld [vmem:[%s403] sm:$0x1]
        %v408 = vsel %vm406, 0, %v407
        %409 = vst [vmem:[%s403] sm:$0x1] %v408
        %v410 = vld [vmem:[%s403 + $0xc] sm:$0x1]
        %v411 = vsel %vm406, 0, %v410
        %412 = vst [vmem:[%s403 + $0xc] sm:$0x1] %v411
        %v413 = vld [vmem:[%s403 + $0x18] sm:$0x1]
        %v414 = vsel %vm406, 0, %v413
        %415 = vst [vmem:[%s403 + $0x18] sm:$0x1] %v414
        %v416 = vld [vmem:[%s403 + $0x24] sm:$0x1]
        %v417 = vsel %vm406, 0, %v416
        %418 = vst [vmem:[%s403 + $0x24] sm:$0x1] %v417
        %v419 = vld [vmem:[%s403 + $0x30] sm:$0x1]
        %v420 = vsel %vm406, 0, %v419
        %421 = vst [vmem:[%s403 + $0x30] sm:$0x1] %v420
        %v422 = vld [vmem:[%s403 + $0x3c] sm:$0x1]
        %v423 = vsel %vm406, 0, %v422
        %424 = vst [vmem:[%s403 + $0x3c] sm:$0x1] %v423
        %v425 = vld [vmem:[%s403 + $0x48] sm:$0x1]
        %v426 = vsel %vm406, 0, %v425
        %427 = vst [vmem:[%s403 + $0x48] sm:$0x1] %v426
        %v428 = vld [vmem:[%s403 + $0x54] sm:$0x1]
        %v429 = vsel %vm406, 0, %v428
        %430 = vst [vmem:[%s403 + $0x54] sm:$0x1] %v429
        %v431 = vld [vmem:[%s403 + $0x60] sm:$0x1]
        %v432 = vsel %vm406, 0, %v431
        %433 = vst [vmem:[%s403 + $0x60] sm:$0x1] %v432
        %v434 = vld [vmem:[%s403 + $0x6c] sm:$0x1]
        %v435 = vsel %vm406, 0, %v434
        %436 = vst [vmem:[%s403 + $0x6c] sm:$0x1] %v435
        %v437 = vld [vmem:[%s403 + $0x78] sm:$0x1]
        %v438 = vsel %vm406, 0, %v437
        %439 = vst [vmem:[%s403 + $0x78] sm:$0x1] %v438
        %v440 = vld [vmem:[%s403 + $0x84] sm:$0x1]
        %v441 = vsel %vm406, 0, %v440
        %442 = vst [vmem:[%s403 + $0x84] sm:$0x1] %v441
        %v443 = vld [vmem:[%s403 + $0x90] sm:$0x1]
        %v444 = vsel %vm406, 0, %v443
        %445 = vst [vmem:[%s403 + $0x90] sm:$0x1] %v444
        %v446 = vld [vmem:[%s403 + $0x9c] sm:$0x1]
        %v447 = vsel %vm406, 0, %v446
        %448 = vst [vmem:[%s403 + $0x9c] sm:$0x1] %v447
        %v449 = vld [vmem:[%s403 + $0xa8] sm:$0x1]
        %v450 = vsel %vm406, 0, %v449
        %451 = vst [vmem:[%s403 + $0xa8] sm:$0x1] %v450
        %v452 = vld [vmem:[%s403 + $0xb4] sm:$0x1]
        %v453 = vsel %vm406, 0, %v452
        %454 = vst [vmem:[%s403 + $0xb4] sm:$0x1] %v453
        %vm455 = vsmask.f32 7938
        %vm456 = vmand %vm404, %vm455
        %v457 = vld [vmem:[%s403 + $0x8] sm:$0x1]
        %v458 = vsel %vm456, 0, %v457
        %459 = vst [vmem:[%s403 + $0x8] sm:$0x1] %v458
        %v460 = vld [vmem:[%s403 + $0x14] sm:$0x1]
        %v461 = vsel %vm456, 0, %v460
        %462 = vst [vmem:[%s403 + $0x14] sm:$0x1] %v461
        %v463 = vld [vmem:[%s403 + $0x20] sm:$0x1]
        %v464 = vsel %vm456, 0, %v463
        %465 = vst [vmem:[%s403 + $0x20] sm:$0x1] %v464
        %v466 = vld [vmem:[%s403 + $0x2c] sm:$0x1]
        %v467 = vsel %vm456, 0, %v466
        %468 = vst [vmem:[%s403 + $0x2c] sm:$0x1] %v467
        %v469 = vld [vmem:[%s403 + $0x38] sm:$0x1]
        %v470 = vsel %vm456, 0, %v469
        %471 = vst [vmem:[%s403 + $0x38] sm:$0x1] %v470
        %v472 = vld [vmem:[%s403 + $0x44] sm:$0x1]
        %v473 = vsel %vm456, 0, %v472
        %474 = vst [vmem:[%s403 + $0x44] sm:$0x1] %v473
        %v475 = vld [vmem:[%s403 + $0x50] sm:$0x1]
        %v476 = vsel %vm456, 0, %v475
        %477 = vst [vmem:[%s403 + $0x50] sm:$0x1] %v476
        %v478 = vld [vmem:[%s403 + $0x5c] sm:$0x1]
        %v479 = vsel %vm456, 0, %v478
        %480 = vst [vmem:[%s403 + $0x5c] sm:$0x1] %v479
        %v481 = vld [vmem:[%s403 + $0x68] sm:$0x1]
        %v482 = vsel %vm456, 0, %v481
        %483 = vst [vmem:[%s403 + $0x68] sm:$0x1] %v482
        %v484 = vld [vmem:[%s403 + $0x74] sm:$0x1]
        %v485 = vsel %vm456, 0, %v484
        %486 = vst [vmem:[%s403 + $0x74] sm:$0x1] %v485
        %v487 = vld [vmem:[%s403 + $0x80] sm:$0x1]
        %v488 = vsel %vm456, 0, %v487
        %489 = vst [vmem:[%s403 + $0x80] sm:$0x1] %v488
        %v490 = vld [vmem:[%s403 + $0x8c] sm:$0x1]
        %v491 = vsel %vm456, 0, %v490
        %492 = vst [vmem:[%s403 + $0x8c] sm:$0x1] %v491
        %v493 = vld [vmem:[%s403 + $0x98] sm:$0x1]
        %v494 = vsel %vm456, 0, %v493
        %495 = vst [vmem:[%s403 + $0x98] sm:$0x1] %v494
        %v496 = vld [vmem:[%s403 + $0xa4] sm:$0x1]
        %v497 = vsel %vm456, 0, %v496
        %498 = vst [vmem:[%s403 + $0xa4] sm:$0x1] %v497
        %v499 = vld [vmem:[%s403 + $0xb0] sm:$0x1]
        %v500 = vsel %vm456, 0, %v499
        %501 = vst [vmem:[%s403 + $0xb0] sm:$0x1] %v500
        %v502 = vld [vmem:[%s403 + $0xbc] sm:$0x1]
        %v503 = vsel %vm456, 0, %v502
        %504 = vst [vmem:[%s403 + $0xbc] sm:$0x1] %v503
        %505 = vst [vmem:[#allocation3] sm:$0xff] 0.0
        %506 = vst [vmem:[#allocation3 + $0x8] sm:$0xff] 0.0
        %507 = vst [vmem:[#allocation3 + $0x10] sm:$0xff] 0.0
        %s508 = scalar_lea.vmem [#allocation3], 408
        %509 = vst [vmem:[%s508] sm:$0xff] 0.0
        %510 = vst [vmem:[%s508 + $0x8] sm:$0xff] 0.0
        %511 = vst [vmem:[%s508 + $0x10] sm:$0xff] 0.0
        %s512 = scalar_lea.vmem [#allocation3], 24
        %513 = vst [vmem:[%s512] sm:$0x1] 0.0
        %514 = vst [vmem:[%s512 + $0x18] sm:$0x1] 0.0
        %515 = vst [vmem:[%s512 + $0x30] sm:$0x1] 0.0
        %516 = vst [vmem:[%s512 + $0x48] sm:$0x1] 0.0
        %517 = vst [vmem:[%s512 + $0x60] sm:$0x1] 0.0
        %518 = vst [vmem:[%s512 + $0x78] sm:$0x1] 0.0
        %519 = vst [vmem:[%s512 + $0x90] sm:$0x1] 0.0
        %520 = vst [vmem:[%s512 + $0xa8] sm:$0x1] 0.0
        %521 = vst [vmem:[%s512 + $0xc0] sm:$0x1] 0.0
        %522 = vst [vmem:[%s512 + $0xd8] sm:$0x1] 0.0
        %523 = vst [vmem:[%s512 + $0xf0] sm:$0x1] 0.0
        %524 = vst [vmem:[%s512 + $0x108] sm:$0x1] 0.0
        %525 = vst [vmem:[%s512 + $0x120] sm:$0x1] 0.0
        %526 = vst [vmem:[%s512 + $0x138] sm:$0x1] 0.0
        %527 = vst [vmem:[%s512 + $0x150] sm:$0x1] 0.0
        %528 = vst [vmem:[%s512 + $0x168] sm:$0x1] 0.0
        %529 = vst [vmem:[%s512 + $0x11] sm:$0x1] 0.0
        %530 = vst [vmem:[%s512 + $0x29] sm:$0x1] 0.0
        %531 = vst [vmem:[%s512 + $0x41] sm:$0x1] 0.0
        %532 = vst [vmem:[%s512 + $0x59] sm:$0x1] 0.0
        %533 = vst [vmem:[%s512 + $0x71] sm:$0x1] 0.0
        %534 = vst [vmem:[%s512 + $0x89] sm:$0x1] 0.0
        %535 = vst [vmem:[%s512 + $0xa1] sm:$0x1] 0.0
        %536 = vst [vmem:[%s512 + $0xb9] sm:$0x1] 0.0
        %537 = vst [vmem:[%s512 + $0xd1] sm:$0x1] 0.0
        %538 = vst [vmem:[%s512 + $0xe9] sm:$0x1] 0.0
        %539 = vst [vmem:[%s512 + $0x101] sm:$0x1] 0.0
        %540 = vst [vmem:[%s512 + $0x119] sm:$0x1] 0.0
        %541 = vst [vmem:[%s512 + $0x131] sm:$0x1] 0.0
        %542 = vst [vmem:[%s512 + $0x149] sm:$0x1] 0.0
        %543 = vst [vmem:[%s512 + $0x161] sm:$0x1] 0.0
        %544 = vst [vmem:[%s512 + $0x179] sm:$0x1] 0.0
        %v545 = vld [vmem:[%s348] sm:$0xff]
        %v546 = vld [vmem:[%s348 + $0x8] sm:$0xff]
        %v547 = vld [vmem:[%s348 + $0x10] sm:$0xff]
        %v548 = vld [vmem:[%s348 + $0x18] sm:$0xff]
        %v549 = vld [vmem:[%s348 + $0x20] sm:$0xff]
        %v550 = vld [vmem:[%s348 + $0x28] sm:$0xff]
        %v551 = vld [vmem:[%s348 + $0x30] sm:$0xff]
        %v552 = vld [vmem:[%s348 + $0x38] sm:$0xff]
        %v553 = vld [vmem:[%s348 + $0x40] sm:$0xff]
        %v554 = vld [vmem:[%s348 + $0x48] sm:$0xff]
        %v555 = vld [vmem:[%s348 + $0x50] sm:$0xff]
        %v556 = vld [vmem:[%s348 + $0x58] sm:$0xff]
        %v557 = vld [vmem:[%s348 + $0x60] sm:$0xff]
        %v558 = vld [vmem:[%s348 + $0x68] sm:$0xff]
        %v559 = vld [vmem:[%s348 + $0x70] sm:$0xff]
        %v560 = vld [vmem:[%s348 + $0x78] sm:$0xff]
        %v561 = vld [vmem:[%s348 + $0x80] sm:$0xff]
        %v562 = vld [vmem:[%s348 + $0x88] sm:$0xff]
        %v563 = vld [vmem:[%s348 + $0x90] sm:$0xff]
        %v564 = vld [vmem:[%s348 + $0x98] sm:$0xff]
        %v565 = vld [vmem:[%s348 + $0xa0] sm:$0xff]
        %v566 = vld [vmem:[%s348 + $0xa8] sm:$0xff]
        %v567 = vld [vmem:[%s348 + $0xb0] sm:$0xff]
        %v568 = vld [vmem:[%s348 + $0xb8] sm:$0xff]
        %v569 = vld [vmem:[%s348 + $0xc0] sm:$0xff]
        %v570 = vld [vmem:[%s348 + $0xc8] sm:$0xff]
        %v571 = vld [vmem:[%s348 + $0xd0] sm:$0xff]
        %v572 = vld [vmem:[%s348 + $0xd8] sm:$0xff]
        %v573 = vld [vmem:[%s348 + $0xe0] sm:$0xff]
        %v574 = vld [vmem:[%s348 + $0xe8] sm:$0xff]
        %v575 = vld [vmem:[%s348 + $0xf0] sm:$0xff]
        %v576 = vld [vmem:[%s348 + $0xf8] sm:$0xff]
        %v577 = vld [vmem:[%s3] sm:$0x1]
        %v579 = vlaneseq
        %v580 = vshrl.u32 %v579, 7
        %v581 = vsub.s32 0, %v580
        %v582 = vrot.slane %v577, %v581
        %v584 = vmul.f32 %v545, %v582
        %v585 = vmul.f32 %v546, %v582
        %v586 = vmul.f32 %v547, %v582
        %v587 = vmul.f32 %v548, %v582
        %v588 = vmul.f32 %v549, %v582
        %v589 = vmul.f32 %v550, %v582
        %v590 = vmul.f32 %v551, %v582
        %v591 = vmul.f32 %v552, %v582
        %v592 = vmul.f32 %v553, %v582
        %v593 = vmul.f32 %v554, %v582
        %v594 = vmul.f32 %v555, %v582
        %v595 = vmul.f32 %v556, %v582
        %v596 = vmul.f32 %v557, %v582
        %v597 = vmul.f32 %v558, %v582
        %v598 = vmul.f32 %v559, %v582
        %v599 = vmul.f32 %v560, %v582
        %v600 = vmul.f32 %v561, %v582
        %v601 = vmul.f32 %v562, %v582
        %v602 = vmul.f32 %v563, %v582
        %v603 = vmul.f32 %v564, %v582
        %v604 = vmul.f32 %v565, %v582
        %v605 = vmul.f32 %v566, %v582
        %v606 = vmul.f32 %v567, %v582
        %v607 = vmul.f32 %v568, %v582
        %v608 = vmul.f32 %v569, %v582
        %v609 = vmul.f32 %v570, %v582
        %v610 = vmul.f32 %v571, %v582
        %v611 = vmul.f32 %v572, %v582
        %v612 = vmul.f32 %v573, %v582
        %v613 = vmul.f32 %v574, %v582
        %v614 = vmul.f32 %v575, %v582
        %v615 = vmul.f32 %v576, %v582
        %v616 = vld [vmem:[%s4] sm:$0x1]
        %v618 = vlaneseq
        %v619 = vshrl.u32 %v618, 7
        %v620 = vsub.s32 0, %v619
        %v621 = vrot.slane %v616, %v620
        %v623 = vadd.f32 %v584, %v621
        %v624 = vadd.f32 %v585, %v621
        %v625 = vadd.f32 %v586, %v621
        %v626 = vadd.f32 %v587, %v621
        %v627 = vadd.f32 %v588, %v621
        %v628 = vadd.f32 %v589, %v621
        %v629 = vadd.f32 %v590, %v621
        %v630 = vadd.f32 %v591, %v621
        %v631 = vadd.f32 %v592, %v621
        %v632 = vadd.f32 %v593, %v621
        %v633 = vadd.f32 %v594, %v621
        %v634 = vadd.f32 %v595, %v621
        %v635 = vadd.f32 %v596, %v621
        %v636 = vadd.f32 %v597, %v621
        %v637 = vadd.f32 %v598, %v621
        %v638 = vadd.f32 %v599, %v621
        %v639 = vadd.f32 %v600, %v621
        %v640 = vadd.f32 %v601, %v621
        %v641 = vadd.f32 %v602, %v621
        %v642 = vadd.f32 %v603, %v621
        %v643 = vadd.f32 %v604, %v621
        %v644 = vadd.f32 %v605, %v621
        %v645 = vadd.f32 %v606, %v621
        %v646 = vadd.f32 %v607, %v621
        %v647 = vadd.f32 %v608, %v621
        %v648 = vadd.f32 %v609, %v621
        %v649 = vadd.f32 %v610, %v621
        %v650 = vadd.f32 %v611, %v621
        %v651 = vadd.f32 %v612, %v621
        %v652 = vadd.f32 %v613, %v621
        %v653 = vadd.f32 %v614, %v621
        %v654 = vadd.f32 %v615, %v621
        %v655 = vpack.c.bf16 %v624, %v623
        %v656 = vpack.c.bf16 %v626, %v625
        %v657 = vpack.c.bf16 %v628, %v627
        %v658 = vpack.c.bf16 %v630, %v629
        %v659 = vpack.c.bf16 %v632, %v631
        %v660 = vpack.c.bf16 %v634, %v633
        %v661 = vpack.c.bf16 %v636, %v635
        %v662 = vpack.c.bf16 %v638, %v637
        %v663 = vpack.c.bf16 %v640, %v639
        %v664 = vpack.c.bf16 %v642, %v641
        %v665 = vpack.c.bf16 %v644, %v643
        %v666 = vpack.c.bf16 %v646, %v645
        %v667 = vpack.c.bf16 %v648, %v647
        %v668 = vpack.c.bf16 %v650, %v649
        %v669 = vpack.c.bf16 %v652, %v651
        %v670 = vpack.c.bf16 %v654, %v653
        %v687 = vunpack.c.l.b16 %v655
        %v688 = vunpack.c.h.b16 %v655
        %v689 = vunpack.c.l.b16 %v656
        %v690 = vunpack.c.h.b16 %v656
        %v691 = vunpack.c.l.b16 %v657
        %v692 = vunpack.c.h.b16 %v657
        %v693 = vunpack.c.l.b16 %v658
        %v694 = vunpack.c.h.b16 %v658
        %v695 = vunpack.c.l.b16 %v659
        %v696 = vunpack.c.h.b16 %v659
        %v697 = vunpack.c.l.b16 %v660
        %v698 = vunpack.c.h.b16 %v660
        %v699 = vunpack.c.l.b16 %v661
        %v700 = vunpack.c.h.b16 %v661
        %v701 = vunpack.c.l.b16 %v662
        %v702 = vunpack.c.h.b16 %v662
        %v703 = vunpack.c.l.b16 %v663
        %v704 = vunpack.c.h.b16 %v663
        %v705 = vunpack.c.l.b16 %v664
        %v706 = vunpack.c.h.b16 %v664
        %v707 = vunpack.c.l.b16 %v665
        %v708 = vunpack.c.h.b16 %v665
        %v709 = vunpack.c.l.b16 %v666
        %v710 = vunpack.c.h.b16 %v666
        %v711 = vunpack.c.l.b16 %v667
        %v712 = vunpack.c.h.b16 %v667
        %v713 = vunpack.c.l.b16 %v668
        %v714 = vunpack.c.h.b16 %v668
        %v715 = vunpack.c.l.b16 %v669
        %v716 = vunpack.c.h.b16 %v669
        %v717 = vunpack.c.l.b16 %v670
        %v718 = vunpack.c.h.b16 %v670
        %v719 = vpack.c.b16 %v687, %v687
        %v720 = vpack.c.b16 %v688, %v688
        %v721 = vpack.c.b16 %v689, %v689
        %v722 = vpack.c.b16 %v690, %v690
        %v723 = vpack.c.b16 %v691, %v691
        %v724 = vpack.c.b16 %v692, %v692
        %v725 = vpack.c.b16 %v693, %v693
        %v726 = vpack.c.b16 %v694, %v694
        %v727 = vpack.c.b16 %v695, %v695
        %v728 = vpack.c.b16 %v696, %v696
        %v729 = vpack.c.b16 %v697, %v697
        %v730 = vpack.c.b16 %v698, %v698
        %v731 = vpack.c.b16 %v699, %v699
        %v732 = vpack.c.b16 %v700, %v700
        %v733 = vpack.c.b16 %v701, %v701
        %v734 = vpack.c.b16 %v702, %v702
        %v735 = vpack.c.b16 %v703, %v703
        %v736 = vpack.c.b16 %v704, %v704
        %v737 = vpack.c.b16 %v705, %v705
        %v738 = vpack.c.b16 %v706, %v706
        %v739 = vpack.c.b16 %v707, %v707
        %v740 = vpack.c.b16 %v708, %v708
        %v741 = vpack.c.b16 %v709, %v709
        %v742 = vpack.c.b16 %v710, %v710
        %v743 = vpack.c.b16 %v711, %v711
        %v744 = vpack.c.b16 %v712, %v712
        %v745 = vpack.c.b16 %v713, %v713
        %v746 = vpack.c.b16 %v714, %v714
        %v747 = vpack.c.b16 %v715, %v715
        %v748 = vpack.c.b16 %v716, %v716
        %v749 = vpack.c.b16 %v717, %v717
        %v750 = vpack.c.b16 %v718, %v718
        %vm751 = vsmask.f32 4368
        %vm752 = vmor %vm405, %vm751
        %v754 = vshrl.u32 %v719, 16
        %v756 = vrot.slane %v754, 7
        %v757 = vshll.u32 %v719, 16
        %v759 = vor.u32 %v756, %v757
        %v760 = vrot.slane %v756, 4
        %v762 = vshrl.u32 %v720, 16
        %v764 = vrot.slane %v762, 7
        %v765 = vshll.u32 %v720, 16
        %v767 = vor.u32 %v764, %v765
        %v768 = vsel %vm752, %v760, %v767
        %v769 = vrot.slane %v764, 4
        %v771 = vshrl.u32 %v721, 16
        %v773 = vrot.slane %v771, 7
        %v774 = vshll.u32 %v721, 16
        %v776 = vor.u32 %v773, %v774
        %v777 = vrot.slane %v773, 4
        %v779 = vshrl.u32 %v722, 16
        %v781 = vrot.slane %v779, 7
        %v782 = vshll.u32 %v722, 16
        %v784 = vor.u32 %v781, %v782
        %v785 = vsel %vm752, %v777, %v784
        %v786 = vrot.slane %v781, 4
        %v788 = vshrl.u32 %v723, 16
        %v790 = vrot.slane %v788, 7
        %v791 = vshll.u32 %v723, 16
        %v793 = vor.u32 %v790, %v791
        %v794 = vrot.slane %v790, 4
        %v796 = vshrl.u32 %v724, 16
        %v798 = vrot.slane %v796, 7
        %v799 = vshll.u32 %v724, 16
        %v801 = vor.u32 %v798, %v799
        %v802 = vsel %vm752, %v794, %v801
        %v803 = vrot.slane %v798, 4
        %v805 = vshrl.u32 %v725, 16
        %v807 = vrot.slane %v805, 7
        %v808 = vshll.u32 %v725, 16
        %v810 = vor.u32 %v807, %v808
        %v811 = vrot.slane %v807, 4
        %v813 = vshrl.u32 %v726, 16
        %v815 = vrot.slane %v813, 7
        %v816 = vshll.u32 %v726, 16
        %v818 = vor.u32 %v815, %v816
        %v819 = vsel %vm752, %v811, %v818
        %v820 = vrot.slane %v815, 4
        %v822 = vshrl.u32 %v727, 16
        %v824 = vrot.slane %v822, 7
        %v825 = vshll.u32 %v727, 16
        %v827 = vor.u32 %v824, %v825
        %v828 = vrot.slane %v824, 4
        %v830 = vshrl.u32 %v728, 16
        %v832 = vrot.slane %v830, 7
        %v833 = vshll.u32 %v728, 16
        %v835 = vor.u32 %v832, %v833
        %v836 = vsel %vm752, %v828, %v835
        %v837 = vrot.slane %v832, 4
        %v839 = vshrl.u32 %v729, 16
        %v841 = vrot.slane %v839, 7
        %v842 = vshll.u32 %v729, 16
        %v844 = vor.u32 %v841, %v842
        %v845 = vrot.slane %v841, 4
        %v847 = vshrl.u32 %v730, 16
        %v849 = vrot.slane %v847, 7
        %v850 = vshll.u32 %v730, 16
        %v852 = vor.u32 %v849, %v850
        %v853 = vsel %vm752, %v845, %v852
        %v854 = vrot.slane %v849, 4
        %v856 = vshrl.u32 %v731, 16
        %v858 = vrot.slane %v856, 7
        %v859 = vshll.u32 %v731, 16
        %v861 = vor.u32 %v858, %v859
        %v862 = vrot.slane %v858, 4
        %v864 = vshrl.u32 %v732, 16
        %v866 = vrot.slane %v864, 7
        %v867 = vshll.u32 %v732, 16
        %v869 = vor.u32 %v866, %v867
        %v870 = vsel %vm752, %v862, %v869
        %v871 = vrot.slane %v866, 4
        %v873 = vshrl.u32 %v733, 16
        %v875 = vrot.slane %v873, 7
        %v876 = vshll.u32 %v733, 16
        %v878 = vor.u32 %v875, %v876
        %v879 = vrot.slane %v875, 4
        %v881 = vshrl.u32 %v734, 16
        %v883 = vrot.slane %v881, 7
        %v884 = vshll.u32 %v734, 16
        %v886 = vor.u32 %v883, %v884
        %v887 = vsel %vm752, %v879, %v886
        %v888 = vrot.slane %v883, 4
        %v890 = vshrl.u32 %v735, 16
        %v892 = vrot.slane %v890, 7
        %v893 = vshll.u32 %v735, 16
        %v895 = vor.u32 %v892, %v893
        %v896 = vrot.slane %v892, 4
        %v898 = vshrl.u32 %v736, 16
        %v900 = vrot.slane %v898, 7
        %v901 = vshll.u32 %v736, 16
        %v903 = vor.u32 %v900, %v901
        %v904 = vsel %vm752, %v896, %v903
        %v905 = vrot.slane %v900, 4
        %v907 = vshrl.u32 %v737, 16
        %v909 = vrot.slane %v907, 7
        %v910 = vshll.u32 %v737, 16
        %v912 = vor.u32 %v909, %v910
        %v913 = vrot.slane %v909, 4
        %v915 = vshrl.u32 %v738, 16
        %v917 = vrot.slane %v915, 7
        %v918 = vshll.u32 %v738, 16
        %v920 = vor.u32 %v917, %v918
        %v921 = vsel %vm752, %v913, %v920
        %v922 = vrot.slane %v917, 4
        %v924 = vshrl.u32 %v739, 16
        %v926 = vrot.slane %v924, 7
        %v927 = vshll.u32 %v739, 16
        %v929 = vor.u32 %v926, %v927
        %v930 = vrot.slane %v926, 4
        %v932 = vshrl.u32 %v740, 16
        %v934 = vrot.slane %v932, 7
        %v935 = vshll.u32 %v740, 16
        %v937 = vor.u32 %v934, %v935
        %v938 = vsel %vm752, %v930, %v937
        %v939 = vrot.slane %v934, 4
        %v941 = vshrl.u32 %v741, 16
        %v943 = vrot.slane %v941, 7
        %v944 = vshll.u32 %v741, 16
        %v946 = vor.u32 %v943, %v944
        %v947 = vrot.slane %v943, 4
        %v949 = vshrl.u32 %v742, 16
        %v951 = vrot.slane %v949, 7
        %v952 = vshll.u32 %v742, 16
        %v954 = vor.u32 %v951, %v952
        %v955 = vsel %vm752, %v947, %v954
        %v956 = vrot.slane %v951, 4
        %v958 = vshrl.u32 %v743, 16
        %v960 = vrot.slane %v958, 7
        %v961 = vshll.u32 %v743, 16
        %v963 = vor.u32 %v960, %v961
        %v964 = vrot.slane %v960, 4
        %v966 = vshrl.u32 %v744, 16
        %v968 = vrot.slane %v966, 7
        %v969 = vshll.u32 %v744, 16
        %v971 = vor.u32 %v968, %v969
        %v972 = vsel %vm752, %v964, %v971
        %v973 = vrot.slane %v968, 4
        %v975 = vshrl.u32 %v745, 16
        %v977 = vrot.slane %v975, 7
        %v978 = vshll.u32 %v745, 16
        %v980 = vor.u32 %v977, %v978
        %v981 = vrot.slane %v977, 4
        %v983 = vshrl.u32 %v746, 16
        %v985 = vrot.slane %v983, 7
        %v986 = vshll.u32 %v746, 16
        %v988 = vor.u32 %v985, %v986
        %v989 = vsel %vm752, %v981, %v988
        %v990 = vrot.slane %v985, 4
        %v992 = vshrl.u32 %v747, 16
        %v994 = vrot.slane %v992, 7
        %v995 = vshll.u32 %v747, 16
        %v997 = vor.u32 %v994, %v995
        %v998 = vrot.slane %v994, 4
        %v1000 = vshrl.u32 %v748, 16
        %v1002 = vrot.slane %v1000, 7
        %v1003 = vshll.u32 %v748, 16
        %v1005 = vor.u32 %v1002, %v1003
        %v1006 = vsel %vm752, %v998, %v1005
        %v1007 = vrot.slane %v1002, 4
        %v1009 = vshrl.u32 %v749, 16
        %v1011 = vrot.slane %v1009, 7
        %v1012 = vshll.u32 %v749, 16
        %v1014 = vor.u32 %v1011, %v1012
        %v1015 = vrot.slane %v1011, 4
        %v1017 = vshrl.u32 %v750, 16
        %v1019 = vrot.slane %v1017, 7
        %v1020 = vshll.u32 %v750, 16
        %v1022 = vor.u32 %v1019, %v1020
        %v1023 = vsel %vm752, %v1015, %v1022
        %v1024 = vrot.slane %v1019, 4
        %vm1073 = vcmask 1043456
        %vm1074 = vmand %vm1073, %vm455
        %v1075 = vld [vmem:[%s403] sm:$0xf]
        %v1076 = vsel %vm1074, %v759, %v1075
        %1077 = vst [vmem:[%s403] sm:$0xf] %v1076
        %1078 = vst [vmem:[%s403 + $0x4] sm:$0xf] %v768
        %v1079 = vld [vmem:[%s403 + $0x8] sm:$0x1]
        %v1080 = vsel %vm406, %v769, %v1079
        %1081 = vst [vmem:[%s403 + $0x8] sm:$0x1] %v1080
        %v1082 = vld [vmem:[%s403 + $0xc] sm:$0xf]
        %v1083 = vsel %vm1074, %v776, %v1082
        %1084 = vst [vmem:[%s403 + $0xc] sm:$0xf] %v1083
        %1085 = vst [vmem:[%s403 + $0x10] sm:$0xf] %v785
        %v1086 = vld [vmem:[%s403 + $0x14] sm:$0x1]
        %v1087 = vsel %vm406, %v786, %v1086
        %1088 = vst [vmem:[%s403 + $0x14] sm:$0x1] %v1087
        %v1089 = vld [vmem:[%s403 + $0x18] sm:$0xf]
        %v1090 = vsel %vm1074, %v793, %v1089
        %1091 = vst [vmem:[%s403 + $0x18] sm:$0xf] %v1090
        %1092 = vst [vmem:[%s403 + $0x1c] sm:$0xf] %v802
        %v1093 = vld [vmem:[%s403 + $0x20] sm:$0x1]
        %v1094 = vsel %vm406, %v803, %v1093
        %1095 = vst [vmem:[%s403 + $0x20] sm:$0x1] %v1094
        %v1096 = vld [vmem:[%s403 + $0x24] sm:$0xf]
        %v1097 = vsel %vm1074, %v810, %v1096
        %1098 = vst [vmem:[%s403 + $0x24] sm:$0xf] %v1097
        %1099 = vst [vmem:[%s403 + $0x28] sm:$0xf] %v819
        %v1100 = vld [vmem:[%s403 + $0x2c] sm:$0x1]
        %v1101 = vsel %vm406, %v820, %v1100
        %1102 = vst [vmem:[%s403 + $0x2c] sm:$0x1] %v1101
        %v1103 = vld [vmem:[%s403 + $0x30] sm:$0xf]
        %v1104 = vsel %vm1074, %v827, %v1103
        %1105 = vst [vmem:[%s403 + $0x30] sm:$0xf] %v1104
        %1106 = vst [vmem:[%s403 + $0x34] sm:$0xf] %v836
        %v1107 = vld [vmem:[%s403 + $0x38] sm:$0x1]
        %v1108 = vsel %vm406, %v837, %v1107
        %1109 = vst [vmem:[%s403 + $0x38] sm:$0x1] %v1108
        %v1110 = vld [vmem:[%s403 + $0x3c] sm:$0xf]
        %v1111 = vsel %vm1074, %v844, %v1110
        %1112 = vst [vmem:[%s403 + $0x3c] sm:$0xf] %v1111
        %1113 = vst [vmem:[%s403 + $0x40] sm:$0xf] %v853
        %v1114 = vld [vmem:[%s403 + $0x44] sm:$0x1]
        %v1115 = vsel %vm406, %v854, %v1114
        %1116 = vst [vmem:[%s403 + $0x44] sm:$0x1] %v1115
        %v1117 = vld [vmem:[%s403 + $0x48] sm:$0xf]
        %v1118 = vsel %vm1074, %v861, %v1117
        %1119 = vst [vmem:[%s403 + $0x48] sm:$0xf] %v1118
        %1120 = vst [vmem:[%s403 + $0x4c] sm:$0xf] %v870
        %v1121 = vld [vmem:[%s403 + $0x50] sm:$0x1]
        %v1122 = vsel %vm406, %v871, %v1121
        %1123 = vst [vmem:[%s403 + $0x50] sm:$0x1] %v1122
        %v1124 = vld [vmem:[%s403 + $0x54] sm:$0xf]
        %v1125 = vsel %vm1074, %v878, %v1124
        %1126 = vst [vmem:[%s403 + $0x54] sm:$0xf] %v1125
        %1127 = vst [vmem:[%s403 + $0x58] sm:$0xf] %v887
        %v1128 = vld [vmem:[%s403 + $0x5c] sm:$0x1]
        %v1129 = vsel %vm406, %v888, %v1128
        %1130 = vst [vmem:[%s403 + $0x5c] sm:$0x1] %v1129
        %v1131 = vld [vmem:[%s403 + $0x60] sm:$0xf]
        %v1132 = vsel %vm1074, %v895, %v1131
        %1133 = vst [vmem:[%s403 + $0x60] sm:$0xf] %v1132
        %1134 = vst [vmem:[%s403 + $0x64] sm:$0xf] %v904
        %v1135 = vld [vmem:[%s403 + $0x68] sm:$0x1]
        %v1136 = vsel %vm406, %v905, %v1135
        %1137 = vst [vmem:[%s403 + $0x68] sm:$0x1] %v1136
        %v1138 = vld [vmem:[%s403 + $0x6c] sm:$0xf]
        %v1139 = vsel %vm1074, %v912, %v1138
        %1140 = vst [vmem:[%s403 + $0x6c] sm:$0xf] %v1139
        %1141 = vst [vmem:[%s403 + $0x70] sm:$0xf] %v921
        %v1142 = vld [vmem:[%s403 + $0x74] sm:$0x1]
        %v1143 = vsel %vm406, %v922, %v1142
        %1144 = vst [vmem:[%s403 + $0x74] sm:$0x1] %v1143
        %v1145 = vld [vmem:[%s403 + $0x78] sm:$0xf]
        %v1146 = vsel %vm1074, %v929, %v1145
        %1147 = vst [vmem:[%s403 + $0x78] sm:$0xf] %v1146
        %1148 = vst [vmem:[%s403 + $0x7c] sm:$0xf] %v938
        %v1149 = vld [vmem:[%s403 + $0x80] sm:$0x1]
        %v1150 = vsel %vm406, %v939, %v1149
        %1151 = vst [vmem:[%s403 + $0x80] sm:$0x1] %v1150
        %v1152 = vld [vmem:[%s403 + $0x84] sm:$0xf]
        %v1153 = vsel %vm1074, %v946, %v1152
        %1154 = vst [vmem:[%s403 + $0x84] sm:$0xf] %v1153
        %1155 = vst [vmem:[%s403 + $0x88] sm:$0xf] %v955
        %v1156 = vld [vmem:[%s403 + $0x8c] sm:$0x1]
        %v1157 = vsel %vm406, %v956, %v1156
        %1158 = vst [vmem:[%s403 + $0x8c] sm:$0x1] %v1157
        %v1159 = vld [vmem:[%s403 + $0x90] sm:$0xf]
        %v1160 = vsel %vm1074, %v963, %v1159
        %1161 = vst [vmem:[%s403 + $0x90] sm:$0xf] %v1160
        %1162 = vst [vmem:[%s403 + $0x94] sm:$0xf] %v972
        %v1163 = vld [vmem:[%s403 + $0x98] sm:$0x1]
        %v1164 = vsel %vm406, %v973, %v1163
        %1165 = vst [vmem:[%s403 + $0x98] sm:$0x1] %v1164
        %v1166 = vld [vmem:[%s403 + $0x9c] sm:$0xf]
        %v1167 = vsel %vm1074, %v980, %v1166
        %1168 = vst [vmem:[%s403 + $0x9c] sm:$0xf] %v1167
        %1169 = vst [vmem:[%s403 + $0xa0] sm:$0xf] %v989
        %v1170 = vld [vmem:[%s403 + $0xa4] sm:$0x1]
        %v1171 = vsel %vm406, %v990, %v1170
        %1172 = vst [vmem:[%s403 + $0xa4] sm:$0x1] %v1171
        %v1173 = vld [vmem:[%s403 + $0xa8] sm:$0xf]
        %v1174 = vsel %vm1074, %v997, %v1173
        %1175 = vst [vmem:[%s403 + $0xa8] sm:$0xf] %v1174
        %1176 = vst [vmem:[%s403 + $0xac] sm:$0xf] %v1006
        %v1177 = vld [vmem:[%s403 + $0xb0] sm:$0x1]
        %v1178 = vsel %vm406, %v1007, %v1177
        %1179 = vst [vmem:[%s403 + $0xb0] sm:$0x1] %v1178
        %v1180 = vld [vmem:[%s403 + $0xb4] sm:$0xf]
        %v1181 = vsel %vm1074, %v1014, %v1180
        %1182 = vst [vmem:[%s403 + $0xb4] sm:$0xf] %v1181
        %1183 = vst [vmem:[%s403 + $0xb8] sm:$0xf] %v1023
        %v1184 = vld [vmem:[%s403 + $0xbc] sm:$0x1]
        %v1185 = vsel %vm406, %v1024, %v1184
        %1186 = vst [vmem:[%s403 + $0xbc] sm:$0x1] %v1185
        %v1187 = vld [vmem:[#allocation2] sm:$0xf]
        %v1188 = vld [vmem:[#allocation2 + $0x4] sm:$0xf]
        %v1189 = vld [vmem:[#allocation2 + $0xc] sm:$0xf]
        %v1190 = vld [vmem:[#allocation2 + $0x10] sm:$0xf]
        %v1191 = vld [vmem:[#allocation2 + $0x18] sm:$0xf]
        %v1192 = vld [vmem:[#allocation2 + $0x1c] sm:$0xf]
        %v1193 = vld [vmem:[#allocation2 + $0x24] sm:$0xf]
        %v1194 = vld [vmem:[#allocation2 + $0x28] sm:$0xf]
        %v1195 = vld [vmem:[#allocation2 + $0x30] sm:$0xf]
        %v1196 = vld [vmem:[#allocation2 + $0x34] sm:$0xf]
        %v1197 = vld [vmem:[#allocation2 + $0x3c] sm:$0xf]
        %v1198 = vld [vmem:[#allocation2 + $0x40] sm:$0xf]
        %v1199 = vld [vmem:[#allocation2 + $0x48] sm:$0xf]
        %v1200 = vld [vmem:[#allocation2 + $0x4c] sm:$0xf]
        %v1201 = vld [vmem:[#allocation2 + $0x54] sm:$0xf]
        %v1202 = vld [vmem:[#allocation2 + $0x58] sm:$0xf]
        %v1203 = vld [vmem:[#allocation2 + $0x60] sm:$0xf]
        %v1204 = vld [vmem:[#allocation2 + $0x64] sm:$0xf]
        %v1205 = vld [vmem:[#allocation2 + $0x6c] sm:$0xf]
        %v1206 = vld [vmem:[#allocation2 + $0x70] sm:$0xf]
        %v1207 = vld [vmem:[#allocation2 + $0x78] sm:$0xf]
        %v1208 = vld [vmem:[#allocation2 + $0x7c] sm:$0xf]
        %v1209 = vld [vmem:[#allocation2 + $0x84] sm:$0xf]
        %v1210 = vld [vmem:[#allocation2 + $0x88] sm:$0xf]
        %v1211 = vld [vmem:[#allocation2 + $0x90] sm:$0xf]
        %v1212 = vld [vmem:[#allocation2 + $0x94] sm:$0xf]
        %v1213 = vld [vmem:[#allocation2 + $0x9c] sm:$0xf]
        %v1214 = vld [vmem:[#allocation2 + $0xa0] sm:$0xf]
        %v1215 = vld [vmem:[#allocation2 + $0xa8] sm:$0xf]
        %v1216 = vld [vmem:[#allocation2 + $0xac] sm:$0xf]
        %v1217 = vld [vmem:[#allocation2 + $0xb4] sm:$0xf]
        %v1218 = vld [vmem:[#allocation2 + $0xb8] sm:$0xf]
        %v1219 = vld [vmem:[#allocation2 + $0x8] sm:$0x1]
        %v1220 = vld [vmem:[#allocation2 + $0x14] sm:$0x1]
        %v1221 = vld [vmem:[#allocation2 + $0x20] sm:$0x1]
        %v1222 = vld [vmem:[#allocation2 + $0x2c] sm:$0x1]
        %v1223 = vld [vmem:[#allocation2 + $0x38] sm:$0x1]
        %v1224 = vld [vmem:[#allocation2 + $0x44] sm:$0x1]
        %v1225 = vld [vmem:[#allocation2 + $0x50] sm:$0x1]
        %v1226 = vld [vmem:[#allocation2 + $0x5c] sm:$0x1]
        %v1227 = vld [vmem:[#allocation2 + $0x68] sm:$0x1]
        %v1228 = vld [vmem:[#allocation2 + $0x74] sm:$0x1]
        %v1229 = vld [vmem:[#allocation2 + $0x80] sm:$0x1]
        %v1230 = vld [vmem:[#allocation2 + $0x8c] sm:$0x1]
        %v1231 = vld [vmem:[#allocation2 + $0x98] sm:$0x1]
        %v1232 = vld [vmem:[#allocation2 + $0xa4] sm:$0x1]
        %v1233 = vld [vmem:[#allocation2 + $0xb0] sm:$0x1]
        %v1234 = vld [vmem:[#allocation2 + $0xbc] sm:$0x1]
        %vm1235 = vsmask.f32 3328
        %vm1236 = vsmask.f32 7440
        %vm1237 = vmor %vm1235, %vm1236
        %v1239 = vshrl.u32 %v1187, 16
        %v1241 = vrot.slane %v1239, 4
        %v1242 = vshll.u32 %v1187, 16
        %v1244 = vrot.slane %v1242, 5
        %v1245 = vor.u32 %v1241, %v1244
        %v1246 = vrot.slane %v1245, 4
        %v1248 = vshll.u32 %v1188, 16
        %v1250 = vrot.slane %v1248, 5
        %v1251 = vsel %vm1237, %v1246, %v1250
        %v1252 = vshrl.u32 %v1188, 16
        %v1254 = vrot.slane %v1252, 4
        %v1255 = vor.u32 %v1254, %v1250
        %v1256 = vrot.slane %v1255, 4
        %v1258 = vshll.u32 %v1219, 16
        %v1260 = vrot.slane %v1258, 5
        %v1261 = vsel %vm1237, %v1256, %v1260
        %v1263 = vshrl.u32 %v1189, 16
        %v1265 = vrot.slane %v1263, 4
        %v1266 = vshll.u32 %v1189, 16
        %v1268 = vrot.slane %v1266, 5
        %v1269 = vor.u32 %v1265, %v1268
        %v1270 = vrot.slane %v1269, 4
        %v1272 = vshll.u32 %v1190, 16
        %v1274 = vrot.slane %v1272, 5
        %v1275 = vsel %vm1237, %v1270, %v1274
        %v1276 = vshrl.u32 %v1190, 16
        %v1278 = vrot.slane %v1276, 4
        %v1279 = vor.u32 %v1278, %v1274
        %v1280 = vrot.slane %v1279, 4
        %v1282 = vshll.u32 %v1220, 16
        %v1284 = vrot.slane %v1282, 5
        %v1285 = vsel %vm1237, %v1280, %v1284
        %v1287 = vshrl.u32 %v1191, 16
        %v1289 = vrot.slane %v1287, 4
        %v1290 = vshll.u32 %v1191, 16
        %v1292 = vrot.slane %v1290, 5
        %v1293 = vor.u32 %v1289, %v1292
        %v1294 = vrot.slane %v1293, 4
        %v1296 = vshll.u32 %v1192, 16
        %v1298 = vrot.slane %v1296, 5
        %v1299 = vsel %vm1237, %v1294, %v1298
        %v1300 = vshrl.u32 %v1192, 16
        %v1302 = vrot.slane %v1300, 4
        %v1303 = vor.u32 %v1302, %v1298
        %v1304 = vrot.slane %v1303, 4
        %v1306 = vshll.u32 %v1221, 16
        %v1308 = vrot.slane %v1306, 5
        %v1309 = vsel %vm1237, %v1304, %v1308
        %v1311 = vshrl.u32 %v1193, 16
        %v1313 = vrot.slane %v1311, 4
        %v1314 = vshll.u32 %v1193, 16
        %v1316 = vrot.slane %v1314, 5
        %v1317 = vor.u32 %v1313, %v1316
        %v1318 = vrot.slane %v1317, 4
        %v1320 = vshll.u32 %v1194, 16
        %v1322 = vrot.slane %v1320, 5
        %v1323 = vsel %vm1237, %v1318, %v1322
        %v1324 = vshrl.u32 %v1194, 16
        %v1326 = vrot.slane %v1324, 4
        %v1327 = vor.u32 %v1326, %v1322
        %v1328 = vrot.slane %v1327, 4
        %v1330 = vshll.u32 %v1222, 16
        %v1332 = vrot.slane %v1330, 5
        %v1333 = vsel %vm1237, %v1328, %v1332
        %v1335 = vshrl.u32 %v1195, 16
        %v1337 = vrot.slane %v1335, 4
        %v1338 = vshll.u32 %v1195, 16
        %v1340 = vrot.slane %v1338, 5
        %v1341 = vor.u32 %v1337, %v1340
        %v1342 = vrot.slane %v1341, 4
        %v1344 = vshll.u32 %v1196, 16
        %v1346 = vrot.slane %v1344, 5
        %v1347 = vsel %vm1237, %v1342, %v1346
        %v1348 = vshrl.u32 %v1196, 16
        %v1350 = vrot.slane %v1348, 4
        %v1351 = vor.u32 %v1350, %v1346
        %v1352 = vrot.slane %v1351, 4
        %v1354 = vshll.u32 %v1223, 16
        %v1356 = vrot.slane %v1354, 5
        %v1357 = vsel %vm1237, %v1352, %v1356
        %v1359 = vshrl.u32 %v1197, 16
        %v1361 = vrot.slane %v1359, 4
        %v1362 = vshll.u32 %v1197, 16
        %v1364 = vrot.slane %v1362, 5
        %v1365 = vor.u32 %v1361, %v1364
        %v1366 = vrot.slane %v1365, 4
        %v1368 = vshll.u32 %v1198, 16
        %v1370 = vrot.slane %v1368, 5
        %v1371 = vsel %vm1237, %v1366, %v1370
        %v1372 = vshrl.u32 %v1198, 16
        %v1374 = vrot.slane %v1372, 4
        %v1375 = vor.u32 %v1374, %v1370
        %v1376 = vrot.slane %v1375, 4
        %v1378 = vshll.u32 %v1224, 16
        %v1380 = vrot.slane %v1378, 5
        %v1381 = vsel %vm1237, %v1376, %v1380
        %v1383 = vshrl.u32 %v1199, 16
        %v1385 = vrot.slane %v1383, 4
        %v1386 = vshll.u32 %v1199, 16
        %v1388 = vrot.slane %v1386, 5
        %v1389 = vor.u32 %v1385, %v1388
        %v1390 = vrot.slane %v1389, 4
        %v1392 = vshll.u32 %v1200, 16
        %v1394 = vrot.slane %v1392, 5
        %v1395 = vsel %vm1237, %v1390, %v1394
        %v1396 = vshrl.u32 %v1200, 16
        %v1398 = vrot.slane %v1396, 4
        %v1399 = vor.u32 %v1398, %v1394
        %v1400 = vrot.slane %v1399, 4
        %v1402 = vshll.u32 %v1225, 16
        %v1404 = vrot.slane %v1402, 5
        %v1405 = vsel %vm1237, %v1400, %v1404
        %v1407 = vshrl.u32 %v1201, 16
        %v1409 = vrot.slane %v1407, 4
        %v1410 = vshll.u32 %v1201, 16
        %v1412 = vrot.slane %v1410, 5
        %v1413 = vor.u32 %v1409, %v1412
        %v1414 = vrot.slane %v1413, 4
        %v1416 = vshll.u32 %v1202, 16
        %v1418 = vrot.slane %v1416, 5
        %v1419 = vsel %vm1237, %v1414, %v1418
        %v1420 = vshrl.u32 %v1202, 16
        %v1422 = vrot.slane %v1420, 4
        %v1423 = vor.u32 %v1422, %v1418
        %v1424 = vrot.slane %v1423, 4
        %v1426 = vshll.u32 %v1226, 16
        %v1428 = vrot.slane %v1426, 5
        %v1429 = vsel %vm1237, %v1424, %v1428
        %v1431 = vshrl.u32 %v1203, 16
        %v1433 = vrot.slane %v1431, 4
        %v1434 = vshll.u32 %v1203, 16
        %v1436 = vrot.slane %v1434, 5
        %v1437 = vor.u32 %v1433, %v1436
        %v1438 = vrot.slane %v1437, 4
        %v1440 = vshll.u32 %v1204, 16
        %v1442 = vrot.slane %v1440, 5
        %v1443 = vsel %vm1237, %v1438, %v1442
        %v1444 = vshrl.u32 %v1204, 16
        %v1446 = vrot.slane %v1444, 4
        %v1447 = vor.u32 %v1446, %v1442
        %v1448 = vrot.slane %v1447, 4
        %v1450 = vshll.u32 %v1227, 16
        %v1452 = vrot.slane %v1450, 5
        %v1453 = vsel %vm1237, %v1448, %v1452
        %v1455 = vshrl.u32 %v1205, 16
        %v1457 = vrot.slane %v1455, 4
        %v1458 = vshll.u32 %v1205, 16
        %v1460 = vrot.slane %v1458, 5
        %v1461 = vor.u32 %v1457, %v1460
        %v1462 = vrot.slane %v1461, 4
        %v1464 = vshll.u32 %v1206, 16
        %v1466 = vrot.slane %v1464, 5
        %v1467 = vsel %vm1237, %v1462, %v1466
        %v1468 = vshrl.u32 %v1206, 16
        %v1470 = vrot.slane %v1468, 4
        %v1471 = vor.u32 %v1470, %v1466
        %v1472 = vrot.slane %v1471, 4
        %v1474 = vshll.u32 %v1228, 16
        %v1476 = vrot.slane %v1474, 5
        %v1477 = vsel %vm1237, %v1472, %v1476
        %v1479 = vshrl.u32 %v1207, 16
        %v1481 = vrot.slane %v1479, 4
        %v1482 = vshll.u32 %v1207, 16
        %v1484 = vrot.slane %v1482, 5
        %v1485 = vor.u32 %v1481, %v1484
        %v1486 = vrot.slane %v1485, 4
        %v1488 = vshll.u32 %v1208, 16
        %v1490 = vrot.slane %v1488, 5
        %v1491 = vsel %vm1237, %v1486, %v1490
        %v1492 = vshrl.u32 %v1208, 16
        %v1494 = vrot.slane %v1492, 4
        %v1495 = vor.u32 %v1494, %v1490
        %v1496 = vrot.slane %v1495, 4
        %v1498 = vshll.u32 %v1229, 16
        %v1500 = vrot.slane %v1498, 5
        %v1501 = vsel %vm1237, %v1496, %v1500
        %v1503 = vshrl.u32 %v1209, 16
        %v1505 = vrot.slane %v1503, 4
        %v1506 = vshll.u32 %v1209, 16
        %v1508 = vrot.slane %v1506, 5
        %v1509 = vor.u32 %v1505, %v1508
        %v1510 = vrot.slane %v1509, 4
        %v1512 = vshll.u32 %v1210, 16
        %v1514 = vrot.slane %v1512, 5
        %v1515 = vsel %vm1237, %v1510, %v1514
        %v1516 = vshrl.u32 %v1210, 16
        %v1518 = vrot.slane %v1516, 4
        %v1519 = vor.u32 %v1518, %v1514
        %v1520 = vrot.slane %v1519, 4
        %v1522 = vshll.u32 %v1230, 16
        %v1524 = vrot.slane %v1522, 5
        %v1525 = vsel %vm1237, %v1520, %v1524
        %v1527 = vshrl.u32 %v1211, 16
        %v1529 = vrot.slane %v1527, 4
        %v1530 = vshll.u32 %v1211, 16
        %v1532 = vrot.slane %v1530, 5
        %v1533 = vor.u32 %v1529, %v1532
        %v1534 = vrot.slane %v1533, 4
        %v1536 = vshll.u32 %v1212, 16
        %v1538 = vrot.slane %v1536, 5
        %v1539 = vsel %vm1237, %v1534, %v1538
        %v1540 = vshrl.u32 %v1212, 16
        %v1542 = vrot.slane %v1540, 4
        %v1543 = vor.u32 %v1542, %v1538
        %v1544 = vrot.slane %v1543, 4
        %v1546 = vshll.u32 %v1231, 16
        %v1548 = vrot.slane %v1546, 5
        %v1549 = vsel %vm1237, %v1544, %v1548
        %v1551 = vshrl.u32 %v1213, 16
        %v1553 = vrot.slane %v1551, 4
        %v1554 = vshll.u32 %v1213, 16
        %v1556 = vrot.slane %v1554, 5
        %v1557 = vor.u32 %v1553, %v1556
        %v1558 = vrot.slane %v1557, 4
        %v1560 = vshll.u32 %v1214, 16
        %v1562 = vrot.slane %v1560, 5
        %v1563 = vsel %vm1237, %v1558, %v1562
        %v1564 = vshrl.u32 %v1214, 16
        %v1566 = vrot.slane %v1564, 4
        %v1567 = vor.u32 %v1566, %v1562
        %v1568 = vrot.slane %v1567, 4
        %v1570 = vshll.u32 %v1232, 16
        %v1572 = vrot.slane %v1570, 5
        %v1573 = vsel %vm1237, %v1568, %v1572
        %v1575 = vshrl.u32 %v1215, 16
        %v1577 = vrot.slane %v1575, 4
        %v1578 = vshll.u32 %v1215, 16
        %v1580 = vrot.slane %v1578, 5
        %v1581 = vor.u32 %v1577, %v1580
        %v1582 = vrot.slane %v1581, 4
        %v1584 = vshll.u32 %v1216, 16
        %v1586 = vrot.slane %v1584, 5
        %v1587 = vsel %vm1237, %v1582, %v1586
        %v1588 = vshrl.u32 %v1216, 16
        %v1590 = vrot.slane %v1588, 4
        %v1591 = vor.u32 %v1590, %v1586
        %v1592 = vrot.slane %v1591, 4
        %v1594 = vshll.u32 %v1233, 16
        %v1596 = vrot.slane %v1594, 5
        %v1597 = vsel %vm1237, %v1592, %v1596
        %v1599 = vshrl.u32 %v1217, 16
        %v1601 = vrot.slane %v1599, 4
        %v1602 = vshll.u32 %v1217, 16
        %v1604 = vrot.slane %v1602, 5
        %v1605 = vor.u32 %v1601, %v1604
        %v1606 = vrot.slane %v1605, 4
        %v1608 = vshll.u32 %v1218, 16
        %v1610 = vrot.slane %v1608, 5
        %v1611 = vsel %vm1237, %v1606, %v1610
        %v1612 = vshrl.u32 %v1218, 16
        %v1614 = vrot.slane %v1612, 4
        %v1615 = vor.u32 %v1614, %v1610
        %v1616 = vrot.slane %v1615, 4
        %v1618 = vshll.u32 %v1234, 16
        %v1620 = vrot.slane %v1618, 5
        %v1621 = vsel %vm1237, %v1616, %v1620
        %v1654 = vunpack.c.l.b16 %v1187
        %v1655 = vunpack.c.l.b16 %v1188
        %v1656 = vunpack.c.l.b16 %v1189
        %v1657 = vunpack.c.l.b16 %v1190
        %v1658 = vunpack.c.l.b16 %v1191
        %v1659 = vunpack.c.l.b16 %v1192
        %v1660 = vunpack.c.l.b16 %v1193
        %v1661 = vunpack.c.l.b16 %v1194
        %v1662 = vunpack.c.l.b16 %v1195
        %v1663 = vunpack.c.l.b16 %v1196
        %v1664 = vunpack.c.l.b16 %v1197
        %v1665 = vunpack.c.l.b16 %v1198
        %v1666 = vunpack.c.l.b16 %v1199
        %v1667 = vunpack.c.l.b16 %v1200
        %v1668 = vunpack.c.l.b16 %v1201
        %v1669 = vunpack.c.l.b16 %v1202
        %v1670 = vunpack.c.l.b16 %v1203
        %v1671 = vunpack.c.l.b16 %v1204
        %v1672 = vunpack.c.l.b16 %v1205
        %v1673 = vunpack.c.l.b16 %v1206
        %v1674 = vunpack.c.l.b16 %v1207
        %v1675 = vunpack.c.l.b16 %v1208
        %v1676 = vunpack.c.l.b16 %v1209
        %v1677 = vunpack.c.l.b16 %v1210
        %v1678 = vunpack.c.l.b16 %v1211
        %v1679 = vunpack.c.l.b16 %v1212
        %v1680 = vunpack.c.l.b16 %v1213
        %v1681 = vunpack.c.l.b16 %v1214
        %v1682 = vunpack.c.l.b16 %v1215
        %v1683 = vunpack.c.l.b16 %v1216
        %v1684 = vunpack.c.l.b16 %v1217
        %v1685 = vunpack.c.l.b16 %v1218
        %v1686 = vpack.c.b16 %v1655, %v1654
        %v1687 = vpack.c.b16 %v1657, %v1656
        %v1688 = vpack.c.b16 %v1659, %v1658
        %v1689 = vpack.c.b16 %v1661, %v1660
        %v1690 = vpack.c.b16 %v1663, %v1662
        %v1691 = vpack.c.b16 %v1665, %v1664
        %v1692 = vpack.c.b16 %v1667, %v1666
        %v1693 = vpack.c.b16 %v1669, %v1668
        %v1694 = vpack.c.b16 %v1671, %v1670
        %v1695 = vpack.c.b16 %v1673, %v1672
        %v1696 = vpack.c.b16 %v1675, %v1674
        %v1697 = vpack.c.b16 %v1677, %v1676
        %v1698 = vpack.c.b16 %v1679, %v1678
        %v1699 = vpack.c.b16 %v1681, %v1680
        %v1700 = vpack.c.b16 %v1683, %v1682
        %v1701 = vpack.c.b16 %v1685, %v1684
        %v1718 = vunpack.c.l.b16 %v1251
        %v1719 = vunpack.c.l.b16 %v1261
        %v1720 = vunpack.c.l.b16 %v1275
        %v1721 = vunpack.c.l.b16 %v1285
        %v1722 = vunpack.c.l.b16 %v1299
        %v1723 = vunpack.c.l.b16 %v1309
        %v1724 = vunpack.c.l.b16 %v1323
        %v1725 = vunpack.c.l.b16 %v1333
        %v1726 = vunpack.c.l.b16 %v1347
        %v1727 = vunpack.c.l.b16 %v1357
        %v1728 = vunpack.c.l.b16 %v1371
        %v1729 = vunpack.c.l.b16 %v1381
        %v1730 = vunpack.c.l.b16 %v1395
        %v1731 = vunpack.c.l.b16 %v1405
        %v1732 = vunpack.c.l.b16 %v1419
        %v1733 = vunpack.c.l.b16 %v1429
        %v1734 = vunpack.c.l.b16 %v1443
        %v1735 = vunpack.c.l.b16 %v1453
        %v1736 = vunpack.c.l.b16 %v1467
        %v1737 = vunpack.c.l.b16 %v1477
        %v1738 = vunpack.c.l.b16 %v1491
        %v1739 = vunpack.c.l.b16 %v1501
        %v1740 = vunpack.c.l.b16 %v1515
        %v1741 = vunpack.c.l.b16 %v1525
        %v1742 = vunpack.c.l.b16 %v1539
        %v1743 = vunpack.c.l.b16 %v1549
        %v1744 = vunpack.c.l.b16 %v1563
        %v1745 = vunpack.c.l.b16 %v1573
        %v1746 = vunpack.c.l.b16 %v1587
        %v1747 = vunpack.c.l.b16 %v1597
        %v1748 = vunpack.c.l.b16 %v1611
        %v1749 = vunpack.c.l.b16 %v1621
        %v1750 = vpack.c.b16 %v1719, %v1718
        %v1751 = vpack.c.b16 %v1721, %v1720
        %v1752 = vpack.c.b16 %v1723, %v1722
        %v1753 = vpack.c.b16 %v1725, %v1724
        %v1754 = vpack.c.b16 %v1727, %v1726
        %v1755 = vpack.c.b16 %v1729, %v1728
        %v1756 = vpack.c.b16 %v1731, %v1730
        %v1757 = vpack.c.b16 %v1733, %v1732
        %v1758 = vpack.c.b16 %v1735, %v1734
        %v1759 = vpack.c.b16 %v1737, %v1736
        %v1760 = vpack.c.b16 %v1739, %v1738
        %v1761 = vpack.c.b16 %v1741, %v1740
        %v1762 = vpack.c.b16 %v1743, %v1742
        %v1763 = vpack.c.b16 %v1745, %v1744
        %v1764 = vpack.c.b16 %v1747, %v1746
        %v1765 = vpack.c.b16 %v1749, %v1748
        %v1782 = vld [vmem:[#allocation7] sm:$0xf]
        %v1783 = vld [vmem:[#allocation7 + $0x4] sm:$0xf]
        %v1784 = vld [vmem:[#allocation7 + $0x8] sm:$0xf]
        %v1785 = vld [vmem:[#allocation7 + $0xc] sm:$0xf]
        %v1786 = vld [vmem:[#allocation7 + $0x10] sm:$0xf]
        %v1787 = vld [vmem:[#allocation7 + $0x14] sm:$0xf]
        %v1788 = vld [vmem:[#allocation7 + $0x18] sm:$0xf]
        %v1789 = vld [vmem:[#allocation7 + $0x1c] sm:$0xf]
        %v1790 = vld [vmem:[#allocation7 + $0x20] sm:$0xf]
        %v1791 = vld [vmem:[#allocation7 + $0x24] sm:$0xf]
        %v1792 = vld [vmem:[#allocation7 + $0x28] sm:$0xf]
        %v1793 = vld [vmem:[#allocation7 + $0x2c] sm:$0xf]
        %v1794 = vld [vmem:[#allocation7 + $0x30] sm:$0xf]
        %v1795 = vld [vmem:[#allocation7 + $0x34] sm:$0xf]
        %v1796 = vld [vmem:[#allocation7 + $0x38] sm:$0xf]
        %v1797 = vld [vmem:[#allocation7 + $0x3c] sm:$0xf]
        %v1798 = vld [vmem:[#allocation7 + $0x40] sm:$0xf]
        %v1799 = vld [vmem:[#allocation7 + $0x44] sm:$0xf]
        %v1800 = vld [vmem:[#allocation7 + $0x48] sm:$0xf]
        %v1801 = vld [vmem:[#allocation7 + $0x4c] sm:$0xf]
        %v1802 = vld [vmem:[#allocation7 + $0x50] sm:$0xf]
        %v1803 = vld [vmem:[#allocation7 + $0x54] sm:$0xf]
        %v1804 = vld [vmem:[#allocation7 + $0x58] sm:$0xf]
        %v1805 = vld [vmem:[#allocation7 + $0x5c] sm:$0xf]
        %v1806 = vld [vmem:[#allocation7 + $0x60] sm:$0xf]
        %v1807 = vld [vmem:[#allocation7 + $0x64] sm:$0xf]
        %v1808 = vld [vmem:[#allocation7 + $0x68] sm:$0xf]
        %v1809 = vld [vmem:[#allocation7 + $0x6c] sm:$0xf]
        %v1810 = vld [vmem:[#allocation7 + $0x70] sm:$0xf]
        %v1811 = vld [vmem:[#allocation7 + $0x74] sm:$0xf]
        %v1812 = vld [vmem:[#allocation7 + $0x78] sm:$0xf]
        %v1813 = vld [vmem:[#allocation7 + $0x7c] sm:$0xf]
        %v1814 = vld [vmem:[#allocation2] sm:$0xe]
        %v1815 = vld [vmem:[#allocation2 + $0xc] sm:$0xe]
        %v1816 = vld [vmem:[#allocation2 + $0x18] sm:$0xe]
        %v1817 = vld [vmem:[#allocation2 + $0x24] sm:$0xe]
        %v1818 = vld [vmem:[#allocation2 + $0x30] sm:$0xe]
        %v1819 = vld [vmem:[#allocation2 + $0x3c] sm:$0xe]
        %v1820 = vld [vmem:[#allocation2 + $0x48] sm:$0xe]
        %v1821 = vld [vmem:[#allocation2 + $0x54] sm:$0xe]
        %v1822 = vld [vmem:[#allocation2 + $0x60] sm:$0xe]
        %v1823 = vld [vmem:[#allocation2 + $0x6c] sm:$0xe]
        %v1824 = vld [vmem:[#allocation2 + $0x78] sm:$0xe]
        %v1825 = vld [vmem:[#allocation2 + $0x84] sm:$0xe]
        %v1826 = vld [vmem:[#allocation2 + $0x90] sm:$0xe]
        %v1827 = vld [vmem:[#allocation2 + $0x9c] sm:$0xe]
        %v1828 = vld [vmem:[#allocation2 + $0xa8] sm:$0xe]
        %v1829 = vld [vmem:[#allocation2 + $0xb4] sm:$0xe]
        %vm1862 = vcmask 1042432
        %vm1863 = vcmask 1046532
        %vm1864 = vmor %vm1862, %vm1863
        %v1865 = vrot.slane %v1814, 5
        %v1866 = vrot.slane %v1865, 4
        %v1867 = vrot.slane %v1188, 5
        %v1868 = vsel %vm1864, %v1866, %v1867
        %v1869 = vrot.slane %v1867, 4
        %v1870 = vrot.slane %v1219, 5
        %v1871 = vsel %vm1864, %v1869, %v1870
        %v1872 = vrot.slane %v1815, 5
        %v1873 = vrot.slane %v1872, 4
        %v1874 = vrot.slane %v1190, 5
        %v1875 = vsel %vm1864, %v1873, %v1874
        %v1876 = vrot.slane %v1874, 4
        %v1877 = vrot.slane %v1220, 5
        %v1878 = vsel %vm1864, %v1876, %v1877
        %v1879 = vrot.slane %v1816, 5
        %v1880 = vrot.slane %v1879, 4
        %v1881 = vrot.slane %v1192, 5
        %v1882 = vsel %vm1864, %v1880, %v1881
        %v1883 = vrot.slane %v1881, 4
        %v1884 = vrot.slane %v1221, 5
        %v1885 = vsel %vm1864, %v1883, %v1884
        %v1886 = vrot.slane %v1817, 5
        %v1887 = vrot.slane %v1886, 4
        %v1888 = vrot.slane %v1194, 5
        %v1889 = vsel %vm1864, %v1887, %v1888
        %v1890 = vrot.slane %v1888, 4
        %v1891 = vrot.slane %v1222, 5
        %v1892 = vsel %vm1864, %v1890, %v1891
        %v1893 = vrot.slane %v1818, 5
        %v1894 = vrot.slane %v1893, 4
        %v1895 = vrot.slane %v1196, 5
        %v1896 = vsel %vm1864, %v1894, %v1895
        %v1897 = vrot.slane %v1895, 4
        %v1898 = vrot.slane %v1223, 5
        %v1899 = vsel %vm1864, %v1897, %v1898
        %v1900 = vrot.slane %v1819, 5
        %v1901 = vrot.slane %v1900, 4
        %v1902 = vrot.slane %v1198, 5
        %v1903 = vsel %vm1864, %v1901, %v1902
        %v1904 = vrot.slane %v1902, 4
        %v1905 = vrot.slane %v1224, 5
        %v1906 = vsel %vm1864, %v1904, %v1905
        %v1907 = vrot.slane %v1820, 5
        %v1908 = vrot.slane %v1907, 4
        %v1909 = vrot.slane %v1200, 5
        %v1910 = vsel %vm1864, %v1908, %v1909
        %v1911 = vrot.slane %v1909, 4
        %v1912 = vrot.slane %v1225, 5
        %v1913 = vsel %vm1864, %v1911, %v1912
        %v1914 = vrot.slane %v1821, 5
        %v1915 = vrot.slane %v1914, 4
        %v1916 = vrot.slane %v1202, 5
        %v1917 = vsel %vm1864, %v1915, %v1916
        %v1918 = vrot.slane %v1916, 4
        %v1919 = vrot.slane %v1226, 5
        %v1920 = vsel %vm1864, %v1918, %v1919
        %v1921 = vrot.slane %v1822, 5
        %v1922 = vrot.slane %v1921, 4
        %v1923 = vrot.slane %v1204, 5
        %v1924 = vsel %vm1864, %v1922, %v1923
        %v1925 = vrot.slane %v1923, 4
        %v1926 = vrot.slane %v1227, 5
        %v1927 = vsel %vm1864, %v1925, %v1926
        %v1928 = vrot.slane %v1823, 5
        %v1929 = vrot.slane %v1928, 4
        %v1930 = vrot.slane %v1206, 5
        %v1931 = vsel %vm1864, %v1929, %v1930
        %v1932 = vrot.slane %v1930, 4
        %v1933 = vrot.slane %v1228, 5
        %v1934 = vsel %vm1864, %v1932, %v1933
        %v1935 = vrot.slane %v1824, 5
        %v1936 = vrot.slane %v1935, 4
        %v1937 = vrot.slane %v1208, 5
        %v1938 = vsel %vm1864, %v1936, %v1937
        %v1939 = vrot.slane %v1937, 4
        %v1940 = vrot.slane %v1229, 5
        %v1941 = vsel %vm1864, %v1939, %v1940
        %v1942 = vrot.slane %v1825, 5
        %v1943 = vrot.slane %v1942, 4
        %v1944 = vrot.slane %v1210, 5
        %v1945 = vsel %vm1864, %v1943, %v1944
        %v1946 = vrot.slane %v1944, 4
        %v1947 = vrot.slane %v1230, 5
        %v1948 = vsel %vm1864, %v1946, %v1947
        %v1949 = vrot.slane %v1826, 5
        %v1950 = vrot.slane %v1949, 4
        %v1951 = vrot.slane %v1212, 5
        %v1952 = vsel %vm1864, %v1950, %v1951
        %v1953 = vrot.slane %v1951, 4
        %v1954 = vrot.slane %v1231, 5
        %v1955 = vsel %vm1864, %v1953, %v1954
        %v1956 = vrot.slane %v1827, 5
        %v1957 = vrot.slane %v1956, 4
        %v1958 = vrot.slane %v1214, 5
        %v1959 = vsel %vm1864, %v1957, %v1958
        %v1960 = vrot.slane %v1958, 4
        %v1961 = vrot.slane %v1232, 5
        %v1962 = vsel %vm1864, %v1960, %v1961
        %v1963 = vrot.slane %v1828, 5
        %v1964 = vrot.slane %v1963, 4
        %v1965 = vrot.slane %v1216, 5
        %v1966 = vsel %vm1864, %v1964, %v1965
        %v1967 = vrot.slane %v1965, 4
        %v1968 = vrot.slane %v1233, 5
        %v1969 = vsel %vm1864, %v1967, %v1968
        %v1970 = vrot.slane %v1829, 5
        %v1971 = vrot.slane %v1970, 4
        %v1972 = vrot.slane %v1218, 5
        %v1973 = vsel %vm1864, %v1971, %v1972
        %v1974 = vrot.slane %v1972, 4
        %v1975 = vrot.slane %v1234, 5
        %v1976 = vsel %vm1864, %v1974, %v1975
        %v1977 = vld [vmem:[%s403] sm:$0xf]
        %v1978 = vld [vmem:[%s403 + $0x4] sm:$0xf]
        %v1979 = vld [vmem:[%s403 + $0xc] sm:$0xf]
        %v1980 = vld [vmem:[%s403 + $0x10] sm:$0xf]
        %v1981 = vld [vmem:[%s403 + $0x18] sm:$0xf]
        %v1982 = vld [vmem:[%s403 + $0x1c] sm:$0xf]
        %v1983 = vld [vmem:[%s403 + $0x24] sm:$0xf]
        %v1984 = vld [vmem:[%s403 + $0x28] sm:$0xf]
        %v1985 = vld [vmem:[%s403 + $0x30] sm:$0xf]
        %v1986 = vld [vmem:[%s403 + $0x34] sm:$0xf]
        %v1987 = vld [vmem:[%s403 + $0x3c] sm:$0xf]
        %v1988 = vld [vmem:[%s403 + $0x40] sm:$0xf]
        %v1989 = vld [vmem:[%s403 + $0x48] sm:$0xf]
        %v1990 = vld [vmem:[%s403 + $0x4c] sm:$0xf]
        %v1991 = vld [vmem:[%s403 + $0x54] sm:$0xf]
        %v1992 = vld [vmem:[%s403 + $0x58] sm:$0xf]
        %v1993 = vld [vmem:[%s403 + $0x60] sm:$0xf]
        %v1994 = vld [vmem:[%s403 + $0x64] sm:$0xf]
        %v1995 = vld [vmem:[%s403 + $0x6c] sm:$0xf]
        %v1996 = vld [vmem:[%s403 + $0x70] sm:$0xf]
        %v1997 = vld [vmem:[%s403 + $0x78] sm:$0xf]
        %v1998 = vld [vmem:[%s403 + $0x7c] sm:$0xf]
        %v1999 = vld [vmem:[%s403 + $0x84] sm:$0xf]
        %v2000 = vld [vmem:[%s403 + $0x88] sm:$0xf]
        %v2001 = vld [vmem:[%s403 + $0x90] sm:$0xf]
        %v2002 = vld [vmem:[%s403 + $0x94] sm:$0xf]
        %v2003 = vld [vmem:[%s403 + $0x9c] sm:$0xf]
        %v2004 = vld [vmem:[%s403 + $0xa0] sm:$0xf]
        %v2005 = vld [vmem:[%s403 + $0xa8] sm:$0xf]
        %v2006 = vld [vmem:[%s403 + $0xac] sm:$0xf]
        %v2007 = vld [vmem:[%s403 + $0xb4] sm:$0xf]
        %v2008 = vld [vmem:[%s403 + $0xb8] sm:$0xf]
        %v2009 = vunpack.c.l.b16 %v1868
        %v2010 = vunpack.c.l.b16 %v1871
        %v2011 = vunpack.c.l.b16 %v1875
        %v2012 = vunpack.c.l.b16 %v1878
        %v2013 = vunpack.c.l.b16 %v1882
        %v2014 = vunpack.c.l.b16 %v1885
        %v2015 = vunpack.c.l.b16 %v1889
        %v2016 = vunpack.c.l.b16 %v1892
        %v2017 = vunpack.c.l.b16 %v1896
        %v2018 = vunpack.c.l.b16 %v1899
        %v2019 = vunpack.c.l.b16 %v1903
        %v2020 = vunpack.c.l.b16 %v1906
        %v2021 = vunpack.c.l.b16 %v1910
        %v2022 = vunpack.c.l.b16 %v1913
        %v2023 = vunpack.c.l.b16 %v1917
        %v2024 = vunpack.c.l.b16 %v1920
        %v2025 = vunpack.c.l.b16 %v1924
        %v2026 = vunpack.c.l.b16 %v1927
        %v2027 = vunpack.c.l.b16 %v1931
        %v2028 = vunpack.c.l.b16 %v1934
        %v2029 = vunpack.c.l.b16 %v1938
        %v2030 = vunpack.c.l.b16 %v1941
        %v2031 = vunpack.c.l.b16 %v1945
        %v2032 = vunpack.c.l.b16 %v1948
        %v2033 = vunpack.c.l.b16 %v1952
        %v2034 = vunpack.c.l.b16 %v1955
        %v2035 = vunpack.c.l.b16 %v1959
        %v2036 = vunpack.c.l.b16 %v1962
        %v2037 = vunpack.c.l.b16 %v1966
        %v2038 = vunpack.c.l.b16 %v1969
        %v2039 = vunpack.c.l.b16 %v1973
        %v2040 = vunpack.c.l.b16 %v1976
        %v2041 = vpack.c.b16 %v2010, %v2009
        %v2042 = vpack.c.b16 %v2012, %v2011
        %v2043 = vpack.c.b16 %v2014, %v2013
        %v2044 = vpack.c.b16 %v2016, %v2015
        %v2045 = vpack.c.b16 %v2018, %v2017
        %v2046 = vpack.c.b16 %v2020, %v2019
        %v2047 = vpack.c.b16 %v2022, %v2021
        %v2048 = vpack.c.b16 %v2024, %v2023
        %v2049 = vpack.c.b16 %v2026, %v2025
        %v2050 = vpack.c.b16 %v2028, %v2027
        %v2051 = vpack.c.b16 %v2030, %v2029
        %v2052 = vpack.c.b16 %v2032, %v2031
        %v2053 = vpack.c.b16 %v2034, %v2033
        %v2054 = vpack.c.b16 %v2036, %v2035
        %v2055 = vpack.c.b16 %v2038, %v2037
        %v2056 = vpack.c.b16 %v2040, %v2039
        %v2105 = vunpack.c.l.b16 %v1977
        %v2106 = vunpack.c.l.b16 %v1978
        %v2107 = vunpack.c.l.b16 %v1979
        %v2108 = vunpack.c.l.b16 %v1980
        %v2109 = vunpack.c.l.b16 %v1981
        %v2110 = vunpack.c.l.b16 %v1982
        %v2111 = vunpack.c.l.b16 %v1983
        %v2112 = vunpack.c.l.b16 %v1984
        %v2113 = vunpack.c.l.b16 %v1985
        %v2114 = vunpack.c.l.b16 %v1986
        %v2115 = vunpack.c.l.b16 %v1987
        %v2116 = vunpack.c.l.b16 %v1988
        %v2117 = vunpack.c.l.b16 %v1989
        %v2118 = vunpack.c.l.b16 %v1990
        %v2119 = vunpack.c.l.b16 %v1991
        %v2120 = vunpack.c.l.b16 %v1992
        %v2121 = vunpack.c.l.b16 %v1993
        %v2122 = vunpack.c.l.b16 %v1994
        %v2123 = vunpack.c.l.b16 %v1995
        %v2124 = vunpack.c.l.b16 %v1996
        %v2125 = vunpack.c.l.b16 %v1997
        %v2126 = vunpack.c.l.b16 %v1998
        %v2127 = vunpack.c.l.b16 %v1999
        %v2128 = vunpack.c.l.b16 %v2000
        %v2129 = vunpack.c.l.b16 %v2001
        %v2130 = vunpack.c.l.b16 %v2002
        %v2131 = vunpack.c.l.b16 %v2003
        %v2132 = vunpack.c.l.b16 %v2004
        %v2133 = vunpack.c.l.b16 %v2005
        %v2134 = vunpack.c.l.b16 %v2006
        %v2135 = vunpack.c.l.b16 %v2007
        %v2136 = vunpack.c.l.b16 %v2008
        %v2137 = vpack.c.b16 %v2106, %v2105
        %v2138 = vpack.c.b16 %v2108, %v2107
        %v2139 = vpack.c.b16 %v2110, %v2109
        %v2140 = vpack.c.b16 %v2112, %v2111
        %v2141 = vpack.c.b16 %v2114, %v2113
        %v2142 = vpack.c.b16 %v2116, %v2115
        %v2143 = vpack.c.b16 %v2118, %v2117
        %v2144 = vpack.c.b16 %v2120, %v2119
        %v2145 = vpack.c.b16 %v2122, %v2121
        %v2146 = vpack.c.b16 %v2124, %v2123
        %v2147 = vpack.c.b16 %v2126, %v2125
        %v2148 = vpack.c.b16 %v2128, %v2127
        %v2149 = vpack.c.b16 %v2130, %v2129
        %v2150 = vpack.c.b16 %v2132, %v2131
        %v2151 = vpack.c.b16 %v2134, %v2133
        %v2152 = vpack.c.b16 %v2136, %v2135
        %v2169 = vld [vmem:[#allocation7 + $0x80] sm:$0xf]
        %v2170 = vld [vmem:[#allocation7 + $0x84] sm:$0xf]
        %v2171 = vld [vmem:[#allocation7 + $0x88] sm:$0xf]
        %v2172 = vld [vmem:[#allocation7 + $0x8c] sm:$0xf]
        %v2173 = vld [vmem:[#allocation7 + $0x90] sm:$0xf]
        %v2174 = vld [vmem:[#allocation7 + $0x94] sm:$0xf]
        %v2175 = vld [vmem:[#allocation7 + $0x98] sm:$0xf]
        %v2176 = vld [vmem:[#allocation7 + $0x9c] sm:$0xf]
        %v2177 = vld [vmem:[#allocation7 + $0xa0] sm:$0xf]
        %v2178 = vld [vmem:[#allocation7 + $0xa4] sm:$0xf]
        %v2179 = vld [vmem:[#allocation7 + $0xa8] sm:$0xf]
        %v2180 = vld [vmem:[#allocation7 + $0xac] sm:$0xf]
        %v2181 = vld [vmem:[#allocation7 + $0xb0] sm:$0xf]
        %v2182 = vld [vmem:[#allocation7 + $0xb4] sm:$0xf]
        %v2183 = vld [vmem:[#allocation7 + $0xb8] sm:$0xf]
        %v2184 = vld [vmem:[#allocation7 + $0xbc] sm:$0xf]
        %v2185 = vld [vmem:[#allocation7 + $0xc0] sm:$0xf]
        %v2186 = vld [vmem:[#allocation7 + $0xc4] sm:$0xf]
        %v2187 = vld [vmem:[#allocation7 + $0xc8] sm:$0xf]
        %v2188 = vld [vmem:[#allocation7 + $0xcc] sm:$0xf]
        %v2189 = vld [vmem:[#allocation7 + $0xd0] sm:$0xf]
        %v2190 = vld [vmem:[#allocation7 + $0xd4] sm:$0xf]
        %v2191 = vld [vmem:[#allocation7 + $0xd8] sm:$0xf]
        %v2192 = vld [vmem:[#allocation7 + $0xdc] sm:$0xf]
        %v2193 = vld [vmem:[#allocation7 + $0xe0] sm:$0xf]
        %v2194 = vld [vmem:[#allocation7 + $0xe4] sm:$0xf]
        %v2195 = vld [vmem:[#allocation7 + $0xe8] sm:$0xf]
        %v2196 = vld [vmem:[#allocation7 + $0xec] sm:$0xf]
        %v2197 = vld [vmem:[#allocation7 + $0xf0] sm:$0xf]
        %v2198 = vld [vmem:[#allocation7 + $0xf4] sm:$0xf]
        %v2199 = vld [vmem:[#allocation7 + $0xf8] sm:$0xf]
        %v2200 = vld [vmem:[#allocation7 + $0xfc] sm:$0xf]
        %v2233 = vunpack.c.l.b16 %v2169
        %v2234 = vunpack.c.l.b16 %v2170
        %v2235 = vunpack.c.l.b16 %v2171
        %v2236 = vunpack.c.l.b16 %v2172
        %v2237 = vunpack.c.l.b16 %v2173
        %v2238 = vunpack.c.l.b16 %v2174
        %v2239 = vunpack.c.l.b16 %v2175
        %v2240 = vunpack.c.l.b16 %v2176
        %v2241 = vunpack.c.l.b16 %v2177
        %v2242 = vunpack.c.l.b16 %v2178
        %v2243 = vunpack.c.l.b16 %v2179
        %v2244 = vunpack.c.l.b16 %v2180
        %v2245 = vunpack.c.l.b16 %v2181
        %v2246 = vunpack.c.l.b16 %v2182
        %v2247 = vunpack.c.l.b16 %v2183
        %v2248 = vunpack.c.l.b16 %v2184
        %v2249 = vunpack.c.l.b16 %v2185
        %v2250 = vunpack.c.l.b16 %v2186
        %v2251 = vunpack.c.l.b16 %v2187
        %v2252 = vunpack.c.l.b16 %v2188
        %v2253 = vunpack.c.l.b16 %v2189
        %v2254 = vunpack.c.l.b16 %v2190
        %v2255 = vunpack.c.l.b16 %v2191
        %v2256 = vunpack.c.l.b16 %v2192
        %v2257 = vunpack.c.l.b16 %v2193
        %v2258 = vunpack.c.l.b16 %v2194
        %v2259 = vunpack.c.l.b16 %v2195
        %v2260 = vunpack.c.l.b16 %v2196
        %v2261 = vunpack.c.l.b16 %v2197
        %v2262 = vunpack.c.l.b16 %v2198
        %v2263 = vunpack.c.l.b16 %v2199
        %v2264 = vunpack.c.l.b16 %v2200
        %v2265 = vpack.c.b16 %v2234, %v2233
        %v2266 = vpack.c.b16 %v2236, %v2235
        %v2267 = vpack.c.b16 %v2238, %v2237
        %v2268 = vpack.c.b16 %v2240, %v2239
        %v2269 = vpack.c.b16 %v2242, %v2241
        %v2270 = vpack.c.b16 %v2244, %v2243
        %v2271 = vpack.c.b16 %v2246, %v2245
        %v2272 = vpack.c.b16 %v2248, %v2247
        %v2273 = vpack.c.b16 %v2250, %v2249
        %v2274 = vpack.c.b16 %v2252, %v2251
        %v2275 = vpack.c.b16 %v2254, %v2253
        %v2276 = vpack.c.b16 %v2256, %v2255
        %v2277 = vpack.c.b16 %v2258, %v2257
        %v2278 = vpack.c.b16 %v2260, %v2259
        %v2279 = vpack.c.b16 %v2262, %v2261
        %v2280 = vpack.c.b16 %v2264, %v2263
        %2297 = vmatprep.subr.bf16.mxu0 0
        %2298 = vmatpush1.bf16.msra.mxu0 %v2265
        %2299 = vmatprep.subr.bf16.mxu0 0
        %2300 = vmatpush1.bf16.msra.mxu0 %v2266
        %2301 = vmatprep.subr.bf16.mxu0 0
        %2302 = vmatpush1.bf16.msra.mxu0 %v2267
        %2303 = vmatprep.subr.bf16.mxu0 0
        %2304 = vmatpush1.bf16.msra.mxu0 %v2268
        %2305 = vmatprep.subr.bf16.mxu0 0
        %2306 = vmatpush1.bf16.msra.mxu0 %v2269
        %2307 = vmatprep.subr.bf16.mxu0 0
        %2308 = vmatpush1.bf16.msra.mxu0 %v2270
        %2309 = vmatprep.subr.bf16.mxu0 0
        %2310 = vmatpush1.bf16.msra.mxu0 %v2271
        %2311 = vmatprep.subr.bf16.mxu0 0
        %2312 = vmatpush1.bf16.msra.mxu0 %v2272
        %2313 = vmatprep.subr.bf16.mxu0 0
        %2314 = vmatpush1.bf16.msra.mxu0 %v2273
        %2315 = vmatprep.subr.bf16.mxu0 0
        %2316 = vmatpush1.bf16.msra.mxu0 %v2274
        %2317 = vmatprep.subr.bf16.mxu0 0
        %2318 = vmatpush1.bf16.msra.mxu0 %v2275
        %2319 = vmatprep.subr.bf16.mxu0 0
        %2320 = vmatpush1.bf16.msra.mxu0 %v2276
        %2321 = vmatprep.subr.bf16.mxu0 0
        %2322 = vmatpush1.bf16.msra.mxu0 %v2277
        %2323 = vmatprep.subr.bf16.mxu0 0
        %2324 = vmatpush1.bf16.msra.mxu0 %v2278
        %2325 = vmatprep.subr.bf16.mxu0 0
        %2326 = vmatpush1.bf16.msra.mxu0 %v2279
        %2327 = vmatprep.subr.bf16.mxu0 0
        %2328 = vmatpush1.bf16.msra.mxu0 %v2280
        %2329 = vmatprep.mubr.bf16.mxu0 %v2137
        %2330 = vmatmul.mubr.bf16.gmra.mrb[0].mxu0 %v2041
        %v2331 = vpop.f32.mrb[0].mxu0
        %v2332 = vadd.f32 0.0, %v2331
        %v2333 = vpop.f32.mrb[0].mxu0
        %v2334 = vpop.f32.mrb[0].mxu0
        %v2335 = vadd.f32 0.0, %v2334
        %v2336 = vpop.f32.mrb[0].mxu0
        %2337 = vmatprep.mubr.bf16.mxu0 %v2138
        %2338 = vmatmul.mubr.bf16.gmra.mrb[0].mxu0 %v2042
        %v2339 = vpop.f32.mrb[0].mxu0
        %v2340 = vadd.f32 0.0, %v2339
        %v2341 = vpop.f32.mrb[0].mxu0
        %v2342 = vpop.f32.mrb[0].mxu0
        %v2343 = vadd.f32 0.0, %v2342
        %v2344 = vpop.f32.mrb[0].mxu0
        %2345 = vmatprep.mubr.bf16.mxu0 %v2139
        %2346 = vmatmul.mubr.bf16.gmra.mrb[0].mxu0 %v2043
        %v2347 = vpop.f32.mrb[0].mxu0
        %v2348 = vadd.f32 0.0, %v2347
        %v2349 = vpop.f32.mrb[0].mxu0
        %v2350 = vpop.f32.mrb[0].mxu0
        %v2351 = vadd.f32 0.0, %v2350
        %v2352 = vpop.f32.mrb[0].mxu0
        %2353 = vmatprep.mubr.bf16.mxu0 %v2140
        %2354 = vmatmul.mubr.bf16.gmra.mrb[0].mxu0 %v2044
        %v2355 = vpop.f32.mrb[0].mxu0
        %v2356 = vadd.f32 0.0, %v2355
        %v2357 = vpop.f32.mrb[0].mxu0
        %v2358 = vpop.f32.mrb[0].mxu0
        %v2359 = vadd.f32 0.0, %v2358
        %v2360 = vpop.f32.mrb[0].mxu0
        %2361 = vmatprep.mubr.bf16.mxu0 %v2141
        %2362 = vmatmul.mubr.bf16.gmra.mrb[0].mxu0 %v2045
        %v2363 = vpop.f32.mrb[0].mxu0
        %v2364 = vadd.f32 0.0, %v2363
        %v2365 = vpop.f32.mrb[0].mxu0
        %v2366 = vpop.f32.mrb[0].mxu0
        %v2367 = vadd.f32 0.0, %v2366
        %v2368 = vpop.f32.mrb[0].mxu0
        %2369 = vmatprep.mubr.bf16.mxu0 %v2142
        %2370 = vmatmul.mubr.bf16.gmra.mrb[0].mxu0 %v2046
        %v2371 = vpop.f32.mrb[0].mxu0
        %v2372 = vadd.f32 0.0, %v2371
        %v2373 = vpop.f32.mrb[0].mxu0
        %v2374 = vpop.f32.mrb[0].mxu0
        %v2375 = vadd.f32 0.0, %v2374
        %v2376 = vpop.f32.mrb[0].mxu0
        %2377 = vmatprep.mubr.bf16.mxu0 %v2143
        %2378 = vmatmul.mubr.bf16.gmra.mrb[0].mxu0 %v2047
        %v2379 = vpop.f32.mrb[0].mxu0
        %v2380 = vadd.f32 0.0, %v2379
        %v2381 = vpop.f32.mrb[0].mxu0
        %v2382 = vpop.f32.mrb[0].mxu0
        %v2383 = vadd.f32 0.0, %v2382
        %v2384 = vpop.f32.mrb[0].mxu0
        %2385 = vmatprep.mubr.bf16.mxu0 %v2144
        %2386 = vmatmul.mubr.bf16.gmra.mrb[0].mxu0 %v2048
        %v2387 = vpop.f32.mrb[0].mxu0
        %v2388 = vadd.f32 0.0, %v2387
        %v2389 = vpop.f32.mrb[0].mxu0
        %v2390 = vpop.f32.mrb[0].mxu0
        %v2391 = vadd.f32 0.0, %v2390
        %v2392 = vpop.f32.mrb[0].mxu0
        %2393 = vmatprep.mubr.bf16.mxu0 %v2145
        %2394 = vmatmul.mubr.bf16.gmra.mrb[0].mxu0 %v2049
        %v2395 = vpop.f32.mrb[0].mxu0
        %v2396 = vadd.f32 0.0, %v2395
        %v2397 = vpop.f32.mrb[0].mxu0
        %v2398 = vpop.f32.mrb[0].mxu0
        %v2399 = vadd.f32 0.0, %v2398
        %v2400 = vpop.f32.mrb[0].mxu0
        %2401 = vmatprep.mubr.bf16.mxu0 %v2146
        %2402 = vmatmul.mubr.bf16.gmra.mrb[0].mxu0 %v2050
        %v2403 = vpop.f32.mrb[0].mxu0
        %v2404 = vadd.f32 0.0, %v2403
        %v2405 = vpop.f32.mrb[0].mxu0
        %v2406 = vpop.f32.mrb[0].mxu0
        %v2407 = vadd.f32 0.0, %v2406
        %v2408 = vpop.f32.mrb[0].mxu0
        %2409 = vmatprep.mubr.bf16.mxu0 %v2147
        %2410 = vmatmul.mubr.bf16.gmra.mrb[0].mxu0 %v2051
        %v2411 = vpop.f32.mrb[0].mxu0
        %v2412 = vadd.f32 0.0, %v2411
        %v2413 = vpop.f32.mrb[0].mxu0
        %v2414 = vpop.f32.mrb[0].mxu0
        %v2415 = vadd.f32 0.0, %v2414
        %v2416 = vpop.f32.mrb[0].mxu0
        %2417 = vmatprep.mubr.bf16.mxu0 %v2148
        %2418 = vmatmul.mubr.bf16.gmra.mrb[0].mxu0 %v2052
        %v2419 = vpop.f32.mrb[0].mxu0
        %v2420 = vadd.f32 0.0, %v2419
        %v2421 = vpop.f32.mrb[0].mxu0
        %v2422 = vpop.f32.mrb[0].mxu0
        %v2423 = vadd.f32 0.0, %v2422
        %v2424 = vpop.f32.mrb[0].mxu0
        %2425 = vmatprep.mubr.bf16.mxu0 %v2149
        %2426 = vmatmul.mubr.bf16.gmra.mrb[0].mxu0 %v2053
        %v2427 = vpop.f32.mrb[0].mxu0
        %v2428 = vadd.f32 0.0, %v2427
        %v2429 = vpop.f32.mrb[0].mxu0
        %v2430 = vpop.f32.mrb[0].mxu0
        %v2431 = vadd.f32 0.0, %v2430
        %v2432 = vpop.f32.mrb[0].mxu0
        %2433 = vmatprep.mubr.bf16.mxu0 %v2150
        %2434 = vmatmul.mubr.bf16.gmra.mrb[0].mxu0 %v2054
        %v2435 = vpop.f32.mrb[0].mxu0
        %v2436 = vadd.f32 0.0, %v2435
        %v2437 = vpop.f32.mrb[0].mxu0
        %v2438 = vpop.f32.mrb[0].mxu0
        %v2439 = vadd.f32 0.0, %v2438
        %v2440 = vpop.f32.mrb[0].mxu0
        %2441 = vmatprep.mubr.bf16.mxu0 %v2151
        %2442 = vmatmul.mubr.bf16.gmra.mrb[0].mxu0 %v2055
        %v2443 = vpop.f32.mrb[0].mxu0
        %v2444 = vadd.f32 0.0, %v2443
        %v2445 = vpop.f32.mrb[0].mxu0
        %v2446 = vpop.f32.mrb[0].mxu0
        %v2447 = vadd.f32 0.0, %v2446
        %v2448 = vpop.f32.mrb[0].mxu0
        %2449 = vmatprep.mubr.bf16.mxu0 %v2152
        %2450 = vmatmul.mubr.bf16.gmra.mrb[0].mxu0 %v2056
        %v2451 = vpop.f32.mrb[0].mxu0
        %v2452 = vadd.f32 0.0, %v2451
        %v2453 = vpop.f32.mrb[0].mxu0
        %v2454 = vpop.f32.mrb[0].mxu0
        %v2455 = vadd.f32 0.0, %v2454
        %v2456 = vpop.f32.mrb[0].mxu0
        %2457 = vdwg.mxu0
        %v2490 = vunpack.c.l.b16 %v1782
        %v2491 = vunpack.c.l.b16 %v1783
        %v2492 = vunpack.c.l.b16 %v1784
        %v2493 = vunpack.c.l.b16 %v1785
        %v2494 = vunpack.c.l.b16 %v1786
        %v2495 = vunpack.c.l.b16 %v1787
        %v2496 = vunpack.c.l.b16 %v1788
        %v2497 = vunpack.c.l.b16 %v1789
        %v2498 = vunpack.c.l.b16 %v1790
        %v2499 = vunpack.c.l.b16 %v1791
        %v2500 = vunpack.c.l.b16 %v1792
        %v2501 = vunpack.c.l.b16 %v1793
        %v2502 = vunpack.c.l.b16 %v1794
        %v2503 = vunpack.c.l.b16 %v1795
        %v2504 = vunpack.c.l.b16 %v1796
        %v2505 = vunpack.c.l.b16 %v1797
        %v2506 = vunpack.c.l.b16 %v1798
        %v2507 = vunpack.c.l.b16 %v1799
        %v2508 = vunpack.c.l.b16 %v1800
        %v2509 = vunpack.c.l.b16 %v1801
        %v2510 = vunpack.c.l.b16 %v1802
        %v2511 = vunpack.c.l.b16 %v1803
        %v2512 = vunpack.c.l.b16 %v1804
        %v2513 = vunpack.c.l.b16 %v1805
        %v2514 = vunpack.c.l.b16 %v1806
        %v2515 = vunpack.c.l.b16 %v1807
        %v2516 = vunpack.c.l.b16 %v1808
        %v2517 = vunpack.c.l.b16 %v1809
        %v2518 = vunpack.c.l.b16 %v1810
        %v2519 = vunpack.c.l.b16 %v1811
        %v2520 = vunpack.c.l.b16 %v1812
        %v2521 = vunpack.c.l.b16 %v1813
        %v2522 = vpack.c.b16 %v2491, %v2490
        %v2523 = vpack.c.b16 %v2493, %v2492
        %v2524 = vpack.c.b16 %v2495, %v2494
        %v2525 = vpack.c.b16 %v2497, %v2496
        %v2526 = vpack.c.b16 %v2499, %v2498
        %v2527 = vpack.c.b16 %v2501, %v2500
        %v2528 = vpack.c.b16 %v2503, %v2502
        %v2529 = vpack.c.b16 %v2505, %v2504
        %v2530 = vpack.c.b16 %v2507, %v2506
        %v2531 = vpack.c.b16 %v2509, %v2508
        %v2532 = vpack.c.b16 %v2511, %v2510
        %v2533 = vpack.c.b16 %v2513, %v2512
        %v2534 = vpack.c.b16 %v2515, %v2514
        %v2535 = vpack.c.b16 %v2517, %v2516
        %v2536 = vpack.c.b16 %v2519, %v2518
        %v2537 = vpack.c.b16 %v2521, %v2520
        %2554 = vmatprep.subr.bf16.mxu0 0
        %2555 = vmatpush1.bf16.msra.mxu0 %v2522
        %2556 = vmatprep.subr.bf16.mxu0 0
        %2557 = vmatpush1.bf16.msra.mxu0 %v2523
        %2558 = vmatprep.subr.bf16.mxu0 0
        %2559 = vmatpush1.bf16.msra.mxu0 %v2524
        %2560 = vmatprep.subr.bf16.mxu0 0
        %2561 = vmatpush1.bf16.msra.mxu0 %v2525
        %2562 = vmatprep.subr.bf16.mxu0 0
        %2563 = vmatpush1.bf16.msra.mxu0 %v2526
        %2564 = vmatprep.subr.bf16.mxu0 0
        %2565 = vmatpush1.bf16.msra.mxu0 %v2527
        %2566 = vmatprep.subr.bf16.mxu0 0
        %2567 = vmatpush1.bf16.msra.mxu0 %v2528
        %2568 = vmatprep.subr.bf16.mxu0 0
        %2569 = vmatpush1.bf16.msra.mxu0 %v2529
        %2570 = vmatprep.subr.bf16.mxu0 0
        %2571 = vmatpush1.bf16.msra.mxu0 %v2530
        %2572 = vmatprep.subr.bf16.mxu0 0
        %2573 = vmatpush1.bf16.msra.mxu0 %v2531
        %2574 = vmatprep.subr.bf16.mxu0 0
        %2575 = vmatpush1.bf16.msra.mxu0 %v2532
        %2576 = vmatprep.subr.bf16.mxu0 0
        %2577 = vmatpush1.bf16.msra.mxu0 %v2533
        %2578 = vmatprep.subr.bf16.mxu0 0
        %2579 = vmatpush1.bf16.msra.mxu0 %v2534
        %2580 = vmatprep.subr.bf16.mxu0 0
        %2581 = vmatpush1.bf16.msra.mxu0 %v2535
        %2582 = vmatprep.subr.bf16.mxu0 0
        %2583 = vmatpush1.bf16.msra.mxu0 %v2536
        %2584 = vmatprep.subr.bf16.mxu0 0
        %2585 = vmatpush1.bf16.msra.mxu0 %v2537
        %2586 = vmatprep.mubr.bf16.mxu0 %v1750
        %2587 = vmatmul.mubr.bf16.gmra.mrb[0].mxu0 %v1686
        %v2588 = vpop.f32.mrb[0].mxu0
        %v2589 = vadd.f32 %v2332, %v2588
        %v2590 = vpop.f32.mrb[0].mxu0
        %v2591 = vpop.f32.mrb[0].mxu0
        %v2592 = vadd.f32 %v2335, %v2591
        %v2593 = vpop.f32.mrb[0].mxu0
        %2594 = vmatprep.mubr.bf16.mxu0 %v1751
        %2595 = vmatmul.mubr.bf16.gmra.mrb[0].mxu0 %v1687
        %v2596 = vpop.f32.mrb[0].mxu0
        %v2597 = vadd.f32 %v2340, %v2596
        %v2598 = vpop.f32.mrb[0].mxu0
        %v2599 = vpop.f32.mrb[0].mxu0
        %v2600 = vadd.f32 %v2343, %v2599
        %v2601 = vpop.f32.mrb[0].mxu0
        %2602 = vmatprep.mubr.bf16.mxu0 %v1752
        %2603 = vmatmul.mubr.bf16.gmra.mrb[0].mxu0 %v1688
        %v2604 = vpop.f32.mrb[0].mxu0
        %v2605 = vadd.f32 %v2348, %v2604
        %v2606 = vpop.f32.mrb[0].mxu0
        %v2607 = vpop.f32.mrb[0].mxu0
        %v2608 = vadd.f32 %v2351, %v2607
        %v2609 = vpop.f32.mrb[0].mxu0
        %2610 = vmatprep.mubr.bf16.mxu0 %v1753
        %2611 = vmatmul.mubr.bf16.gmra.mrb[0].mxu0 %v1689
        %v2612 = vpop.f32.mrb[0].mxu0
        %v2613 = vadd.f32 %v2356, %v2612
        %v2614 = vpop.f32.mrb[0].mxu0
        %v2615 = vpop.f32.mrb[0].mxu0
        %v2616 = vadd.f32 %v2359, %v2615
        %v2617 = vpop.f32.mrb[0].mxu0
        %2618 = vmatprep.mubr.bf16.mxu0 %v1754
        %2619 = vmatmul.mubr.bf16.gmra.mrb[0].mxu0 %v1690
        %v2620 = vpop.f32.mrb[0].mxu0
        %v2621 = vadd.f32 %v2364, %v2620
        %v2622 = vpop.f32.mrb[0].mxu0
        %v2623 = vpop.f32.mrb[0].mxu0
        %v2624 = vadd.f32 %v2367, %v2623
        %v2625 = vpop.f32.mrb[0].mxu0
        %2626 = vmatprep.mubr.bf16.mxu0 %v1755
        %2627 = vmatmul.mubr.bf16.gmra.mrb[0].mxu0 %v1691
        %v2628 = vpop.f32.mrb[0].mxu0
        %v2629 = vadd.f32 %v2372, %v2628
        %v2630 = vpop.f32.mrb[0].mxu0
        %v2631 = vpop.f32.mrb[0].mxu0
        %v2632 = vadd.f32 %v2375, %v2631
        %v2633 = vpop.f32.mrb[0].mxu0
        %2634 = vmatprep.mubr.bf16.mxu0 %v1756
        %2635 = vmatmul.mubr.bf16.gmra.mrb[0].mxu0 %v1692
        %v2636 = vpop.f32.mrb[0].mxu0
        %v2637 = vadd.f32 %v2380, %v2636
        %v2638 = vpop.f32.mrb[0].mxu0
        %v2639 = vpop.f32.mrb[0].mxu0
        %v2640 = vadd.f32 %v2383, %v2639
        %v2641 = vpop.f32.mrb[0].mxu0
        %2642 = vmatprep.mubr.bf16.mxu0 %v1757
        %2643 = vmatmul.mubr.bf16.gmra.mrb[0].mxu0 %v1693
        %v2644 = vpop.f32.mrb[0].mxu0
        %v2645 = vadd.f32 %v2388, %v2644
        %v2646 = vpop.f32.mrb[0].mxu0
        %v2647 = vpop.f32.mrb[0].mxu0
        %v2648 = vadd.f32 %v2391, %v2647
        %v2649 = vpop.f32.mrb[0].mxu0
        %2650 = vmatprep.mubr.bf16.mxu0 %v1758
        %2651 = vmatmul.mubr.bf16.gmra.mrb[0].mxu0 %v1694
        %v2652 = vpop.f32.mrb[0].mxu0
        %v2653 = vadd.f32 %v2396, %v2652
        %v2654 = vpop.f32.mrb[0].mxu0
        %v2655 = vpop.f32.mrb[0].mxu0
        %v2656 = vadd.f32 %v2399, %v2655
        %v2657 = vpop.f32.mrb[0].mxu0
        %2658 = vmatprep.mubr.bf16.mxu0 %v1759
        %2659 = vmatmul.mubr.bf16.gmra.mrb[0].mxu0 %v1695
        %v2660 = vpop.f32.mrb[0].mxu0
        %v2661 = vadd.f32 %v2404, %v2660
        %v2662 = vpop.f32.mrb[0].mxu0
        %v2663 = vpop.f32.mrb[0].mxu0
        %v2664 = vadd.f32 %v2407, %v2663
        %v2665 = vpop.f32.mrb[0].mxu0
        %2666 = vmatprep.mubr.bf16.mxu0 %v1760
        %2667 = vmatmul.mubr.bf16.gmra.mrb[0].mxu0 %v1696
        %v2668 = vpop.f32.mrb[0].mxu0
        %v2669 = vadd.f32 %v2412, %v2668
        %v2670 = vpop.f32.mrb[0].mxu0
        %v2671 = vpop.f32.mrb[0].mxu0
        %v2672 = vadd.f32 %v2415, %v2671
        %v2673 = vpop.f32.mrb[0].mxu0
        %2674 = vmatprep.mubr.bf16.mxu0 %v1761
        %2675 = vmatmul.mubr.bf16.gmra.mrb[0].mxu0 %v1697
        %v2676 = vpop.f32.mrb[0].mxu0
        %v2677 = vadd.f32 %v2420, %v2676
        %v2678 = vpop.f32.mrb[0].mxu0
        %v2679 = vpop.f32.mrb[0].mxu0
        %v2680 = vadd.f32 %v2423, %v2679
        %v2681 = vpop.f32.mrb[0].mxu0
        %2682 = vmatprep.mubr.bf16.mxu0 %v1762
        %2683 = vmatmul.mubr.bf16.gmra.mrb[0].mxu0 %v1698
        %v2684 = vpop.f32.mrb[0].mxu0
        %v2685 = vadd.f32 %v2428, %v2684
        %v2686 = vpop.f32.mrb[0].mxu0
        %v2687 = vpop.f32.mrb[0].mxu0
        %v2688 = vadd.f32 %v2431, %v2687
        %v2689 = vpop.f32.mrb[0].mxu0
        %2690 = vmatprep.mubr.bf16.mxu0 %v1763
        %2691 = vmatmul.mubr.bf16.gmra.mrb[0].mxu0 %v1699
        %v2692 = vpop.f32.mrb[0].mxu0
        %v2693 = vadd.f32 %v2436, %v2692
        %v2694 = vpop.f32.mrb[0].mxu0
        %v2695 = vpop.f32.mrb[0].mxu0
        %v2696 = vadd.f32 %v2439, %v2695
        %v2697 = vpop.f32.mrb[0].mxu0
        %2698 = vmatprep.mubr.bf16.mxu0 %v1764
        %2699 = vmatmul.mubr.bf16.gmra.mrb[0].mxu0 %v1700
        %v2700 = vpop.f32.mrb[0].mxu0
        %v2701 = vadd.f32 %v2444, %v2700
        %v2702 = vpop.f32.mrb[0].mxu0
        %v2703 = vpop.f32.mrb[0].mxu0
        %v2704 = vadd.f32 %v2447, %v2703
        %v2705 = vpop.f32.mrb[0].mxu0
        %2706 = vmatprep.mubr.bf16.mxu0 %v1765
        %2707 = vmatmul.mubr.bf16.gmra.mrb[0].mxu0 %v1701
        %v2708 = vpop.f32.mrb[0].mxu0
        %v2709 = vadd.f32 %v2452, %v2708
        %v2710 = vpop.f32.mrb[0].mxu0
        %v2711 = vpop.f32.mrb[0].mxu0
        %v2712 = vadd.f32 %v2455, %v2711
        %v2713 = vpop.f32.mrb[0].mxu0
        %2714 = vdwg.mxu0
        %v2715 = vld [vmem:[%s403] sm:$0xf]
        %v2716 = vld [vmem:[%s403 + $0x4] sm:$0xf]
        %v2717 = vld [vmem:[%s403 + $0x8] sm:$0x1]
        %v2718 = vld [vmem:[%s403 + $0xc] sm:$0xf]
        %v2719 = vld [vmem:[%s403 + $0x10] sm:$0xf]
        %v2720 = vld [vmem:[%s403 + $0x14] sm:$0x1]
        %v2721 = vld [vmem:[%s403 + $0x18] sm:$0xf]
        %v2722 = vld [vmem:[%s403 + $0x1c] sm:$0xf]
        %v2723 = vld [vmem:[%s403 + $0x20] sm:$0x1]
        %v2724 = vld [vmem:[%s403 + $0x24] sm:$0xf]
        %v2725 = vld [vmem:[%s403 + $0x28] sm:$0xf]
        %v2726 = vld [vmem:[%s403 + $0x2c] sm:$0x1]
        %v2727 = vld [vmem:[%s403 + $0x30] sm:$0xf]
        %v2728 = vld [vmem:[%s403 + $0x34] sm:$0xf]
        %v2729 = vld [vmem:[%s403 + $0x38] sm:$0x1]
        %v2730 = vld [vmem:[%s403 + $0x3c] sm:$0xf]
        %v2731 = vld [vmem:[%s403 + $0x40] sm:$0xf]
        %v2732 = vld [vmem:[%s403 + $0x44] sm:$0x1]
        %v2733 = vld [vmem:[%s403 + $0x48] sm:$0xf]
        %v2734 = vld [vmem:[%s403 + $0x4c] sm:$0xf]
        %v2735 = vld [vmem:[%s403 + $0x50] sm:$0x1]
        %v2736 = vld [vmem:[%s403 + $0x54] sm:$0xf]
        %v2737 = vld [vmem:[%s403 + $0x58] sm:$0xf]
        %v2738 = vld [vmem:[%s403 + $0x5c] sm:$0x1]
        %v2739 = vld [vmem:[%s403 + $0x60] sm:$0xf]
        %v2740 = vld [vmem:[%s403 + $0x64] sm:$0xf]
        %v2741 = vld [vmem:[%s403 + $0x68] sm:$0x1]
        %v2742 = vld [vmem:[%s403 + $0x6c] sm:$0xf]
        %v2743 = vld [vmem:[%s403 + $0x70] sm:$0xf]
        %v2744 = vld [vmem:[%s403 + $0x74] sm:$0x1]
        %v2745 = vld [vmem:[%s403 + $0x78] sm:$0xf]
        %v2746 = vld [vmem:[%s403 + $0x7c] sm:$0xf]
        %v2747 = vld [vmem:[%s403 + $0x80] sm:$0x1]
        %v2748 = vld [vmem:[%s403 + $0x84] sm:$0xf]
        %v2749 = vld [vmem:[%s403 + $0x88] sm:$0xf]
        %v2750 = vld [vmem:[%s403 + $0x8c] sm:$0x1]
        %v2751 = vld [vmem:[%s403 + $0x90] sm:$0xf]
        %v2752 = vld [vmem:[%s403 + $0x94] sm:$0xf]
        %v2753 = vld [vmem:[%s403 + $0x98] sm:$0x1]
        %v2754 = vld [vmem:[%s403 + $0x9c] sm:$0xf]
        %v2755 = vld [vmem:[%s403 + $0xa0] sm:$0xf]
        %v2756 = vld [vmem:[%s403 + $0xa4] sm:$0x1]
        %v2757 = vld [vmem:[%s403 + $0xa8] sm:$0xf]
        %v2758 = vld [vmem:[%s403 + $0xac] sm:$0xf]
        %v2759 = vld [vmem:[%s403 + $0xb0] sm:$0x1]
        %v2760 = vld [vmem:[%s403 + $0xb4] sm:$0xf]
        %v2761 = vld [vmem:[%s403 + $0xb8] sm:$0xf]
        %v2762 = vld [vmem:[%s403 + $0xbc] sm:$0x1]
        %v2764 = vshrl.u32 %v2715, 16
        %v2766 = vrot.slane %v2764, 4
        %v2767 = vshll.u32 %v2715, 16
        %v2769 = vrot.slane %v2767, 5
        %v2770 = vor.u32 %v2766, %v2769
        %v2771 = vrot.slane %v2770, 4
        %v2773 = vshll.u32 %v2716, 16
        %v2775 = vrot.slane %v2773, 5
        %v2776 = vsel %vm1237, %v2771, %v2775
        %v2777 = vshrl.u32 %v2716, 16
        %v2779 = vrot.slane %v2777, 4
        %v2780 = vor.u32 %v2779, %v2775
        %v2781 = vrot.slane %v2780, 4
        %v2783 = vshll.u32 %v2717, 16
        %v2785 = vrot.slane %v2783, 5
        %v2786 = vsel %vm1237, %v2781, %v2785
        %v2788 = vshrl.u32 %v2718, 16
        %v2790 = vrot.slane %v2788, 4
        %v2791 = vshll.u32 %v2718, 16
        %v2793 = vrot.slane %v2791, 5
        %v2794 = vor.u32 %v2790, %v2793
        %v2795 = vrot.slane %v2794, 4
        %v2797 = vshll.u32 %v2719, 16
        %v2799 = vrot.slane %v2797, 5
        %v2800 = vsel %vm1237, %v2795, %v2799
        %v2801 = vshrl.u32 %v2719, 16
        %v2803 = vrot.slane %v2801, 4
        %v2804 = vor.u32 %v2803, %v2799
        %v2805 = vrot.slane %v2804, 4
        %v2807 = vshll.u32 %v2720, 16
        %v2809 = vrot.slane %v2807, 5
        %v2810 = vsel %vm1237, %v2805, %v2809
        %v2812 = vshrl.u32 %v2721, 16
        %v2814 = vrot.slane %v2812, 4
        %v2815 = vshll.u32 %v2721, 16
        %v2817 = vrot.slane %v2815, 5
        %v2818 = vor.u32 %v2814, %v2817
        %v2819 = vrot.slane %v2818, 4
        %v2821 = vshll.u32 %v2722, 16
        %v2823 = vrot.slane %v2821, 5
        %v2824 = vsel %vm1237, %v2819, %v2823
        %v2825 = vshrl.u32 %v2722, 16
        %v2827 = vrot.slane %v2825, 4
        %v2828 = vor.u32 %v2827, %v2823
        %v2829 = vrot.slane %v2828, 4
        %v2831 = vshll.u32 %v2723, 16
        %v2833 = vrot.slane %v2831, 5
        %v2834 = vsel %vm1237, %v2829, %v2833
        %v2836 = vshrl.u32 %v2724, 16
        %v2838 = vrot.slane %v2836, 4
        %v2839 = vshll.u32 %v2724, 16
        %v2841 = vrot.slane %v2839, 5
        %v2842 = vor.u32 %v2838, %v2841
        %v2843 = vrot.slane %v2842, 4
        %v2845 = vshll.u32 %v2725, 16
        %v2847 = vrot.slane %v2845, 5
        %v2848 = vsel %vm1237, %v2843, %v2847
        %v2849 = vshrl.u32 %v2725, 16
        %v2851 = vrot.slane %v2849, 4
        %v2852 = vor.u32 %v2851, %v2847
        %v2853 = vrot.slane %v2852, 4
        %v2855 = vshll.u32 %v2726, 16
        %v2857 = vrot.slane %v2855, 5
        %v2858 = vsel %vm1237, %v2853, %v2857
        %v2860 = vshrl.u32 %v2727, 16
        %v2862 = vrot.slane %v2860, 4
        %v2863 = vshll.u32 %v2727, 16
        %v2865 = vrot.slane %v2863, 5
        %v2866 = vor.u32 %v2862, %v2865
        %v2867 = vrot.slane %v2866, 4
        %v2869 = vshll.u32 %v2728, 16
        %v2871 = vrot.slane %v2869, 5
        %v2872 = vsel %vm1237, %v2867, %v2871
        %v2873 = vshrl.u32 %v2728, 16
        %v2875 = vrot.slane %v2873, 4
        %v2876 = vor.u32 %v2875, %v2871
        %v2877 = vrot.slane %v2876, 4
        %v2879 = vshll.u32 %v2729, 16
        %v2881 = vrot.slane %v2879, 5
        %v2882 = vsel %vm1237, %v2877, %v2881
        %v2884 = vshrl.u32 %v2730, 16
        %v2886 = vrot.slane %v2884, 4
        %v2887 = vshll.u32 %v2730, 16
        %v2889 = vrot.slane %v2887, 5
        %v2890 = vor.u32 %v2886, %v2889
        %v2891 = vrot.slane %v2890, 4
        %v2893 = vshll.u32 %v2731, 16
        %v2895 = vrot.slane %v2893, 5
        %v2896 = vsel %vm1237, %v2891, %v2895
        %v2897 = vshrl.u32 %v2731, 16
        %v2899 = vrot.slane %v2897, 4
        %v2900 = vor.u32 %v2899, %v2895
        %v2901 = vrot.slane %v2900, 4
        %v2903 = vshll.u32 %v2732, 16
        %v2905 = vrot.slane %v2903, 5
        %v2906 = vsel %vm1237, %v2901, %v2905
        %v2908 = vshrl.u32 %v2733, 16
        %v2910 = vrot.slane %v2908, 4
        %v2911 = vshll.u32 %v2733, 16
        %v2913 = vrot.slane %v2911, 5
        %v2914 = vor.u32 %v2910, %v2913
        %v2915 = vrot.slane %v2914, 4
        %v2917 = vshll.u32 %v2734, 16
        %v2919 = vrot.slane %v2917, 5
        %v2920 = vsel %vm1237, %v2915, %v2919
        %v2921 = vshrl.u32 %v2734, 16
        %v2923 = vrot.slane %v2921, 4
        %v2924 = vor.u32 %v2923, %v2919
        %v2925 = vrot.slane %v2924, 4
        %v2927 = vshll.u32 %v2735, 16
        %v2929 = vrot.slane %v2927, 5
        %v2930 = vsel %vm1237, %v2925, %v2929
        %v2932 = vshrl.u32 %v2736, 16
        %v2934 = vrot.slane %v2932, 4
        %v2935 = vshll.u32 %v2736, 16
        %v2937 = vrot.slane %v2935, 5
        %v2938 = vor.u32 %v2934, %v2937
        %v2939 = vrot.slane %v2938, 4
        %v2941 = vshll.u32 %v2737, 16
        %v2943 = vrot.slane %v2941, 5
        %v2944 = vsel %vm1237, %v2939, %v2943
        %v2945 = vshrl.u32 %v2737, 16
        %v2947 = vrot.slane %v2945, 4
        %v2948 = vor.u32 %v2947, %v2943
        %v2949 = vrot.slane %v2948, 4
        %v2951 = vshll.u32 %v2738, 16
        %v2953 = vrot.slane %v2951, 5
        %v2954 = vsel %vm1237, %v2949, %v2953
        %v2956 = vshrl.u32 %v2739, 16
        %v2958 = vrot.slane %v2956, 4
        %v2959 = vshll.u32 %v2739, 16
        %v2961 = vrot.slane %v2959, 5
        %v2962 = vor.u32 %v2958, %v2961
        %v2963 = vrot.slane %v2962, 4
        %v2965 = vshll.u32 %v2740, 16
        %v2967 = vrot.slane %v2965, 5
        %v2968 = vsel %vm1237, %v2963, %v2967
        %v2969 = vshrl.u32 %v2740, 16
        %v2971 = vrot.slane %v2969, 4
        %v2972 = vor.u32 %v2971, %v2967
        %v2973 = vrot.slane %v2972, 4
        %v2975 = vshll.u32 %v2741, 16
        %v2977 = vrot.slane %v2975, 5
        %v2978 = vsel %vm1237, %v2973, %v2977
        %v2980 = vshrl.u32 %v2742, 16
        %v2982 = vrot.slane %v2980, 4
        %v2983 = vshll.u32 %v2742, 16
        %v2985 = vrot.slane %v2983, 5
        %v2986 = vor.u32 %v2982, %v2985
        %v2987 = vrot.slane %v2986, 4
        %v2989 = vshll.u32 %v2743, 16
        %v2991 = vrot.slane %v2989, 5
        %v2992 = vsel %vm1237, %v2987, %v2991
        %v2993 = vshrl.u32 %v2743, 16
        %v2995 = vrot.slane %v2993, 4
        %v2996 = vor.u32 %v2995, %v2991
        %v2997 = vrot.slane %v2996, 4
        %v2999 = vshll.u32 %v2744, 16
        %v3001 = vrot.slane %v2999, 5
        %v3002 = vsel %vm1237, %v2997, %v3001
        %v3004 = vshrl.u32 %v2745, 16
        %v3006 = vrot.slane %v3004, 4
        %v3007 = vshll.u32 %v2745, 16
        %v3009 = vrot.slane %v3007, 5
        %v3010 = vor.u32 %v3006, %v3009
        %v3011 = vrot.slane %v3010, 4
        %v3013 = vshll.u32 %v2746, 16
        %v3015 = vrot.slane %v3013, 5
        %v3016 = vsel %vm1237, %v3011, %v3015
        %v3017 = vshrl.u32 %v2746, 16
        %v3019 = vrot.slane %v3017, 4
        %v3020 = vor.u32 %v3019, %v3015
        %v3021 = vrot.slane %v3020, 4
        %v3023 = vshll.u32 %v2747, 16
        %v3025 = vrot.slane %v3023, 5
        %v3026 = vsel %vm1237, %v3021, %v3025
        %v3028 = vshrl.u32 %v2748, 16
        %v3030 = vrot.slane %v3028, 4
        %v3031 = vshll.u32 %v2748, 16
        %v3033 = vrot.slane %v3031, 5
        %v3034 = vor.u32 %v3030, %v3033
        %v3035 = vrot.slane %v3034, 4
        %v3037 = vshll.u32 %v2749, 16
        %v3039 = vrot.slane %v3037, 5
        %v3040 = vsel %vm1237, %v3035, %v3039
        %v3041 = vshrl.u32 %v2749, 16
        %v3043 = vrot.slane %v3041, 4
        %v3044 = vor.u32 %v3043, %v3039
        %v3045 = vrot.slane %v3044, 4
        %v3047 = vshll.u32 %v2750, 16
        %v3049 = vrot.slane %v3047, 5
        %v3050 = vsel %vm1237, %v3045, %v3049
        %v3052 = vshrl.u32 %v2751, 16
        %v3054 = vrot.slane %v3052, 4
        %v3055 = vshll.u32 %v2751, 16
        %v3057 = vrot.slane %v3055, 5
        %v3058 = vor.u32 %v3054, %v3057
        %v3059 = vrot.slane %v3058, 4
        %v3061 = vshll.u32 %v2752, 16
        %v3063 = vrot.slane %v3061, 5
        %v3064 = vsel %vm1237, %v3059, %v3063
        %v3065 = vshrl.u32 %v2752, 16
        %v3067 = vrot.slane %v3065, 4
        %v3068 = vor.u32 %v3067, %v3063
        %v3069 = vrot.slane %v3068, 4
        %v3071 = vshll.u32 %v2753, 16
        %v3073 = vrot.slane %v3071, 5
        %v3074 = vsel %vm1237, %v3069, %v3073
        %v3076 = vshrl.u32 %v2754, 16
        %v3078 = vrot.slane %v3076, 4
        %v3079 = vshll.u32 %v2754, 16
        %v3081 = vrot.slane %v3079, 5
        %v3082 = vor.u32 %v3078, %v3081
        %v3083 = vrot.slane %v3082, 4
        %v3085 = vshll.u32 %v2755, 16
        %v3087 = vrot.slane %v3085, 5
        %v3088 = vsel %vm1237, %v3083, %v3087
        %v3089 = vshrl.u32 %v2755, 16
        %v3091 = vrot.slane %v3089, 4
        %v3092 = vor.u32 %v3091, %v3087
        %v3093 = vrot.slane %v3092, 4
        %v3095 = vshll.u32 %v2756, 16
        %v3097 = vrot.slane %v3095, 5
        %v3098 = vsel %vm1237, %v3093, %v3097
        %v3100 = vshrl.u32 %v2757, 16
        %v3102 = vrot.slane %v3100, 4
        %v3103 = vshll.u32 %v2757, 16
        %v3105 = vrot.slane %v3103, 5
        %v3106 = vor.u32 %v3102, %v3105
        %v3107 = vrot.slane %v3106, 4
        %v3109 = vshll.u32 %v2758, 16
        %v3111 = vrot.slane %v3109, 5
        %v3112 = vsel %vm1237, %v3107, %v3111
        %v3113 = vshrl.u32 %v2758, 16
        %v3115 = vrot.slane %v3113, 4
        %v3116 = vor.u32 %v3115, %v3111
        %v3117 = vrot.slane %v3116, 4
        %v3119 = vshll.u32 %v2759, 16
        %v3121 = vrot.slane %v3119, 5
        %v3122 = vsel %vm1237, %v3117, %v3121
        %v3124 = vshrl.u32 %v2760, 16
        %v3126 = vrot.slane %v3124, 4
        %v3127 = vshll.u32 %v2760, 16
        %v3129 = vrot.slane %v3127, 5
        %v3130 = vor.u32 %v3126, %v3129
        %v3131 = vrot.slane %v3130, 4
        %v3133 = vshll.u32 %v2761, 16
        %v3135 = vrot.slane %v3133, 5
        %v3136 = vsel %vm1237, %v3131, %v3135
        %v3137 = vshrl.u32 %v2761, 16
        %v3139 = vrot.slane %v3137, 4
        %v3140 = vor.u32 %v3139, %v3135
        %v3141 = vrot.slane %v3140, 4
        %v3143 = vshll.u32 %v2762, 16
        %v3145 = vrot.slane %v3143, 5
        %v3146 = vsel %vm1237, %v3141, %v3145
        %v3147 = vld [vmem:[%s403] sm:$0xe]
        %v3148 = vld [vmem:[%s403 + $0xc] sm:$0xe]
        %v3149 = vld [vmem:[%s403 + $0x18] sm:$0xe]
        %v3150 = vld [vmem:[%s403 + $0x24] sm:$0xe]
        %v3151 = vld [vmem:[%s403 + $0x30] sm:$0xe]
        %v3152 = vld [vmem:[%s403 + $0x3c] sm:$0xe]
        %v3153 = vld [vmem:[%s403 + $0x48] sm:$0xe]
        %v3154 = vld [vmem:[%s403 + $0x54] sm:$0xe]
        %v3155 = vld [vmem:[%s403 + $0x60] sm:$0xe]
        %v3156 = vld [vmem:[%s403 + $0x6c] sm:$0xe]
        %v3157 = vld [vmem:[%s403 + $0x78] sm:$0xe]
        %v3158 = vld [vmem:[%s403 + $0x84] sm:$0xe]
        %v3159 = vld [vmem:[%s403 + $0x90] sm:$0xe]
        %v3160 = vld [vmem:[%s403 + $0x9c] sm:$0xe]
        %v3161 = vld [vmem:[%s403 + $0xa8] sm:$0xe]
        %v3162 = vld [vmem:[%s403 + $0xb4] sm:$0xe]
        %v3211 = vrot.slane %v3147, 5
        %v3212 = vrot.slane %v3211, 4
        %v3213 = vrot.slane %v2716, 5
        %v3214 = vsel %vm1864, %v3212, %v3213
        %v3215 = vrot.slane %v3213, 4
        %v3216 = vrot.slane %v2717, 5
        %v3217 = vsel %vm1864, %v3215, %v3216
        %v3218 = vrot.slane %v3148, 5
        %v3219 = vrot.slane %v3218, 4
        %v3220 = vrot.slane %v2719, 5
        %v3221 = vsel %vm1864, %v3219, %v3220
        %v3222 = vrot.slane %v3220, 4
        %v3223 = vrot.slane %v2720, 5
        %v3224 = vsel %vm1864, %v3222, %v3223
        %v3225 = vrot.slane %v3149, 5
        %v3226 = vrot.slane %v3225, 4
        %v3227 = vrot.slane %v2722, 5
        %v3228 = vsel %vm1864, %v3226, %v3227
        %v3229 = vrot.slane %v3227, 4
        %v3230 = vrot.slane %v2723, 5
        %v3231 = vsel %vm1864, %v3229, %v3230
        %v3232 = vrot.slane %v3150, 5
        %v3233 = vrot.slane %v3232, 4
        %v3234 = vrot.slane %v2725, 5
        %v3235 = vsel %vm1864, %v3233, %v3234
        %v3236 = vrot.slane %v3234, 4
        %v3237 = vrot.slane %v2726, 5
        %v3238 = vsel %vm1864, %v3236, %v3237
        %v3239 = vrot.slane %v3151, 5
        %v3240 = vrot.slane %v3239, 4
        %v3241 = vrot.slane %v2728, 5
        %v3242 = vsel %vm1864, %v3240, %v3241
        %v3243 = vrot.slane %v3241, 4
        %v3244 = vrot.slane %v2729, 5
        %v3245 = vsel %vm1864, %v3243, %v3244
        %v3246 = vrot.slane %v3152, 5
        %v3247 = vrot.slane %v3246, 4
        %v3248 = vrot.slane %v2731, 5
        %v3249 = vsel %vm1864, %v3247, %v3248
        %v3250 = vrot.slane %v3248, 4
        %v3251 = vrot.slane %v2732, 5
        %v3252 = vsel %vm1864, %v3250, %v3251
        %v3253 = vrot.slane %v3153, 5
        %v3254 = vrot.slane %v3253, 4
        %v3255 = vrot.slane %v2734, 5
        %v3256 = vsel %vm1864, %v3254, %v3255
        %v3257 = vrot.slane %v3255, 4
        %v3258 = vrot.slane %v2735, 5
        %v3259 = vsel %vm1864, %v3257, %v3258
        %v3260 = vrot.slane %v3154, 5
        %v3261 = vrot.slane %v3260, 4
        %v3262 = vrot.slane %v2737, 5
        %v3263 = vsel %vm1864, %v3261, %v3262
        %v3264 = vrot.slane %v3262, 4
        %v3265 = vrot.slane %v2738, 5
        %v3266 = vsel %vm1864, %v3264, %v3265
        %v3267 = vrot.slane %v3155, 5
        %v3268 = vrot.slane %v3267, 4
        %v3269 = vrot.slane %v2740, 5
        %v3270 = vsel %vm1864, %v3268, %v3269
        %v3271 = vrot.slane %v3269, 4
        %v3272 = vrot.slane %v2741, 5
        %v3273 = vsel %vm1864, %v3271, %v3272
        %v3274 = vrot.slane %v3156, 5
        %v3275 = vrot.slane %v3274, 4
        %v3276 = vrot.slane %v2743, 5
        %v3277 = vsel %vm1864, %v3275, %v3276
        %v3278 = vrot.slane %v3276, 4
        %v3279 = vrot.slane %v2744, 5
        %v3280 = vsel %vm1864, %v3278, %v3279
        %v3281 = vrot.slane %v3157, 5
        %v3282 = vrot.slane %v3281, 4
        %v3283 = vrot.slane %v2746, 5
        %v3284 = vsel %vm1864, %v3282, %v3283
        %v3285 = vrot.slane %v3283, 4
        %v3286 = vrot.slane %v2747, 5
        %v3287 = vsel %vm1864, %v3285, %v3286
        %v3288 = vrot.slane %v3158, 5
        %v3289 = vrot.slane %v3288, 4
        %v3290 = vrot.slane %v2749, 5
        %v3291 = vsel %vm1864, %v3289, %v3290
        %v3292 = vrot.slane %v3290, 4
        %v3293 = vrot.slane %v2750, 5
        %v3294 = vsel %vm1864, %v3292, %v3293
        %v3295 = vrot.slane %v3159, 5
        %v3296 = vrot.slane %v3295, 4
        %v3297 = vrot.slane %v2752, 5
        %v3298 = vsel %vm1864, %v3296, %v3297
        %v3299 = vrot.slane %v3297, 4
        %v3300 = vrot.slane %v2753, 5
        %v3301 = vsel %vm1864, %v3299, %v3300
        %v3302 = vrot.slane %v3160, 5
        %v3303 = vrot.slane %v3302, 4
        %v3304 = vrot.slane %v2755, 5
        %v3305 = vsel %vm1864, %v3303, %v3304
        %v3306 = vrot.slane %v3304, 4
        %v3307 = vrot.slane %v2756, 5
        %v3308 = vsel %vm1864, %v3306, %v3307
        %v3309 = vrot.slane %v3161, 5
        %v3310 = vrot.slane %v3309, 4
        %v3311 = vrot.slane %v2758, 5
        %v3312 = vsel %vm1864, %v3310, %v3311
        %v3313 = vrot.slane %v3311, 4
        %v3314 = vrot.slane %v2759, 5
        %v3315 = vsel %vm1864, %v3313, %v3314
        %v3316 = vrot.slane %v3162, 5
        %v3317 = vrot.slane %v3316, 4
        %v3318 = vrot.slane %v2761, 5
        %v3319 = vsel %vm1864, %v3317, %v3318
        %v3320 = vrot.slane %v3318, 4
        %v3321 = vrot.slane %v2762, 5
        %v3322 = vsel %vm1864, %v3320, %v3321
        %v3323 = vunpack.c.l.b16 %v2776
        %v3324 = vunpack.c.l.b16 %v2786
        %v3325 = vunpack.c.l.b16 %v2800
        %v3326 = vunpack.c.l.b16 %v2810
        %v3327 = vunpack.c.l.b16 %v2824
        %v3328 = vunpack.c.l.b16 %v2834
        %v3329 = vunpack.c.l.b16 %v2848
        %v3330 = vunpack.c.l.b16 %v2858
        %v3331 = vunpack.c.l.b16 %v2872
        %v3332 = vunpack.c.l.b16 %v2882
        %v3333 = vunpack.c.l.b16 %v2896
        %v3334 = vunpack.c.l.b16 %v2906
        %v3335 = vunpack.c.l.b16 %v2920
        %v3336 = vunpack.c.l.b16 %v2930
        %v3337 = vunpack.c.l.b16 %v2944
        %v3338 = vunpack.c.l.b16 %v2954
        %v3339 = vunpack.c.l.b16 %v2968
        %v3340 = vunpack.c.l.b16 %v2978
        %v3341 = vunpack.c.l.b16 %v2992
        %v3342 = vunpack.c.l.b16 %v3002
        %v3343 = vunpack.c.l.b16 %v3016
        %v3344 = vunpack.c.l.b16 %v3026
        %v3345 = vunpack.c.l.b16 %v3040
        %v3346 = vunpack.c.l.b16 %v3050
        %v3347 = vunpack.c.l.b16 %v3064
        %v3348 = vunpack.c.l.b16 %v3074
        %v3349 = vunpack.c.l.b16 %v3088
        %v3350 = vunpack.c.l.b16 %v3098
        %v3351 = vunpack.c.l.b16 %v3112
        %v3352 = vunpack.c.l.b16 %v3122
        %v3353 = vunpack.c.l.b16 %v3136
        %v3354 = vunpack.c.l.b16 %v3146
        %v3355 = vpack.c.b16 %v3324, %v3323
        %v3356 = vpack.c.b16 %v3326, %v3325
        %v3357 = vpack.c.b16 %v3328, %v3327
        %v3358 = vpack.c.b16 %v3330, %v3329
        %v3359 = vpack.c.b16 %v3332, %v3331
        %v3360 = vpack.c.b16 %v3334, %v3333
        %v3361 = vpack.c.b16 %v3336, %v3335
        %v3362 = vpack.c.b16 %v3338, %v3337
        %v3363 = vpack.c.b16 %v3340, %v3339
        %v3364 = vpack.c.b16 %v3342, %v3341
        %v3365 = vpack.c.b16 %v3344, %v3343
        %v3366 = vpack.c.b16 %v3346, %v3345
        %v3367 = vpack.c.b16 %v3348, %v3347
        %v3368 = vpack.c.b16 %v3350, %v3349
        %v3369 = vpack.c.b16 %v3352, %v3351
        %v3370 = vpack.c.b16 %v3354, %v3353
        %v3387 = vunpack.c.l.b16 %v3214
        %v3388 = vunpack.c.l.b16 %v3217
        %v3389 = vunpack.c.l.b16 %v3221
        %v3390 = vunpack.c.l.b16 %v3224
        %v3391 = vunpack.c.l.b16 %v3228
        %v3392 = vunpack.c.l.b16 %v3231
        %v3393 = vunpack.c.l.b16 %v3235
        %v3394 = vunpack.c.l.b16 %v3238
        %v3395 = vunpack.c.l.b16 %v3242
        %v3396 = vunpack.c.l.b16 %v3245
        %v3397 = vunpack.c.l.b16 %v3249
        %v3398 = vunpack.c.l.b16 %v3252
        %v3399 = vunpack.c.l.b16 %v3256
        %v3400 = vunpack.c.l.b16 %v3259
        %v3401 = vunpack.c.l.b16 %v3263
        %v3402 = vunpack.c.l.b16 %v3266
        %v3403 = vunpack.c.l.b16 %v3270
        %v3404 = vunpack.c.l.b16 %v3273
        %v3405 = vunpack.c.l.b16 %v3277
        %v3406 = vunpack.c.l.b16 %v3280
        %v3407 = vunpack.c.l.b16 %v3284
        %v3408 = vunpack.c.l.b16 %v3287
        %v3409 = vunpack.c.l.b16 %v3291
        %v3410 = vunpack.c.l.b16 %v3294
        %v3411 = vunpack.c.l.b16 %v3298
        %v3412 = vunpack.c.l.b16 %v3301
        %v3413 = vunpack.c.l.b16 %v3305
        %v3414 = vunpack.c.l.b16 %v3308
        %v3415 = vunpack.c.l.b16 %v3312
        %v3416 = vunpack.c.l.b16 %v3315
        %v3417 = vunpack.c.l.b16 %v3319
        %v3418 = vunpack.c.l.b16 %v3322
        %v3419 = vpack.c.b16 %v3388, %v3387
        %v3420 = vpack.c.b16 %v3390, %v3389
        %v3421 = vpack.c.b16 %v3392, %v3391
        %v3422 = vpack.c.b16 %v3394, %v3393
        %v3423 = vpack.c.b16 %v3396, %v3395
        %v3424 = vpack.c.b16 %v3398, %v3397
        %v3425 = vpack.c.b16 %v3400, %v3399
        %v3426 = vpack.c.b16 %v3402, %v3401
        %v3427 = vpack.c.b16 %v3404, %v3403
        %v3428 = vpack.c.b16 %v3406, %v3405
        %v3429 = vpack.c.b16 %v3408, %v3407
        %v3430 = vpack.c.b16 %v3410, %v3409
        %v3431 = vpack.c.b16 %v3412, %v3411
        %v3432 = vpack.c.b16 %v3414, %v3413
        %v3433 = vpack.c.b16 %v3416, %v3415
        %v3434 = vpack.c.b16 %v3418, %v3417
        %v3451 = vld [vmem:[#allocation7 + $0x100] sm:$0xf]
        %v3452 = vld [vmem:[#allocation7 + $0x104] sm:$0xf]
        %v3453 = vld [vmem:[#allocation7 + $0x108] sm:$0xf]
        %v3454 = vld [vmem:[#allocation7 + $0x10c] sm:$0xf]
        %v3455 = vld [vmem:[#allocation7 + $0x110] sm:$0xf]
        %v3456 = vld [vmem:[#allocation7 + $0x114] sm:$0xf]
        %v3457 = vld [vmem:[#allocation7 + $0x118] sm:$0xf]
        %v3458 = vld [vmem:[#allocation7 + $0x11c] sm:$0xf]
        %v3459 = vld [vmem:[#allocation7 + $0x120] sm:$0xf]
        %v3460 = vld [vmem:[#allocation7 + $0x124] sm:$0xf]
        %v3461 = vld [vmem:[#allocation7 + $0x128] sm:$0xf]
        %v3462 = vld [vmem:[#allocation7 + $0x12c] sm:$0xf]
        %v3463 = vld [vmem:[#allocation7 + $0x130] sm:$0xf]
        %v3464 = vld [vmem:[#allocation7 + $0x134] sm:$0xf]
        %v3465 = vld [vmem:[#allocation7 + $0x138] sm:$0xf]
        %v3466 = vld [vmem:[#allocation7 + $0x13c] sm:$0xf]
        %v3467 = vld [vmem:[#allocation7 + $0x140] sm:$0xf]
        %v3468 = vld [vmem:[#allocation7 + $0x144] sm:$0xf]
        %v3469 = vld [vmem:[#allocation7 + $0x148] sm:$0xf]
        %v3470 = vld [vmem:[#allocation7 + $0x14c] sm:$0xf]
        %v3471 = vld [vmem:[#allocation7 + $0x150] sm:$0xf]
        %v3472 = vld [vmem:[#allocation7 + $0x154] sm:$0xf]
        %v3473 = vld [vmem:[#allocation7 + $0x158] sm:$0xf]
        %v3474 = vld [vmem:[#allocation7 + $0x15c] sm:$0xf]
        %v3475 = vld [vmem:[#allocation7 + $0x160] sm:$0xf]
        %v3476 = vld [vmem:[#allocation7 + $0x164] sm:$0xf]
        %v3477 = vld [vmem:[#allocation7 + $0x168] sm:$0xf]
        %v3478 = vld [vmem:[#allocation7 + $0x16c] sm:$0xf]
        %v3479 = vld [vmem:[#allocation7 + $0x170] sm:$0xf]
        %v3480 = vld [vmem:[#allocation7 + $0x174] sm:$0xf]
        %v3481 = vld [vmem:[#allocation7 + $0x178] sm:$0xf]
        %v3482 = vld [vmem:[#allocation7 + $0x17c] sm:$0xf]
        %v3515 = vunpack.c.l.b16 %v3451
        %v3516 = vunpack.c.l.b16 %v3452
        %v3517 = vunpack.c.l.b16 %v3453
        %v3518 = vunpack.c.l.b16 %v3454
        %v3519 = vunpack.c.l.b16 %v3455
        %v3520 = vunpack.c.l.b16 %v3456
        %v3521 = vunpack.c.l.b16 %v3457
        %v3522 = vunpack.c.l.b16 %v3458
        %v3523 = vunpack.c.l.b16 %v3459
        %v3524 = vunpack.c.l.b16 %v3460
        %v3525 = vunpack.c.l.b16 %v3461
        %v3526 = vunpack.c.l.b16 %v3462
        %v3527 = vunpack.c.l.b16 %v3463
        %v3528 = vunpack.c.l.b16 %v3464
        %v3529 = vunpack.c.l.b16 %v3465
        %v3530 = vunpack.c.l.b16 %v3466
        %v3531 = vunpack.c.l.b16 %v3467
        %v3532 = vunpack.c.l.b16 %v3468
        %v3533 = vunpack.c.l.b16 %v3469
        %v3534 = vunpack.c.l.b16 %v3470
        %v3535 = vunpack.c.l.b16 %v3471
        %v3536 = vunpack.c.l.b16 %v3472
        %v3537 = vunpack.c.l.b16 %v3473
        %v3538 = vunpack.c.l.b16 %v3474
        %v3539 = vunpack.c.l.b16 %v3475
        %v3540 = vunpack.c.l.b16 %v3476
        %v3541 = vunpack.c.l.b16 %v3477
        %v3542 = vunpack.c.l.b16 %v3478
        %v3543 = vunpack.c.l.b16 %v3479
        %v3544 = vunpack.c.l.b16 %v3480
        %v3545 = vunpack.c.l.b16 %v3481
        %v3546 = vunpack.c.l.b16 %v3482
        %v3547 = vpack.c.b16 %v3516, %v3515
        %v3548 = vpack.c.b16 %v3518, %v3517
        %v3549 = vpack.c.b16 %v3520, %v3519
        %v3550 = vpack.c.b16 %v3522, %v3521
        %v3551 = vpack.c.b16 %v3524, %v3523
        %v3552 = vpack.c.b16 %v3526, %v3525
        %v3553 = vpack.c.b16 %v3528, %v3527
        %v3554 = vpack.c.b16 %v3530, %v3529
        %v3555 = vpack.c.b16 %v3532, %v3531
        %v3556 = vpack.c.b16 %v3534, %v3533
        %v3557 = vpack.c.b16 %v3536, %v3535
        %v3558 = vpack.c.b16 %v3538, %v3537
        %v3559 = vpack.c.b16 %v3540, %v3539
        %v3560 = vpack.c.b16 %v3542, %v3541
        %v3561 = vpack.c.b16 %v3544, %v3543
        %v3562 = vpack.c.b16 %v3546, %v3545
        %3579 = vmatprep.subr.bf16.mxu0 0
        %3580 = vmatpush1.bf16.msra.mxu0 %v3547
        %3581 = vmatprep.subr.bf16.mxu0 0
        %3582 = vmatpush1.bf16.msra.mxu0 %v3548
        %3583 = vmatprep.subr.bf16.mxu0 0
        %3584 = vmatpush1.bf16.msra.mxu0 %v3549
        %3585 = vmatprep.subr.bf16.mxu0 0
        %3586 = vmatpush1.bf16.msra.mxu0 %v3550
        %3587 = vmatprep.subr.bf16.mxu0 0
        %3588 = vmatpush1.bf16.msra.mxu0 %v3551
        %3589 = vmatprep.subr.bf16.mxu0 0
        %3590 = vmatpush1.bf16.msra.mxu0 %v3552
        %3591 = vmatprep.subr.bf16.mxu0 0
        %3592 = vmatpush1.bf16.msra.mxu0 %v3553
        %3593 = vmatprep.subr.bf16.mxu0 0
        %3594 = vmatpush1.bf16.msra.mxu0 %v3554
        %3595 = vmatprep.subr.bf16.mxu0 0
        %3596 = vmatpush1.bf16.msra.mxu0 %v3555
        %3597 = vmatprep.subr.bf16.mxu0 0
        %3598 = vmatpush1.bf16.msra.mxu0 %v3556
        %3599 = vmatprep.subr.bf16.mxu0 0
        %3600 = vmatpush1.bf16.msra.mxu0 %v3557
        %3601 = vmatprep.subr.bf16.mxu0 0
        %3602 = vmatpush1.bf16.msra.mxu0 %v3558
        %3603 = vmatprep.subr.bf16.mxu0 0
        %3604 = vmatpush1.bf16.msra.mxu0 %v3559
        %3605 = vmatprep.subr.bf16.mxu0 0
        %3606 = vmatpush1.bf16.msra.mxu0 %v3560
        %3607 = vmatprep.subr.bf16.mxu0 0
        %3608 = vmatpush1.bf16.msra.mxu0 %v3561
        %3609 = vmatprep.subr.bf16.mxu0 0
        %3610 = vmatpush1.bf16.msra.mxu0 %v3562
        %3611 = vmatprep.mubr.bf16.mxu0 %v3419
        %3612 = vmatmul.mubr.bf16.gmra.mrb[0].mxu0 %v3355
        %v3613 = vpop.f32.mrb[0].mxu0
        %v3614 = vadd.f32 0.0, %v3613
        %v3615 = vpop.f32.mrb[0].mxu0
        %v3616 = vpop.f32.mrb[0].mxu0
        %v3617 = vadd.f32 0.0, %v3616
        %v3618 = vpop.f32.mrb[0].mxu0
        %3619 = vmatprep.mubr.bf16.mxu0 %v3420
        %3620 = vmatmul.mubr.bf16.gmra.mrb[0].mxu0 %v3356
        %v3621 = vpop.f32.mrb[0].mxu0
        %v3622 = vadd.f32 0.0, %v3621
        %v3623 = vpop.f32.mrb[0].mxu0
        %v3624 = vpop.f32.mrb[0].mxu0
        %v3625 = vadd.f32 0.0, %v3624
        %v3626 = vpop.f32.mrb[0].mxu0
        %3627 = vmatprep.mubr.bf16.mxu0 %v3421
        %3628 = vmatmul.mubr.bf16.gmra.mrb[0].mxu0 %v3357
        %v3629 = vpop.f32.mrb[0].mxu0
        %v3630 = vadd.f32 0.0, %v3629
        %v3631 = vpop.f32.mrb[0].mxu0
        %v3632 = vpop.f32.mrb[0].mxu0
        %v3633 = vadd.f32 0.0, %v3632
        %v3634 = vpop.f32.mrb[0].mxu0
        %3635 = vmatprep.mubr.bf16.mxu0 %v3422
        %3636 = vmatmul.mubr.bf16.gmra.mrb[0].mxu0 %v3358
        %v3637 = vpop.f32.mrb[0].mxu0
        %v3638 = vadd.f32 0.0, %v3637
        %v3639 = vpop.f32.mrb[0].mxu0
        %v3640 = vpop.f32.mrb[0].mxu0
        %v3641 = vadd.f32 0.0, %v3640
        %v3642 = vpop.f32.mrb[0].mxu0
        %3643 = vmatprep.mubr.bf16.mxu0 %v3423
        %3644 = vmatmul.mubr.bf16.gmra.mrb[0].mxu0 %v3359
        %v3645 = vpop.f32.mrb[0].mxu0
        %v3646 = vadd.f32 0.0, %v3645
        %v3647 = vpop.f32.mrb[0].mxu0
        %v3648 = vpop.f32.mrb[0].mxu0
        %v3649 = vadd.f32 0.0, %v3648
        %v3650 = vpop.f32.mrb[0].mxu0
        %3651 = vmatprep.mubr.bf16.mxu0 %v3424
        %3652 = vmatmul.mubr.bf16.gmra.mrb[0].mxu0 %v3360
        %v3653 = vpop.f32.mrb[0].mxu0
        %v3654 = vadd.f32 0.0, %v3653
        %v3655 = vpop.f32.mrb[0].mxu0
        %v3656 = vpop.f32.mrb[0].mxu0
        %v3657 = vadd.f32 0.0, %v3656
        %v3658 = vpop.f32.mrb[0].mxu0
        %3659 = vmatprep.mubr.bf16.mxu0 %v3425
        %3660 = vmatmul.mubr.bf16.gmra.mrb[0].mxu0 %v3361
        %v3661 = vpop.f32.mrb[0].mxu0
        %v3662 = vadd.f32 0.0, %v3661
        %v3663 = vpop.f32.mrb[0].mxu0
        %v3664 = vpop.f32.mrb[0].mxu0
        %v3665 = vadd.f32 0.0, %v3664
        %v3666 = vpop.f32.mrb[0].mxu0
        %3667 = vmatprep.mubr.bf16.mxu0 %v3426
        %3668 = vmatmul.mubr.bf16.gmra.mrb[0].mxu0 %v3362
        %v3669 = vpop.f32.mrb[0].mxu0
        %v3670 = vadd.f32 0.0, %v3669
        %v3671 = vpop.f32.mrb[0].mxu0
        %v3672 = vpop.f32.mrb[0].mxu0
        %v3673 = vadd.f32 0.0, %v3672
        %v3674 = vpop.f32.mrb[0].mxu0
        %3675 = vmatprep.mubr.bf16.mxu0 %v3427
        %3676 = vmatmul.mubr.bf16.gmra.mrb[0].mxu0 %v3363
        %v3677 = vpop.f32.mrb[0].mxu0
        %v3678 = vadd.f32 0.0, %v3677
        %v3679 = vpop.f32.mrb[0].mxu0
        %v3680 = vpop.f32.mrb[0].mxu0
        %v3681 = vadd.f32 0.0, %v3680
        %v3682 = vpop.f32.mrb[0].mxu0
        %3683 = vmatprep.mubr.bf16.mxu0 %v3428
        %3684 = vmatmul.mubr.bf16.gmra.mrb[0].mxu0 %v3364
        %v3685 = vpop.f32.mrb[0].mxu0
        %v3686 = vadd.f32 0.0, %v3685
        %v3687 = vpop.f32.mrb[0].mxu0
        %v3688 = vpop.f32.mrb[0].mxu0
        %v3689 = vadd.f32 0.0, %v3688
        %v3690 = vpop.f32.mrb[0].mxu0
        %3691 = vmatprep.mubr.bf16.mxu0 %v3429
        %3692 = vmatmul.mubr.bf16.gmra.mrb[0].mxu0 %v3365
        %v3693 = vpop.f32.mrb[0].mxu0
        %v3694 = vadd.f32 0.0, %v3693
        %v3695 = vpop.f32.mrb[0].mxu0
        %v3696 = vpop.f32.mrb[0].mxu0
        %v3697 = vadd.f32 0.0, %v3696
        %v3698 = vpop.f32.mrb[0].mxu0
        %3699 = vmatprep.mubr.bf16.mxu0 %v3430
        %3700 = vmatmul.mubr.bf16.gmra.mrb[0].mxu0 %v3366
        %v3701 = vpop.f32.mrb[0].mxu0
        %v3702 = vadd.f32 0.0, %v3701
        %v3703 = vpop.f32.mrb[0].mxu0
        %v3704 = vpop.f32.mrb[0].mxu0
        %v3705 = vadd.f32 0.0, %v3704
        %v3706 = vpop.f32.mrb[0].mxu0
        %3707 = vmatprep.mubr.bf16.mxu0 %v3431
        %3708 = vmatmul.mubr.bf16.gmra.mrb[0].mxu0 %v3367
        %v3709 = vpop.f32.mrb[0].mxu0
        %v3710 = vadd.f32 0.0, %v3709
        %v3711 = vpop.f32.mrb[0].mxu0
        %v3712 = vpop.f32.mrb[0].mxu0
        %v3713 = vadd.f32 0.0, %v3712
        %v3714 = vpop.f32.mrb[0].mxu0
        %3715 = vmatprep.mubr.bf16.mxu0 %v3432
        %3716 = vmatmul.mubr.bf16.gmra.mrb[0].mxu0 %v3368
        %v3717 = vpop.f32.mrb[0].mxu0
        %v3718 = vadd.f32 0.0, %v3717
        %v3719 = vpop.f32.mrb[0].mxu0
        %v3720 = vpop.f32.mrb[0].mxu0
        %v3721 = vadd.f32 0.0, %v3720
        %v3722 = vpop.f32.mrb[0].mxu0
        %3723 = vmatprep.mubr.bf16.mxu0 %v3433
        %3724 = vmatmul.mubr.bf16.gmra.mrb[0].mxu0 %v3369
        %v3725 = vpop.f32.mrb[0].mxu0
        %v3726 = vadd.f32 0.0, %v3725
        %v3727 = vpop.f32.mrb[0].mxu0
        %v3728 = vpop.f32.mrb[0].mxu0
        %v3729 = vadd.f32 0.0, %v3728
        %v3730 = vpop.f32.mrb[0].mxu0
        %3731 = vmatprep.mubr.bf16.mxu0 %v3434
        %3732 = vmatmul.mubr.bf16.gmra.mrb[0].mxu0 %v3370
        %v3733 = vpop.f32.mrb[0].mxu0
        %v3734 = vadd.f32 0.0, %v3733
        %v3735 = vpop.f32.mrb[0].mxu0
        %v3736 = vpop.f32.mrb[0].mxu0
        %v3737 = vadd.f32 0.0, %v3736
        %v3738 = vpop.f32.mrb[0].mxu0
        %3739 = vdwg.mxu0
        %v3740 = vadd.f32 %v2589, %v3614
        %v3741 = vadd.f32 %v2592, %v3617
        %v3742 = vadd.f32 %v2597, %v3622
        %v3743 = vadd.f32 %v2600, %v3625
        %v3744 = vadd.f32 %v2605, %v3630
        %v3745 = vadd.f32 %v2608, %v3633
        %v3746 = vadd.f32 %v2613, %v3638
        %v3747 = vadd.f32 %v2616, %v3641
        %v3748 = vadd.f32 %v2621, %v3646
        %v3749 = vadd.f32 %v2624, %v3649
        %v3750 = vadd.f32 %v2629, %v3654
        %v3751 = vadd.f32 %v2632, %v3657
        %v3752 = vadd.f32 %v2637, %v3662
        %v3753 = vadd.f32 %v2640, %v3665
        %v3754 = vadd.f32 %v2645, %v3670
        %v3755 = vadd.f32 %v2648, %v3673
        %v3756 = vadd.f32 %v2653, %v3678
        %v3757 = vadd.f32 %v2656, %v3681
        %v3758 = vadd.f32 %v2661, %v3686
        %v3759 = vadd.f32 %v2664, %v3689
        %v3760 = vadd.f32 %v2669, %v3694
        %v3761 = vadd.f32 %v2672, %v3697
        %v3762 = vadd.f32 %v2677, %v3702
        %v3763 = vadd.f32 %v2680, %v3705
        %v3764 = vadd.f32 %v2685, %v3710
        %v3765 = vadd.f32 %v2688, %v3713
        %v3766 = vadd.f32 %v2693, %v3718
        %v3767 = vadd.f32 %v2696, %v3721
        %v3768 = vadd.f32 %v2701, %v3726
        %v3769 = vadd.f32 %v2704, %v3729
        %v3770 = vadd.f32 %v2709, %v3734
        %v3771 = vadd.f32 %v2712, %v3737
        %s3772 = scalar_lea.vmem [#allocation2], 24
        %v3773 = vld [vmem:[%s3772] sm:$0xf]
        %v3774 = vld [vmem:[%s3772 + $0x4] sm:$0xf]
        %v3775 = vld [vmem:[%s3772 + $0xc] sm:$0xf]
        %v3776 = vld [vmem:[%s3772 + $0x10] sm:$0xf]
        %v3777 = vld [vmem:[%s3772 + $0x18] sm:$0xf]
        %v3778 = vld [vmem:[%s3772 + $0x1c] sm:$0xf]
        %v3779 = vld [vmem:[%s3772 + $0x24] sm:$0xf]
        %v3780 = vld [vmem:[%s3772 + $0x28] sm:$0xf]
        %v3781 = vld [vmem:[%s3772 + $0x30] sm:$0xf]
        %v3782 = vld [vmem:[%s3772 + $0x34] sm:$0xf]
        %v3783 = vld [vmem:[%s3772 + $0x3c] sm:$0xf]
        %v3784 = vld [vmem:[%s3772 + $0x40] sm:$0xf]
        %v3785 = vld [vmem:[%s3772 + $0x48] sm:$0xf]
        %v3786 = vld [vmem:[%s3772 + $0x4c] sm:$0xf]
        %v3787 = vld [vmem:[%s3772 + $0x54] sm:$0xf]
        %v3788 = vld [vmem:[%s3772 + $0x58] sm:$0xf]
        %v3789 = vld [vmem:[%s3772 + $0x60] sm:$0xf]
        %v3790 = vld [vmem:[%s3772 + $0x64] sm:$0xf]
        %v3791 = vld [vmem:[%s3772 + $0x6c] sm:$0xf]
        %v3792 = vld [vmem:[%s3772 + $0x70] sm:$0xf]
        %v3793 = vld [vmem:[%s3772 + $0x78] sm:$0xf]
        %v3794 = vld [vmem:[%s3772 + $0x7c] sm:$0xf]
        %v3795 = vld [vmem:[%s3772 + $0x84] sm:$0xf]
        %v3796 = vld [vmem:[%s3772 + $0x88] sm:$0xf]
        %v3797 = vld [vmem:[%s3772 + $0x90] sm:$0xf]
        %v3798 = vld [vmem:[%s3772 + $0x94] sm:$0xf]
        %v3799 = vld [vmem:[%s3772 + $0x9c] sm:$0xf]
        %v3800 = vld [vmem:[%s3772 + $0xa0] sm:$0xf]
        %v3801 = vld [vmem:[%s3772 + $0xa8] sm:$0xf]
        %v3802 = vld [vmem:[%s3772 + $0xac] sm:$0xf]
        %v3803 = vld [vmem:[%s3772 + $0xb4] sm:$0xf]
        %v3804 = vld [vmem:[%s3772 + $0xb8] sm:$0xf]
        %v3805 = vld [vmem:[%s3772 + $0x8] sm:$0x1]
        %v3806 = vld [vmem:[%s3772 + $0x14] sm:$0x1]
        %v3807 = vld [vmem:[%s3772 + $0x20] sm:$0x1]
        %v3808 = vld [vmem:[%s3772 + $0x2c] sm:$0x1]
        %v3809 = vld [vmem:[%s3772 + $0x38] sm:$0x1]
        %v3810 = vld [vmem:[%s3772 + $0x44] sm:$0x1]
        %v3811 = vld [vmem:[%s3772 + $0x50] sm:$0x1]
        %v3812 = vld [vmem:[%s3772 + $0x5c] sm:$0x1]
        %v3813 = vld [vmem:[%s3772 + $0x68] sm:$0x1]
        %v3814 = vld [vmem:[%s3772 + $0x74] sm:$0x1]
        %v3815 = vld [vmem:[%s3772 + $0x80] sm:$0x1]
        %v3816 = vld [vmem:[%s3772 + $0x8c] sm:$0x1]
        %v3817 = vld [vmem:[%s3772 + $0x98] sm:$0x1]
        %v3818 = vld [vmem:[%s3772 + $0xa4] sm:$0x1]
        %v3819 = vld [vmem:[%s3772 + $0xb0] sm:$0x1]
        %v3820 = vld [vmem:[%s3772 + $0xbc] sm:$0x1]
        %v3822 = vshrl.u32 %v3773, 16
        %v3824 = vrot.slane %v3822, 4
        %v3825 = vshll.u32 %v3773, 16
        %v3827 = vrot.slane %v3825, 5
        %v3828 = vor.u32 %v3824, %v3827
        %v3829 = vrot.slane %v3828, 4
        %v3831 = vshll.u32 %v3774, 16
        %v3833 = vrot.slane %v3831, 5
        %v3834 = vsel %vm1237, %v3829, %v3833
        %v3835 = vshrl.u32 %v3774, 16
        %v3837 = vrot.slane %v3835, 4
        %v3838 = vor.u32 %v3837, %v3833
        %v3839 = vrot.slane %v3838, 4
        %v3841 = vshll.u32 %v3805, 16
        %v3843 = vrot.slane %v3841, 5
        %v3844 = vsel %vm1237, %v3839, %v3843
        %v3846 = vshrl.u32 %v3775, 16
        %v3848 = vrot.slane %v3846, 4
        %v3849 = vshll.u32 %v3775, 16
        %v3851 = vrot.slane %v3849, 5
        %v3852 = vor.u32 %v3848, %v3851
        %v3853 = vrot.slane %v3852, 4
        %v3855 = vshll.u32 %v3776, 16
        %v3857 = vrot.slane %v3855, 5
        %v3858 = vsel %vm1237, %v3853, %v3857
        %v3859 = vshrl.u32 %v3776, 16
        %v3861 = vrot.slane %v3859, 4
        %v3862 = vor.u32 %v3861, %v3857
        %v3863 = vrot.slane %v3862, 4
        %v3865 = vshll.u32 %v3806, 16
        %v3867 = vrot.slane %v3865, 5
        %v3868 = vsel %vm1237, %v3863, %v3867
        %v3870 = vshrl.u32 %v3777, 16
        %v3872 = vrot.slane %v3870, 4
        %v3873 = vshll.u32 %v3777, 16
        %v3875 = vrot.slane %v3873, 5
        %v3876 = vor.u32 %v3872, %v3875
        %v3877 = vrot.slane %v3876, 4
        %v3879 = vshll.u32 %v3778, 16
        %v3881 = vrot.slane %v3879, 5
        %v3882 = vsel %vm1237, %v3877, %v3881
        %v3883 = vshrl.u32 %v3778, 16
        %v3885 = vrot.slane %v3883, 4
        %v3886 = vor.u32 %v3885, %v3881
        %v3887 = vrot.slane %v3886, 4
        %v3889 = vshll.u32 %v3807, 16
        %v3891 = vrot.slane %v3889, 5
        %v3892 = vsel %vm1237, %v3887, %v3891
        %v3894 = vshrl.u32 %v3779, 16
        %v3896 = vrot.slane %v3894, 4
        %v3897 = vshll.u32 %v3779, 16
        %v3899 = vrot.slane %v3897, 5
        %v3900 = vor.u32 %v3896, %v3899
        %v3901 = vrot.slane %v3900, 4
        %v3903 = vshll.u32 %v3780, 16
        %v3905 = vrot.slane %v3903, 5
        %v3906 = vsel %vm1237, %v3901, %v3905
        %v3907 = vshrl.u32 %v3780, 16
        %v3909 = vrot.slane %v3907, 4
        %v3910 = vor.u32 %v3909, %v3905
        %v3911 = vrot.slane %v3910, 4
        %v3913 = vshll.u32 %v3808, 16
        %v3915 = vrot.slane %v3913, 5
        %v3916 = vsel %vm1237, %v3911, %v3915
        %v3918 = vshrl.u32 %v3781, 16
        %v3920 = vrot.slane %v3918, 4
        %v3921 = vshll.u32 %v3781, 16
        %v3923 = vrot.slane %v3921, 5
        %v3924 = vor.u32 %v3920, %v3923
        %v3925 = vrot.slane %v3924, 4
        %v3927 = vshll.u32 %v3782, 16
        %v3929 = vrot.slane %v3927, 5
        %v3930 = vsel %vm1237, %v3925, %v3929
        %v3931 = vshrl.u32 %v3782, 16
        %v3933 = vrot.slane %v3931, 4
        %v3934 = vor.u32 %v3933, %v3929
        %v3935 = vrot.slane %v3934, 4
        %v3937 = vshll.u32 %v3809, 16
        %v3939 = vrot.slane %v3937, 5
        %v3940 = vsel %vm1237, %v3935, %v3939
        %v3942 = vshrl.u32 %v3783, 16
        %v3944 = vrot.slane %v3942, 4
        %v3945 = vshll.u32 %v3783, 16
        %v3947 = vrot.slane %v3945, 5
        %v3948 = vor.u32 %v3944, %v3947
        %v3949 = vrot.slane %v3948, 4
        %v3951 = vshll.u32 %v3784, 16
        %v3953 = vrot.slane %v3951, 5
        %v3954 = vsel %vm1237, %v3949, %v3953
        %v3955 = vshrl.u32 %v3784, 16
        %v3957 = vrot.slane %v3955, 4
        %v3958 = vor.u32 %v3957, %v3953
        %v3959 = vrot.slane %v3958, 4
        %v3961 = vshll.u32 %v3810, 16
        %v3963 = vrot.slane %v3961, 5
        %v3964 = vsel %vm1237, %v3959, %v3963
        %v3966 = vshrl.u32 %v3785, 16
        %v3968 = vrot.slane %v3966, 4
        %v3969 = vshll.u32 %v3785, 16
        %v3971 = vrot.slane %v3969, 5
        %v3972 = vor.u32 %v3968, %v3971
        %v3973 = vrot.slane %v3972, 4
        %v3975 = vshll.u32 %v3786, 16
        %v3977 = vrot.slane %v3975, 5
        %v3978 = vsel %vm1237, %v3973, %v3977
        %v3979 = vshrl.u32 %v3786, 16
        %v3981 = vrot.slane %v3979, 4
        %v3982 = vor.u32 %v3981, %v3977
        %v3983 = vrot.slane %v3982, 4
        %v3985 = vshll.u32 %v3811, 16
        %v3987 = vrot.slane %v3985, 5
        %v3988 = vsel %vm1237, %v3983, %v3987
        %v3990 = vshrl.u32 %v3787, 16
        %v3992 = vrot.slane %v3990, 4
        %v3993 = vshll.u32 %v3787, 16
        %v3995 = vrot.slane %v3993, 5
        %v3996 = vor.u32 %v3992, %v3995
        %v3997 = vrot.slane %v3996, 4
        %v3999 = vshll.u32 %v3788, 16
        %v4001 = vrot.slane %v3999, 5
        %v4002 = vsel %vm1237, %v3997, %v4001
        %v4003 = vshrl.u32 %v3788, 16
        %v4005 = vrot.slane %v4003, 4
        %v4006 = vor.u32 %v4005, %v4001
        %v4007 = vrot.slane %v4006, 4
        %v4009 = vshll.u32 %v3812, 16
        %v4011 = vrot.slane %v4009, 5
        %v4012 = vsel %vm1237, %v4007, %v4011
        %v4014 = vshrl.u32 %v3789, 16
        %v4016 = vrot.slane %v4014, 4
        %v4017 = vshll.u32 %v3789, 16
        %v4019 = vrot.slane %v4017, 5
        %v4020 = vor.u32 %v4016, %v4019
        %v4021 = vrot.slane %v4020, 4
        %v4023 = vshll.u32 %v3790, 16
        %v4025 = vrot.slane %v4023, 5
        %v4026 = vsel %vm1237, %v4021, %v4025
        %v4027 = vshrl.u32 %v3790, 16
        %v4029 = vrot.slane %v4027, 4
        %v4030 = vor.u32 %v4029, %v4025
        %v4031 = vrot.slane %v4030, 4
        %v4033 = vshll.u32 %v3813, 16
        %v4035 = vrot.slane %v4033, 5
        %v4036 = vsel %vm1237, %v4031, %v4035
        %v4038 = vshrl.u32 %v3791, 16
        %v4040 = vrot.slane %v4038, 4
        %v4041 = vshll.u32 %v3791, 16
        %v4043 = vrot.slane %v4041, 5
        %v4044 = vor.u32 %v4040, %v4043
        %v4045 = vrot.slane %v4044, 4
        %v4047 = vshll.u32 %v3792, 16
        %v4049 = vrot.slane %v4047, 5
        %v4050 = vsel %vm1237, %v4045, %v4049
        %v4051 = vshrl.u32 %v3792, 16
        %v4053 = vrot.slane %v4051, 4
        %v4054 = vor.u32 %v4053, %v4049
        %v4055 = vrot.slane %v4054, 4
        %v4057 = vshll.u32 %v3814, 16
        %v4059 = vrot.slane %v4057, 5
        %v4060 = vsel %vm1237, %v4055, %v4059
        %v4062 = vshrl.u32 %v3793, 16
        %v4064 = vrot.slane %v4062, 4
        %v4065 = vshll.u32 %v3793, 16
        %v4067 = vrot.slane %v4065, 5
        %v4068 = vor.u32 %v4064, %v4067
        %v4069 = vrot.slane %v4068, 4
        %v4071 = vshll.u32 %v3794, 16
        %v4073 = vrot.slane %v4071, 5
        %v4074 = vsel %vm1237, %v4069, %v4073
        %v4075 = vshrl.u32 %v3794, 16
        %v4077 = vrot.slane %v4075, 4
        %v4078 = vor.u32 %v4077, %v4073
        %v4079 = vrot.slane %v4078, 4
        %v4081 = vshll.u32 %v3815, 16
        %v4083 = vrot.slane %v4081, 5
        %v4084 = vsel %vm1237, %v4079, %v4083
        %v4086 = vshrl.u32 %v3795, 16
        %v4088 = vrot.slane %v4086, 4
        %v4089 = vshll.u32 %v3795, 16
        %v4091 = vrot.slane %v4089, 5
        %v4092 = vor.u32 %v4088, %v4091
        %v4093 = vrot.slane %v4092, 4
        %v4095 = vshll.u32 %v3796, 16
        %v4097 = vrot.slane %v4095, 5
        %v4098 = vsel %vm1237, %v4093, %v4097
        %v4099 = vshrl.u32 %v3796, 16
        %v4101 = vrot.slane %v4099, 4
        %v4102 = vor.u32 %v4101, %v4097
        %v4103 = vrot.slane %v4102, 4
        %v4105 = vshll.u32 %v3816, 16
        %v4107 = vrot.slane %v4105, 5
        %v4108 = vsel %vm1237, %v4103, %v4107
        %v4110 = vshrl.u32 %v3797, 16
        %v4112 = vrot.slane %v4110, 4
        %v4113 = vshll.u32 %v3797, 16
        %v4115 = vrot.slane %v4113, 5
        %v4116 = vor.u32 %v4112, %v4115
        %v4117 = vrot.slane %v4116, 4
        %v4119 = vshll.u32 %v3798, 16
        %v4121 = vrot.slane %v4119, 5
        %v4122 = vsel %vm1237, %v4117, %v4121
        %v4123 = vshrl.u32 %v3798, 16
        %v4125 = vrot.slane %v4123, 4
        %v4126 = vor.u32 %v4125, %v4121
        %v4127 = vrot.slane %v4126, 4
        %v4129 = vshll.u32 %v3817, 16
        %v4131 = vrot.slane %v4129, 5
        %v4132 = vsel %vm1237, %v4127, %v4131
        %v4134 = vshrl.u32 %v3799, 16
        %v4136 = vrot.slane %v4134, 4
        %v4137 = vshll.u32 %v3799, 16
        %v4139 = vrot.slane %v4137, 5
        %v4140 = vor.u32 %v4136, %v4139
        %v4141 = vrot.slane %v4140, 4
        %v4143 = vshll.u32 %v3800, 16
        %v4145 = vrot.slane %v4143, 5
        %v4146 = vsel %vm1237, %v4141, %v4145
        %v4147 = vshrl.u32 %v3800, 16
        %v4149 = vrot.slane %v4147, 4
        %v4150 = vor.u32 %v4149, %v4145
        %v4151 = vrot.slane %v4150, 4
        %v4153 = vshll.u32 %v3818, 16
        %v4155 = vrot.slane %v4153, 5
        %v4156 = vsel %vm1237, %v4151, %v4155
        %v4158 = vshrl.u32 %v3801, 16
        %v4160 = vrot.slane %v4158, 4
        %v4161 = vshll.u32 %v3801, 16
        %v4163 = vrot.slane %v4161, 5
        %v4164 = vor.u32 %v4160, %v4163
        %v4165 = vrot.slane %v4164, 4
        %v4167 = vshll.u32 %v3802, 16
        %v4169 = vrot.slane %v4167, 5
        %v4170 = vsel %vm1237, %v4165, %v4169
        %v4171 = vshrl.u32 %v3802, 16
        %v4173 = vrot.slane %v4171, 4
        %v4174 = vor.u32 %v4173, %v4169
        %v4175 = vrot.slane %v4174, 4
        %v4177 = vshll.u32 %v3819, 16
        %v4179 = vrot.slane %v4177, 5
        %v4180 = vsel %vm1237, %v4175, %v4179
        %v4182 = vshrl.u32 %v3803, 16
        %v4184 = vrot.slane %v4182, 4
        %v4185 = vshll.u32 %v3803, 16
        %v4187 = vrot.slane %v4185, 5
        %v4188 = vor.u32 %v4184, %v4187
        %v4189 = vrot.slane %v4188, 4
        %v4191 = vshll.u32 %v3804, 16
        %v4193 = vrot.slane %v4191, 5
        %v4194 = vsel %vm1237, %v4189, %v4193
        %v4195 = vshrl.u32 %v3804, 16
        %v4197 = vrot.slane %v4195, 4
        %v4198 = vor.u32 %v4197, %v4193
        %v4199 = vrot.slane %v4198, 4
        %v4201 = vshll.u32 %v3820, 16
        %v4203 = vrot.slane %v4201, 5
        %v4204 = vsel %vm1237, %v4199, %v4203
        %v4237 = vunpack.c.l.b16 %v3773
        %v4238 = vunpack.c.l.b16 %v3774
        %v4239 = vunpack.c.l.b16 %v3775
        %v4240 = vunpack.c.l.b16 %v3776
        %v4241 = vunpack.c.l.b16 %v3777
        %v4242 = vunpack.c.l.b16 %v3778
        %v4243 = vunpack.c.l.b16 %v3779
        %v4244 = vunpack.c.l.b16 %v3780
        %v4245 = vunpack.c.l.b16 %v3781
        %v4246 = vunpack.c.l.b16 %v3782
        %v4247 = vunpack.c.l.b16 %v3783
        %v4248 = vunpack.c.l.b16 %v3784
        %v4249 = vunpack.c.l.b16 %v3785
        %v4250 = vunpack.c.l.b16 %v3786
        %v4251 = vunpack.c.l.b16 %v3787
        %v4252 = vunpack.c.l.b16 %v3788
        %v4253 = vunpack.c.l.b16 %v3789
        %v4254 = vunpack.c.l.b16 %v3790
        %v4255 = vunpack.c.l.b16 %v3791
        %v4256 = vunpack.c.l.b16 %v3792
        %v4257 = vunpack.c.l.b16 %v3793
        %v4258 = vunpack.c.l.b16 %v3794
        %v4259 = vunpack.c.l.b16 %v3795
        %v4260 = vunpack.c.l.b16 %v3796
        %v4261 = vunpack.c.l.b16 %v3797
        %v4262 = vunpack.c.l.b16 %v3798
        %v4263 = vunpack.c.l.b16 %v3799
        %v4264 = vunpack.c.l.b16 %v3800
        %v4265 = vunpack.c.l.b16 %v3801
        %v4266 = vunpack.c.l.b16 %v3802
        %v4267 = vunpack.c.l.b16 %v3803
        %v4268 = vunpack.c.l.b16 %v3804
        %v4269 = vpack.c.b16 %v4238, %v4237
        %v4270 = vpack.c.b16 %v4240, %v4239
        %v4271 = vpack.c.b16 %v4242, %v4241
        %v4272 = vpack.c.b16 %v4244, %v4243
        %v4273 = vpack.c.b16 %v4246, %v4245
        %v4274 = vpack.c.b16 %v4248, %v4247
        %v4275 = vpack.c.b16 %v4250, %v4249
        %v4276 = vpack.c.b16 %v4252, %v4251
        %v4277 = vpack.c.b16 %v4254, %v4253
        %v4278 = vpack.c.b16 %v4256, %v4255
        %v4279 = vpack.c.b16 %v4258, %v4257
        %v4280 = vpack.c.b16 %v4260, %v4259
        %v4281 = vpack.c.b16 %v4262, %v4261
        %v4282 = vpack.c.b16 %v4264, %v4263
        %v4283 = vpack.c.b16 %v4266, %v4265
        %v4284 = vpack.c.b16 %v4268, %v4267
        %v4301 = vunpack.c.l.b16 %v3834
        %v4302 = vunpack.c.l.b16 %v3844
        %v4303 = vunpack.c.l.b16 %v3858
        %v4304 = vunpack.c.l.b16 %v3868
        %v4305 = vunpack.c.l.b16 %v3882
        %v4306 = vunpack.c.l.b16 %v3892
        %v4307 = vunpack.c.l.b16 %v3906
        %v4308 = vunpack.c.l.b16 %v3916
        %v4309 = vunpack.c.l.b16 %v3930
        %v4310 = vunpack.c.l.b16 %v3940
        %v4311 = vunpack.c.l.b16 %v3954
        %v4312 = vunpack.c.l.b16 %v3964
        %v4313 = vunpack.c.l.b16 %v3978
        %v4314 = vunpack.c.l.b16 %v3988
        %v4315 = vunpack.c.l.b16 %v4002
        %v4316 = vunpack.c.l.b16 %v4012
        %v4317 = vunpack.c.l.b16 %v4026
        %v4318 = vunpack.c.l.b16 %v4036
        %v4319 = vunpack.c.l.b16 %v4050
        %v4320 = vunpack.c.l.b16 %v4060
        %v4321 = vunpack.c.l.b16 %v4074
        %v4322 = vunpack.c.l.b16 %v4084
        %v4323 = vunpack.c.l.b16 %v4098
        %v4324 = vunpack.c.l.b16 %v4108
        %v4325 = vunpack.c.l.b16 %v4122
        %v4326 = vunpack.c.l.b16 %v4132
        %v4327 = vunpack.c.l.b16 %v4146
        %v4328 = vunpack.c.l.b16 %v4156
        %v4329 = vunpack.c.l.b16 %v4170
        %v4330 = vunpack.c.l.b16 %v4180
        %v4331 = vunpack.c.l.b16 %v4194
        %v4332 = vunpack.c.l.b16 %v4204
        %v4333 = vpack.c.b16 %v4302, %v4301
        %v4334 = vpack.c.b16 %v4304, %v4303
        %v4335 = vpack.c.b16 %v4306, %v4305
        %v4336 = vpack.c.b16 %v4308, %v4307
        %v4337 = vpack.c.b16 %v4310, %v4309
        %v4338 = vpack.c.b16 %v4312, %v4311
        %v4339 = vpack.c.b16 %v4314, %v4313
        %v4340 = vpack.c.b16 %v4316, %v4315
        %v4341 = vpack.c.b16 %v4318, %v4317
        %v4342 = vpack.c.b16 %v4320, %v4319
        %v4343 = vpack.c.b16 %v4322, %v4321
        %v4344 = vpack.c.b16 %v4324, %v4323
        %v4345 = vpack.c.b16 %v4326, %v4325
        %v4346 = vpack.c.b16 %v4328, %v4327
        %v4347 = vpack.c.b16 %v4330, %v4329
        %v4348 = vpack.c.b16 %v4332, %v4331
        %v4365 = vld [vmem:[#allocation7 + $0x180] sm:$0xf]
        %v4366 = vld [vmem:[#allocation7 + $0x184] sm:$0xf]
        %v4367 = vld [vmem:[#allocation7 + $0x188] sm:$0xf]
        %v4368 = vld [vmem:[#allocation7 + $0x18c] sm:$0xf]
        %v4369 = vld [vmem:[#allocation7 + $0x190] sm:$0xf]
        %v4370 = vld [vmem:[#allocation7 + $0x194] sm:$0xf]
        %v4371 = vld [vmem:[#allocation7 + $0x198] sm:$0xf]
        %v4372 = vld [vmem:[#allocation7 + $0x19c] sm:$0xf]
        %v4373 = vld [vmem:[#allocation7 + $0x1a0] sm:$0xf]
        %v4374 = vld [vmem:[#allocation7 + $0x1a4] sm:$0xf]
        %v4375 = vld [vmem:[#allocation7 + $0x1a8] sm:$0xf]
        %v4376 = vld [vmem:[#allocation7 + $0x1ac] sm:$0xf]
        %v4377 = vld [vmem:[#allocation7 + $0x1b0] sm:$0xf]
        %v4378 = vld [vmem:[#allocation7 + $0x1b4] sm:$0xf]
        %v4379 = vld [vmem:[#allocation7 + $0x1b8] sm:$0xf]
        %v4380 = vld [vmem:[#allocation7 + $0x1bc] sm:$0xf]
        %v4381 = vld [vmem:[#allocation7 + $0x1c0] sm:$0xf]
        %v4382 = vld [vmem:[#allocation7 + $0x1c4] sm:$0xf]
        %v4383 = vld [vmem:[#allocation7 + $0x1c8] sm:$0xf]
        %v4384 = vld [vmem:[#allocation7 + $0x1cc] sm:$0xf]
        %v4385 = vld [vmem:[#allocation7 + $0x1d0] sm:$0xf]
        %v4386 = vld [vmem:[#allocation7 + $0x1d4] sm:$0xf]
        %v4387 = vld [vmem:[#allocation7 + $0x1d8] sm:$0xf]
        %v4388 = vld [vmem:[#allocation7 + $0x1dc] sm:$0xf]
        %v4389 = vld [vmem:[#allocation7 + $0x1e0] sm:$0xf]
        %v4390 = vld [vmem:[#allocation7 + $0x1e4] sm:$0xf]
        %v4391 = vld [vmem:[#allocation7 + $0x1e8] sm:$0xf]
        %v4392 = vld [vmem:[#allocation7 + $0x1ec] sm:$0xf]
        %v4393 = vld [vmem:[#allocation7 + $0x1f0] sm:$0xf]
        %v4394 = vld [vmem:[#allocation7 + $0x1f4] sm:$0xf]
        %v4395 = vld [vmem:[#allocation7 + $0x1f8] sm:$0xf]
        %v4396 = vld [vmem:[#allocation7 + $0x1fc] sm:$0xf]
        %v4429 = vunpack.c.l.b16 %v4365
        %v4430 = vunpack.c.l.b16 %v4366
        %v4431 = vunpack.c.l.b16 %v4367
        %v4432 = vunpack.c.l.b16 %v4368
        %v4433 = vunpack.c.l.b16 %v4369
        %v4434 = vunpack.c.l.b16 %v4370
        %v4435 = vunpack.c.l.b16 %v4371
        %v4436 = vunpack.c.l.b16 %v4372
        %v4437 = vunpack.c.l.b16 %v4373
        %v4438 = vunpack.c.l.b16 %v4374
        %v4439 = vunpack.c.l.b16 %v4375
        %v4440 = vunpack.c.l.b16 %v4376
        %v4441 = vunpack.c.l.b16 %v4377
        %v4442 = vunpack.c.l.b16 %v4378
        %v4443 = vunpack.c.l.b16 %v4379
        %v4444 = vunpack.c.l.b16 %v4380
        %v4445 = vunpack.c.l.b16 %v4381
        %v4446 = vunpack.c.l.b16 %v4382
        %v4447 = vunpack.c.l.b16 %v4383
        %v4448 = vunpack.c.l.b16 %v4384
        %v4449 = vunpack.c.l.b16 %v4385
        %v4450 = vunpack.c.l.b16 %v4386
        %v4451 = vunpack.c.l.b16 %v4387
        %v4452 = vunpack.c.l.b16 %v4388
        %v4453 = vunpack.c.l.b16 %v4389
        %v4454 = vunpack.c.l.b16 %v4390
        %v4455 = vunpack.c.l.b16 %v4391
        %v4456 = vunpack.c.l.b16 %v4392
        %v4457 = vunpack.c.l.b16 %v4393
        %v4458 = vunpack.c.l.b16 %v4394
        %v4459 = vunpack.c.l.b16 %v4395
        %v4460 = vunpack.c.l.b16 %v4396
        %v4461 = vpack.c.b16 %v4430, %v4429
        %v4462 = vpack.c.b16 %v4432, %v4431
        %v4463 = vpack.c.b16 %v4434, %v4433
        %v4464 = vpack.c.b16 %v4436, %v4435
        %v4465 = vpack.c.b16 %v4438, %v4437
        %v4466 = vpack.c.b16 %v4440, %v4439
        %v4467 = vpack.c.b16 %v4442, %v4441
        %v4468 = vpack.c.b16 %v4444, %v4443
        %v4469 = vpack.c.b16 %v4446, %v4445
        %v4470 = vpack.c.b16 %v4448, %v4447
        %v4471 = vpack.c.b16 %v4450, %v4449
        %v4472 = vpack.c.b16 %v4452, %v4451
        %v4473 = vpack.c.b16 %v4454, %v4453
        %v4474 = vpack.c.b16 %v4456, %v4455
        %v4475 = vpack.c.b16 %v4458, %v4457
        %v4476 = vpack.c.b16 %v4460, %v4459
        %4493 = vmatprep.subr.bf16.mxu0 0
        %4494 = vmatpush1.bf16.msra.mxu0 %v4461
        %4495 = vmatprep.subr.bf16.mxu0 0
        %4496 = vmatpush1.bf16.msra.mxu0 %v4462
        %4497 = vmatprep.subr.bf16.mxu0 0
        %4498 = vmatpush1.bf16.msra.mxu0 %v4463
        %4499 = vmatprep.subr.bf16.mxu0 0
        %4500 = vmatpush1.bf16.msra.mxu0 %v4464
        %4501 = vmatprep.subr.bf16.mxu0 0
        %4502 = vmatpush1.bf16.msra.mxu0 %v4465
        %4503 = vmatprep.subr.bf16.mxu0 0
        %4504 = vmatpush1.bf16.msra.mxu0 %v4466
        %4505 = vmatprep.subr.bf16.mxu0 0
        %4506 = vmatpush1.bf16.msra.mxu0 %v4467
        %4507 = vmatprep.subr.bf16.mxu0 0
        %4508 = vmatpush1.bf16.msra.mxu0 %v4468
        %4509 = vmatprep.subr.bf16.mxu0 0
        %4510 = vmatpush1.bf16.msra.mxu0 %v4469
        %4511 = vmatprep.subr.bf16.mxu0 0
        %4512 = vmatpush1.bf16.msra.mxu0 %v4470
        %4513 = vmatprep.subr.bf16.mxu0 0
        %4514 = vmatpush1.bf16.msra.mxu0 %v4471
        %4515 = vmatprep.subr.bf16.mxu0 0
        %4516 = vmatpush1.bf16.msra.mxu0 %v4472
        %4517 = vmatprep.subr.bf16.mxu0 0
        %4518 = vmatpush1.bf16.msra.mxu0 %v4473
        %4519 = vmatprep.subr.bf16.mxu0 0
        %4520 = vmatpush1.bf16.msra.mxu0 %v4474
        %4521 = vmatprep.subr.bf16.mxu0 0
        %4522 = vmatpush1.bf16.msra.mxu0 %v4475
        %4523 = vmatprep.subr.bf16.mxu0 0
        %4524 = vmatpush1.bf16.msra.mxu0 %v4476
        %4525 = vmatprep.mubr.bf16.mxu0 %v4333
        %4526 = vmatmul.mubr.bf16.gmra.mrb[0].mxu0 %v4269
        %v4527 = vpop.f32.mrb[0].mxu0
        %v4528 = vadd.f32 0.0, %v4527
        %v4529 = vpop.f32.mrb[0].mxu0
        %v4530 = vpop.f32.mrb[0].mxu0
        %v4531 = vadd.f32 0.0, %v4530
        %v4532 = vpop.f32.mrb[0].mxu0
        %4533 = vmatprep.mubr.bf16.mxu0 %v4334
        %4534 = vmatmul.mubr.bf16.gmra.mrb[0].mxu0 %v4270
        %v4535 = vpop.f32.mrb[0].mxu0
        %v4536 = vadd.f32 0.0, %v4535
        %v4537 = vpop.f32.mrb[0].mxu0
        %v4538 = vpop.f32.mrb[0].mxu0
        %v4539 = vadd.f32 0.0, %v4538
        %v4540 = vpop.f32.mrb[0].mxu0
        %4541 = vmatprep.mubr.bf16.mxu0 %v4335
        %4542 = vmatmul.mubr.bf16.gmra.mrb[0].mxu0 %v4271
        %v4543 = vpop.f32.mrb[0].mxu0
        %v4544 = vadd.f32 0.0, %v4543
        %v4545 = vpop.f32.mrb[0].mxu0
        %v4546 = vpop.f32.mrb[0].mxu0
        %v4547 = vadd.f32 0.0, %v4546
        %v4548 = vpop.f32.mrb[0].mxu0
        %4549 = vmatprep.mubr.bf16.mxu0 %v4336
        %4550 = vmatmul.mubr.bf16.gmra.mrb[0].mxu0 %v4272
        %v4551 = vpop.f32.mrb[0].mxu0
        %v4552 = vadd.f32 0.0, %v4551
        %v4553 = vpop.f32.mrb[0].mxu0
        %v4554 = vpop.f32.mrb[0].mxu0
        %v4555 = vadd.f32 0.0, %v4554
        %v4556 = vpop.f32.mrb[0].mxu0
        %4557 = vmatprep.mubr.bf16.mxu0 %v4337
        %4558 = vmatmul.mubr.bf16.gmra.mrb[0].mxu0 %v4273
        %v4559 = vpop.f32.mrb[0].mxu0
        %v4560 = vadd.f32 0.0, %v4559
        %v4561 = vpop.f32.mrb[0].mxu0
        %v4562 = vpop.f32.mrb[0].mxu0
        %v4563 = vadd.f32 0.0, %v4562
        %v4564 = vpop.f32.mrb[0].mxu0
        %4565 = vmatprep.mubr.bf16.mxu0 %v4338
        %4566 = vmatmul.mubr.bf16.gmra.mrb[0].mxu0 %v4274
        %v4567 = vpop.f32.mrb[0].mxu0
        %v4568 = vadd.f32 0.0, %v4567
        %v4569 = vpop.f32.mrb[0].mxu0
        %v4570 = vpop.f32.mrb[0].mxu0
        %v4571 = vadd.f32 0.0, %v4570
        %v4572 = vpop.f32.mrb[0].mxu0
        %4573 = vmatprep.mubr.bf16.mxu0 %v4339
        %4574 = vmatmul.mubr.bf16.gmra.mrb[0].mxu0 %v4275
        %v4575 = vpop.f32.mrb[0].mxu0
        %v4576 = vadd.f32 0.0, %v4575
        %v4577 = vpop.f32.mrb[0].mxu0
        %v4578 = vpop.f32.mrb[0].mxu0
        %v4579 = vadd.f32 0.0, %v4578
        %v4580 = vpop.f32.mrb[0].mxu0
        %4581 = vmatprep.mubr.bf16.mxu0 %v4340
        %4582 = vmatmul.mubr.bf16.gmra.mrb[0].mxu0 %v4276
        %v4583 = vpop.f32.mrb[0].mxu0
        %v4584 = vadd.f32 0.0, %v4583
        %v4585 = vpop.f32.mrb[0].mxu0
        %v4586 = vpop.f32.mrb[0].mxu0
        %v4587 = vadd.f32 0.0, %v4586
        %v4588 = vpop.f32.mrb[0].mxu0
        %4589 = vmatprep.mubr.bf16.mxu0 %v4341
        %4590 = vmatmul.mubr.bf16.gmra.mrb[0].mxu0 %v4277
        %v4591 = vpop.f32.mrb[0].mxu0
        %v4592 = vadd.f32 0.0, %v4591
        %v4593 = vpop.f32.mrb[0].mxu0
        %v4594 = vpop.f32.mrb[0].mxu0
        %v4595 = vadd.f32 0.0, %v4594
        %v4596 = vpop.f32.mrb[0].mxu0
        %4597 = vmatprep.mubr.bf16.mxu0 %v4342
        %4598 = vmatmul.mubr.bf16.gmra.mrb[0].mxu0 %v4278
        %v4599 = vpop.f32.mrb[0].mxu0
        %v4600 = vadd.f32 0.0, %v4599
        %v4601 = vpop.f32.mrb[0].mxu0
        %v4602 = vpop.f32.mrb[0].mxu0
        %v4603 = vadd.f32 0.0, %v4602
        %v4604 = vpop.f32.mrb[0].mxu0
        %4605 = vmatprep.mubr.bf16.mxu0 %v4343
        %4606 = vmatmul.mubr.bf16.gmra.mrb[0].mxu0 %v4279
        %v4607 = vpop.f32.mrb[0].mxu0
        %v4608 = vadd.f32 0.0, %v4607
        %v4609 = vpop.f32.mrb[0].mxu0
        %v4610 = vpop.f32.mrb[0].mxu0
        %v4611 = vadd.f32 0.0, %v4610
        %v4612 = vpop.f32.mrb[0].mxu0
        %4613 = vmatprep.mubr.bf16.mxu0 %v4344
        %4614 = vmatmul.mubr.bf16.gmra.mrb[0].mxu0 %v4280
        %v4615 = vpop.f32.mrb[0].mxu0
        %v4616 = vadd.f32 0.0, %v4615
        %v4617 = vpop.f32.mrb[0].mxu0
        %v4618 = vpop.f32.mrb[0].mxu0
        %v4619 = vadd.f32 0.0, %v4618
        %v4620 = vpop.f32.mrb[0].mxu0
        %4621 = vmatprep.mubr.bf16.mxu0 %v4345
        %4622 = vmatmul.mubr.bf16.gmra.mrb[0].mxu0 %v4281
        %v4623 = vpop.f32.mrb[0].mxu0
        %v4624 = vadd.f32 0.0, %v4623
        %v4625 = vpop.f32.mrb[0].mxu0
        %v4626 = vpop.f32.mrb[0].mxu0
        %v4627 = vadd.f32 0.0, %v4626
        %v4628 = vpop.f32.mrb[0].mxu0
        %4629 = vmatprep.mubr.bf16.mxu0 %v4346
        %4630 = vmatmul.mubr.bf16.gmra.mrb[0].mxu0 %v4282
        %v4631 = vpop.f32.mrb[0].mxu0
        %v4632 = vadd.f32 0.0, %v4631
        %v4633 = vpop.f32.mrb[0].mxu0
        %v4634 = vpop.f32.mrb[0].mxu0
        %v4635 = vadd.f32 0.0, %v4634
        %v4636 = vpop.f32.mrb[0].mxu0
        %4637 = vmatprep.mubr.bf16.mxu0 %v4347
        %4638 = vmatmul.mubr.bf16.gmra.mrb[0].mxu0 %v4283
        %v4639 = vpop.f32.mrb[0].mxu0
        %v4640 = vadd.f32 0.0, %v4639
        %v4641 = vpop.f32.mrb[0].mxu0
        %v4642 = vpop.f32.mrb[0].mxu0
        %v4643 = vadd.f32 0.0, %v4642
        %v4644 = vpop.f32.mrb[0].mxu0
        %4645 = vmatprep.mubr.bf16.mxu0 %v4348
        %4646 = vmatmul.mubr.bf16.gmra.mrb[0].mxu0 %v4284
        %v4647 = vpop.f32.mrb[0].mxu0
        %v4648 = vadd.f32 0.0, %v4647
        %v4649 = vpop.f32.mrb[0].mxu0
        %v4650 = vpop.f32.mrb[0].mxu0
        %v4651 = vadd.f32 0.0, %v4650
        %v4652 = vpop.f32.mrb[0].mxu0
        %4653 = vdwg.mxu0
        %v4654 = vadd.f32 %v3740, %v4528
        %v4655 = vadd.f32 %v3741, %v4531
        %v4656 = vadd.f32 %v3742, %v4536
        %v4657 = vadd.f32 %v3743, %v4539
        %v4658 = vadd.f32 %v3744, %v4544
        %v4659 = vadd.f32 %v3745, %v4547
        %v4660 = vadd.f32 %v3746, %v4552
        %v4661 = vadd.f32 %v3747, %v4555
        %v4662 = vadd.f32 %v3748, %v4560
        %v4663 = vadd.f32 %v3749, %v4563
        %v4664 = vadd.f32 %v3750, %v4568
        %v4665 = vadd.f32 %v3751, %v4571
        %v4666 = vadd.f32 %v3752, %v4576
        %v4667 = vadd.f32 %v3753, %v4579
        %v4668 = vadd.f32 %v3754, %v4584
        %v4669 = vadd.f32 %v3755, %v4587
        %v4670 = vadd.f32 %v3756, %v4592
        %v4671 = vadd.f32 %v3757, %v4595
        %v4672 = vadd.f32 %v3758, %v4600
        %v4673 = vadd.f32 %v3759, %v4603
        %v4674 = vadd.f32 %v3760, %v4608
        %v4675 = vadd.f32 %v3761, %v4611
        %v4676 = vadd.f32 %v3762, %v4616
        %v4677 = vadd.f32 %v3763, %v4619
        %v4678 = vadd.f32 %v3764, %v4624
        %v4679 = vadd.f32 %v3765, %v4627
        %v4680 = vadd.f32 %v3766, %v4632
        %v4681 = vadd.f32 %v3767, %v4635
        %v4682 = vadd.f32 %v3768, %v4640
        %v4683 = vadd.f32 %v3769, %v4643
        %v4684 = vadd.f32 %v3770, %v4648
        %v4685 = vadd.f32 %v3771, %v4651
        %v4686 = vld [vmem:[%s3772] sm:$0xe]
        %v4687 = vld [vmem:[%s3772 + $0xc] sm:$0xe]
        %v4688 = vld [vmem:[%s3772 + $0x18] sm:$0xe]
        %v4689 = vld [vmem:[%s3772 + $0x24] sm:$0xe]
        %v4690 = vld [vmem:[%s3772 + $0x30] sm:$0xe]
        %v4691 = vld [vmem:[%s3772 + $0x3c] sm:$0xe]
        %v4692 = vld [vmem:[%s3772 + $0x48] sm:$0xe]
        %v4693 = vld [vmem:[%s3772 + $0x54] sm:$0xe]
        %v4694 = vld [vmem:[%s3772 + $0x60] sm:$0xe]
        %v4695 = vld [vmem:[%s3772 + $0x6c] sm:$0xe]
        %v4696 = vld [vmem:[%s3772 + $0x78] sm:$0xe]
        %v4697 = vld [vmem:[%s3772 + $0x84] sm:$0xe]
        %v4698 = vld [vmem:[%s3772 + $0x90] sm:$0xe]
        %v4699 = vld [vmem:[%s3772 + $0x9c] sm:$0xe]
        %v4700 = vld [vmem:[%s3772 + $0xa8] sm:$0xe]
        %v4701 = vld [vmem:[%s3772 + $0xb4] sm:$0xe]
        %v4734 = vrot.slane %v4686, 5
        %v4735 = vrot.slane %v4734, 4
        %v4736 = vrot.slane %v3774, 5
        %v4737 = vsel %vm1864, %v4735, %v4736
        %v4738 = vrot.slane %v4736, 4
        %v4739 = vrot.slane %v3805, 5
        %v4740 = vsel %vm1864, %v4738, %v4739
        %v4741 = vrot.slane %v4687, 5
        %v4742 = vrot.slane %v4741, 4
        %v4743 = vrot.slane %v3776, 5
        %v4744 = vsel %vm1864, %v4742, %v4743
        %v4745 = vrot.slane %v4743, 4
        %v4746 = vrot.slane %v3806, 5
        %v4747 = vsel %vm1864, %v4745, %v4746
        %v4748 = vrot.slane %v4688, 5
        %v4749 = vrot.slane %v4748, 4
        %v4750 = vrot.slane %v3778, 5
        %v4751 = vsel %vm1864, %v4749, %v4750
        %v4752 = vrot.slane %v4750, 4
        %v4753 = vrot.slane %v3807, 5
        %v4754 = vsel %vm1864, %v4752, %v4753
        %v4755 = vrot.slane %v4689, 5
        %v4756 = vrot.slane %v4755, 4
        %v4757 = vrot.slane %v3780, 5
        %v4758 = vsel %vm1864, %v4756, %v4757
        %v4759 = vrot.slane %v4757, 4
        %v4760 = vrot.slane %v3808, 5
        %v4761 = vsel %vm1864, %v4759, %v4760
        %v4762 = vrot.slane %v4690, 5
        %v4763 = vrot.slane %v4762, 4
        %v4764 = vrot.slane %v3782, 5
        %v4765 = vsel %vm1864, %v4763, %v4764
        %v4766 = vrot.slane %v4764, 4
        %v4767 = vrot.slane %v3809, 5
        %v4768 = vsel %vm1864, %v4766, %v4767
        %v4769 = vrot.slane %v4691, 5
        %v4770 = vrot.slane %v4769, 4
        %v4771 = vrot.slane %v3784, 5
        %v4772 = vsel %vm1864, %v4770, %v4771
        %v4773 = vrot.slane %v4771, 4
        %v4774 = vrot.slane %v3810, 5
        %v4775 = vsel %vm1864, %v4773, %v4774
        %v4776 = vrot.slane %v4692, 5
        %v4777 = vrot.slane %v4776, 4
        %v4778 = vrot.slane %v3786, 5
        %v4779 = vsel %vm1864, %v4777, %v4778
        %v4780 = vrot.slane %v4778, 4
        %v4781 = vrot.slane %v3811, 5
        %v4782 = vsel %vm1864, %v4780, %v4781
        %v4783 = vrot.slane %v4693, 5
        %v4784 = vrot.slane %v4783, 4
        %v4785 = vrot.slane %v3788, 5
        %v4786 = vsel %vm1864, %v4784, %v4785
        %v4787 = vrot.slane %v4785, 4
        %v4788 = vrot.slane %v3812, 5
        %v4789 = vsel %vm1864, %v4787, %v4788
        %v4790 = vrot.slane %v4694, 5
        %v4791 = vrot.slane %v4790, 4
        %v4792 = vrot.slane %v3790, 5
        %v4793 = vsel %vm1864, %v4791, %v4792
        %v4794 = vrot.slane %v4792, 4
        %v4795 = vrot.slane %v3813, 5
        %v4796 = vsel %vm1864, %v4794, %v4795
        %v4797 = vrot.slane %v4695, 5
        %v4798 = vrot.slane %v4797, 4
        %v4799 = vrot.slane %v3792, 5
        %v4800 = vsel %vm1864, %v4798, %v4799
        %v4801 = vrot.slane %v4799, 4
        %v4802 = vrot.slane %v3814, 5
        %v4803 = vsel %vm1864, %v4801, %v4802
        %v4804 = vrot.slane %v4696, 5
        %v4805 = vrot.slane %v4804, 4
        %v4806 = vrot.slane %v3794, 5
        %v4807 = vsel %vm1864, %v4805, %v4806
        %v4808 = vrot.slane %v4806, 4
        %v4809 = vrot.slane %v3815, 5
        %v4810 = vsel %vm1864, %v4808, %v4809
        %v4811 = vrot.slane %v4697, 5
        %v4812 = vrot.slane %v4811, 4
        %v4813 = vrot.slane %v3796, 5
        %v4814 = vsel %vm1864, %v4812, %v4813
        %v4815 = vrot.slane %v4813, 4
        %v4816 = vrot.slane %v3816, 5
        %v4817 = vsel %vm1864, %v4815, %v4816
        %v4818 = vrot.slane %v4698, 5
        %v4819 = vrot.slane %v4818, 4
        %v4820 = vrot.slane %v3798, 5
        %v4821 = vsel %vm1864, %v4819, %v4820
        %v4822 = vrot.slane %v4820, 4
        %v4823 = vrot.slane %v3817, 5
        %v4824 = vsel %vm1864, %v4822, %v4823
        %v4825 = vrot.slane %v4699, 5
        %v4826 = vrot.slane %v4825, 4
        %v4827 = vrot.slane %v3800, 5
        %v4828 = vsel %vm1864, %v4826, %v4827
        %v4829 = vrot.slane %v4827, 4
        %v4830 = vrot.slane %v3818, 5
        %v4831 = vsel %vm1864, %v4829, %v4830
        %v4832 = vrot.slane %v4700, 5
        %v4833 = vrot.slane %v4832, 4
        %v4834 = vrot.slane %v3802, 5
        %v4835 = vsel %vm1864, %v4833, %v4834
        %v4836 = vrot.slane %v4834, 4
        %v4837 = vrot.slane %v3819, 5
        %v4838 = vsel %vm1864, %v4836, %v4837
        %v4839 = vrot.slane %v4701, 5
        %v4840 = vrot.slane %v4839, 4
        %v4841 = vrot.slane %v3804, 5
        %v4842 = vsel %vm1864, %v4840, %v4841
        %v4843 = vrot.slane %v4841, 4
        %v4844 = vrot.slane %v3820, 5
        %v4845 = vsel %vm1864, %v4843, %v4844
        %v4846 = vld [vmem:[#allocation7 + $0x200] sm:$0xf]
        %v4847 = vld [vmem:[#allocation7 + $0x204] sm:$0xf]
        %v4848 = vld [vmem:[#allocation7 + $0x208] sm:$0xf]
        %v4849 = vld [vmem:[#allocation7 + $0x20c] sm:$0xf]
        %v4850 = vld [vmem:[#allocation7 + $0x210] sm:$0xf]
        %v4851 = vld [vmem:[#allocation7 + $0x214] sm:$0xf]
        %v4852 = vld [vmem:[#allocation7 + $0x218] sm:$0xf]
        %v4853 = vld [vmem:[#allocation7 + $0x21c] sm:$0xf]
        %v4854 = vld [vmem:[#allocation7 + $0x220] sm:$0xf]
        %v4855 = vld [vmem:[#allocation7 + $0x224] sm:$0xf]
        %v4856 = vld [vmem:[#allocation7 + $0x228] sm:$0xf]
        %v4857 = vld [vmem:[#allocation7 + $0x22c] sm:$0xf]
        %v4858 = vld [vmem:[#allocation7 + $0x230] sm:$0xf]
        %v4859 = vld [vmem:[#allocation7 + $0x234] sm:$0xf]
        %v4860 = vld [vmem:[#allocation7 + $0x238] sm:$0xf]
        %v4861 = vld [vmem:[#allocation7 + $0x23c] sm:$0xf]
        %v4862 = vunpack.c.l.b16 %v4737
        %v4863 = vunpack.c.l.b16 %v4740
        %v4864 = vunpack.c.l.b16 %v4744
        %v4865 = vunpack.c.l.b16 %v4747
        %v4866 = vunpack.c.l.b16 %v4751
        %v4867 = vunpack.c.l.b16 %v4754
        %v4868 = vunpack.c.l.b16 %v4758
        %v4869 = vunpack.c.l.b16 %v4761
        %v4870 = vunpack.c.l.b16 %v4765
        %v4871 = vunpack.c.l.b16 %v4768
        %v4872 = vunpack.c.l.b16 %v4772
        %v4873 = vunpack.c.l.b16 %v4775
        %v4874 = vunpack.c.l.b16 %v4779
        %v4875 = vunpack.c.l.b16 %v4782
        %v4876 = vunpack.c.l.b16 %v4786
        %v4877 = vunpack.c.l.b16 %v4789
        %v4878 = vunpack.c.l.b16 %v4793
        %v4879 = vunpack.c.l.b16 %v4796
        %v4880 = vunpack.c.l.b16 %v4800
        %v4881 = vunpack.c.l.b16 %v4803
        %v4882 = vunpack.c.l.b16 %v4807
        %v4883 = vunpack.c.l.b16 %v4810
        %v4884 = vunpack.c.l.b16 %v4814
        %v4885 = vunpack.c.l.b16 %v4817
        %v4886 = vunpack.c.l.b16 %v4821
        %v4887 = vunpack.c.l.b16 %v4824
        %v4888 = vunpack.c.l.b16 %v4828
        %v4889 = vunpack.c.l.b16 %v4831
        %v4890 = vunpack.c.l.b16 %v4835
        %v4891 = vunpack.c.l.b16 %v4838
        %v4892 = vunpack.c.l.b16 %v4842
        %v4893 = vunpack.c.l.b16 %v4845
        %v4894 = vpack.c.b16 %v4863, %v4862
        %v4895 = vpack.c.b16 %v4865, %v4864
        %v4896 = vpack.c.b16 %v4867, %v4866
        %v4897 = vpack.c.b16 %v4869, %v4868
        %v4898 = vpack.c.b16 %v4871, %v4870
        %v4899 = vpack.c.b16 %v4873, %v4872
        %v4900 = vpack.c.b16 %v4875, %v4874
        %v4901 = vpack.c.b16 %v4877, %v4876
        %v4902 = vpack.c.b16 %v4879, %v4878
        %v4903 = vpack.c.b16 %v4881, %v4880
        %v4904 = vpack.c.b16 %v4883, %v4882
        %v4905 = vpack.c.b16 %v4885, %v4884
        %v4906 = vpack.c.b16 %v4887, %v4886
        %v4907 = vpack.c.b16 %v4889, %v4888
        %v4908 = vpack.c.b16 %v4891, %v4890
        %v4909 = vpack.c.b16 %v4893, %v4892
        %v4942 = vunpack.c.l.b16 %v4846
        %v4943 = vunpack.c.l.b16 %v4847
        %v4944 = vunpack.c.l.b16 %v4848
        %v4945 = vunpack.c.l.b16 %v4849
        %v4946 = vunpack.c.l.b16 %v4850
        %v4947 = vunpack.c.l.b16 %v4851
        %v4948 = vunpack.c.l.b16 %v4852
        %v4949 = vunpack.c.l.b16 %v4853
        %v4950 = vunpack.c.l.b16 %v4854
        %v4951 = vunpack.c.l.b16 %v4855
        %v4952 = vunpack.c.l.b16 %v4856
        %v4953 = vunpack.c.l.b16 %v4857
        %v4954 = vunpack.c.l.b16 %v4858
        %v4955 = vunpack.c.l.b16 %v4859
        %v4956 = vunpack.c.l.b16 %v4860
        %v4957 = vunpack.c.l.b16 %v4861
        %v4958 = vpack.c.b16 %v4943, %v4942
        %v4959 = vpack.c.b16 %v4945, %v4944
        %v4960 = vpack.c.b16 %v4947, %v4946
        %v4961 = vpack.c.b16 %v4949, %v4948
        %v4962 = vpack.c.b16 %v4951, %v4950
        %v4963 = vpack.c.b16 %v4953, %v4952
        %v4964 = vpack.c.b16 %v4955, %v4954
        %v4965 = vpack.c.b16 %v4957, %v4956
        %4974 = vmatprep.subr.bf16.mxu0 0
        %4975 = vmatpush1.bf16.msra.mxu0 %v4958
        %4976 = vmatprep.subr.bf16.mxu0 0
        %4977 = vmatpush1.bf16.msra.mxu0 %v4959
        %4978 = vmatprep.subr.bf16.mxu0 0
        %4979 = vmatpush1.bf16.msra.mxu0 %v4960
        %4980 = vmatprep.subr.bf16.mxu0 0
        %4981 = vmatpush1.bf16.msra.mxu0 %v4961
        %4982 = vmatprep.subr.bf16.mxu0 0
        %4983 = vmatpush1.bf16.msra.mxu0 %v4962
        %4984 = vmatprep.subr.bf16.mxu0 0
        %4985 = vmatpush1.bf16.msra.mxu0 %v4963
        %4986 = vmatprep.subr.bf16.mxu0 0
        %4987 = vmatpush1.bf16.msra.mxu0 %v4964
        %4988 = vmatprep.subr.bf16.mxu0 0
        %4989 = vmatpush1.bf16.msra.mxu0 %v4965
        %4990 = vmatprep.subr.bf16.mxu0 0
        %4991 = vmatpush1.bf16.msra.mxu0 0
        %4992 = vmatprep.subr.bf16.mxu0 0
        %4993 = vmatpush1.bf16.msra.mxu0 0
        %4994 = vmatprep.subr.bf16.mxu0 0
        %4995 = vmatpush1.bf16.msra.mxu0 0
        %4996 = vmatprep.subr.bf16.mxu0 0
        %4997 = vmatpush1.bf16.msra.mxu0 0
        %4998 = vmatprep.subr.bf16.mxu0 0
        %4999 = vmatpush1.bf16.msra.mxu0 0
        %5000 = vmatprep.subr.bf16.mxu0 0
        %5001 = vmatpush1.bf16.msra.mxu0 0
        %5002 = vmatprep.subr.bf16.mxu0 0
        %5003 = vmatpush1.bf16.msra.mxu0 0
        %5004 = vmatprep.subr.bf16.mxu0 0
        %5005 = vmatpush1.bf16.msra.mxu0 0
        %5006 = vmatprep.mubr.bf16.mxu0 0
        %5007 = vmatmul.mubr.bf16.gmra.mrb[0].mxu0 %v4894
        %v5008 = vpop.f32.mrb[0].mxu0
        %v5009 = vadd.f32 0.0, %v5008
        %v5010 = vpop.f32.mrb[0].mxu0
        %v5011 = vpop.f32.mrb[0].mxu0
        %v5012 = vadd.f32 0.0, %v5011
        %v5013 = vpop.f32.mrb[0].mxu0
        %5014 = vmatprep.mubr.bf16.mxu0 0
        %5015 = vmatmul.mubr.bf16.gmra.mrb[0].mxu0 %v4895
        %v5016 = vpop.f32.mrb[0].mxu0
        %v5017 = vadd.f32 0.0, %v5016
        %v5018 = vpop.f32.mrb[0].mxu0
        %v5019 = vpop.f32.mrb[0].mxu0
        %v5020 = vadd.f32 0.0, %v5019
        %v5021 = vpop.f32.mrb[0].mxu0
        %5022 = vmatprep.mubr.bf16.mxu0 0
        %5023 = vmatmul.mubr.bf16.gmra.mrb[0].mxu0 %v4896
        %v5024 = vpop.f32.mrb[0].mxu0
        %v5025 = vadd.f32 0.0, %v5024
        %v5026 = vpop.f32.mrb[0].mxu0
        %v5027 = vpop.f32.mrb[0].mxu0
        %v5028 = vadd.f32 0.0, %v5027
        %v5029 = vpop.f32.mrb[0].mxu0
        %5030 = vmatprep.mubr.bf16.mxu0 0
        %5031 = vmatmul.mubr.bf16.gmra.mrb[0].mxu0 %v4897
        %v5032 = vpop.f32.mrb[0].mxu0
        %v5033 = vadd.f32 0.0, %v5032
        %v5034 = vpop.f32.mrb[0].mxu0
        %v5035 = vpop.f32.mrb[0].mxu0
        %v5036 = vadd.f32 0.0, %v5035
        %v5037 = vpop.f32.mrb[0].mxu0
        %5038 = vmatprep.mubr.bf16.mxu0 0
        %5039 = vmatmul.mubr.bf16.gmra.mrb[0].mxu0 %v4898
        %v5040 = vpop.f32.mrb[0].mxu0
        %v5041 = vadd.f32 0.0, %v5040
        %v5042 = vpop.f32.mrb[0].mxu0
        %v5043 = vpop.f32.mrb[0].mxu0
        %v5044 = vadd.f32 0.0, %v5043
        %v5045 = vpop.f32.mrb[0].mxu0
        %5046 = vmatprep.mubr.bf16.mxu0 0
        %5047 = vmatmul.mubr.bf16.gmra.mrb[0].mxu0 %v4899
        %v5048 = vpop.f32.mrb[0].mxu0
        %v5049 = vadd.f32 0.0, %v5048
        %v5050 = vpop.f32.mrb[0].mxu0
        %v5051 = vpop.f32.mrb[0].mxu0
        %v5052 = vadd.f32 0.0, %v5051
        %v5053 = vpop.f32.mrb[0].mxu0
        %5054 = vmatprep.mubr.bf16.mxu0 0
        %5055 = vmatmul.mubr.bf16.gmra.mrb[0].mxu0 %v4900
        %v5056 = vpop.f32.mrb[0].mxu0
        %v5057 = vadd.f32 0.0, %v5056
        %v5058 = vpop.f32.mrb[0].mxu0
        %v5059 = vpop.f32.mrb[0].mxu0
        %v5060 = vadd.f32 0.0, %v5059
        %v5061 = vpop.f32.mrb[0].mxu0
        %5062 = vmatprep.mubr.bf16.mxu0 0
        %5063 = vmatmul.mubr.bf16.gmra.mrb[0].mxu0 %v4901
        %v5064 = vpop.f32.mrb[0].mxu0
        %v5065 = vadd.f32 0.0, %v5064
        %v5066 = vpop.f32.mrb[0].mxu0
        %v5067 = vpop.f32.mrb[0].mxu0
        %v5068 = vadd.f32 0.0, %v5067
        %v5069 = vpop.f32.mrb[0].mxu0
        %5070 = vmatprep.mubr.bf16.mxu0 0
        %5071 = vmatmul.mubr.bf16.gmra.mrb[0].mxu0 %v4902
        %v5072 = vpop.f32.mrb[0].mxu0
        %v5073 = vadd.f32 0.0, %v5072
        %v5074 = vpop.f32.mrb[0].mxu0
        %v5075 = vpop.f32.mrb[0].mxu0
        %v5076 = vadd.f32 0.0, %v5075
        %v5077 = vpop.f32.mrb[0].mxu0
        %5078 = vmatprep.mubr.bf16.mxu0 0
        %5079 = vmatmul.mubr.bf16.gmra.mrb[0].mxu0 %v4903
        %v5080 = vpop.f32.mrb[0].mxu0
        %v5081 = vadd.f32 0.0, %v5080
        %v5082 = vpop.f32.mrb[0].mxu0
        %v5083 = vpop.f32.mrb[0].mxu0
        %v5084 = vadd.f32 0.0, %v5083
        %v5085 = vpop.f32.mrb[0].mxu0
        %5086 = vmatprep.mubr.bf16.mxu0 0
        %5087 = vmatmul.mubr.bf16.gmra.mrb[0].mxu0 %v4904
        %v5088 = vpop.f32.mrb[0].mxu0
        %v5089 = vadd.f32 0.0, %v5088
        %v5090 = vpop.f32.mrb[0].mxu0
        %v5091 = vpop.f32.mrb[0].mxu0
        %v5092 = vadd.f32 0.0, %v5091
        %v5093 = vpop.f32.mrb[0].mxu0
        %5094 = vmatprep.mubr.bf16.mxu0 0
        %5095 = vmatmul.mubr.bf16.gmra.mrb[0].mxu0 %v4905
        %v5096 = vpop.f32.mrb[0].mxu0
        %v5097 = vadd.f32 0.0, %v5096
        %v5098 = vpop.f32.mrb[0].mxu0
        %v5099 = vpop.f32.mrb[0].mxu0
        %v5100 = vadd.f32 0.0, %v5099
        %v5101 = vpop.f32.mrb[0].mxu0
        %5102 = vmatprep.mubr.bf16.mxu0 0
        %5103 = vmatmul.mubr.bf16.gmra.mrb[0].mxu0 %v4906
        %v5104 = vpop.f32.mrb[0].mxu0
        %v5105 = vadd.f32 0.0, %v5104
        %v5106 = vpop.f32.mrb[0].mxu0
        %v5107 = vpop.f32.mrb[0].mxu0
        %v5108 = vadd.f32 0.0, %v5107
        %v5109 = vpop.f32.mrb[0].mxu0
        %5110 = vmatprep.mubr.bf16.mxu0 0
        %5111 = vmatmul.mubr.bf16.gmra.mrb[0].mxu0 %v4907
        %v5112 = vpop.f32.mrb[0].mxu0
        %v5113 = vadd.f32 0.0, %v5112
        %v5114 = vpop.f32.mrb[0].mxu0
        %v5115 = vpop.f32.mrb[0].mxu0
        %v5116 = vadd.f32 0.0, %v5115
        %v5117 = vpop.f32.mrb[0].mxu0
        %5118 = vmatprep.mubr.bf16.mxu0 0
        %5119 = vmatmul.mubr.bf16.gmra.mrb[0].mxu0 %v4908
        %v5120 = vpop.f32.mrb[0].mxu0
        %v5121 = vadd.f32 0.0, %v5120
        %v5122 = vpop.f32.mrb[0].mxu0
        %v5123 = vpop.f32.mrb[0].mxu0
        %v5124 = vadd.f32 0.0, %v5123
        %v5125 = vpop.f32.mrb[0].mxu0
        %5126 = vmatprep.mubr.bf16.mxu0 0
        %5127 = vmatmul.mubr.bf16.gmra.mrb[0].mxu0 %v4909
        %v5128 = vpop.f32.mrb[0].mxu0
        %v5129 = vadd.f32 0.0, %v5128
        %v5130 = vpop.f32.mrb[0].mxu0
        %v5131 = vpop.f32.mrb[0].mxu0
        %v5132 = vadd.f32 0.0, %v5131
        %v5133 = vpop.f32.mrb[0].mxu0
        %5134 = vdwg.mxu0
        %v5135 = vadd.f32 %v4654, %v5009
        %v5136 = vadd.f32 %v4655, %v5012
        %v5137 = vadd.f32 %v4656, %v5017
        %v5138 = vadd.f32 %v4657, %v5020
        %v5139 = vadd.f32 %v4658, %v5025
        %v5140 = vadd.f32 %v4659, %v5028
        %v5141 = vadd.f32 %v4660, %v5033
        %v5142 = vadd.f32 %v4661, %v5036
        %v5143 = vadd.f32 %v4662, %v5041
        %v5144 = vadd.f32 %v4663, %v5044
        %v5145 = vadd.f32 %v4664, %v5049
        %v5146 = vadd.f32 %v4665, %v5052
        %v5147 = vadd.f32 %v4666, %v5057
        %v5148 = vadd.f32 %v4667, %v5060
        %v5149 = vadd.f32 %v4668, %v5065
        %v5150 = vadd.f32 %v4669, %v5068
        %v5151 = vadd.f32 %v4670, %v5073
        %v5152 = vadd.f32 %v4671, %v5076
        %v5153 = vadd.f32 %v4672, %v5081
        %v5154 = vadd.f32 %v4673, %v5084
        %v5155 = vadd.f32 %v4674, %v5089
        %v5156 = vadd.f32 %v4675, %v5092
        %v5157 = vadd.f32 %v4676, %v5097
        %v5158 = vadd.f32 %v4677, %v5100
        %v5159 = vadd.f32 %v4678, %v5105
        %v5160 = vadd.f32 %v4679, %v5108
        %v5161 = vadd.f32 %v4680, %v5113
        %v5162 = vadd.f32 %v4681, %v5116
        %v5163 = vadd.f32 %v4682, %v5121
        %v5164 = vadd.f32 %v4683, %v5124
        %v5165 = vadd.f32 %v4684, %v5129
        %v5166 = vadd.f32 %v4685, %v5132
        %vm5167 = vcmp.gt.f32.partialorder %v5135, 0.0
        %vm5168 = vcmp.gt.f32.partialorder %v5136, 0.0
        %vm5169 = vcmp.gt.f32.partialorder %v5137, 0.0
        %vm5170 = vcmp.gt.f32.partialorder %v5138, 0.0
        %vm5171 = vcmp.gt.f32.partialorder %v5139, 0.0
        %vm5172 = vcmp.gt.f32.partialorder %v5140, 0.0
        %vm5173 = vcmp.gt.f32.partialorder %v5141, 0.0
        %vm5174 = vcmp.gt.f32.partialorder %v5142, 0.0
        %vm5175 = vcmp.gt.f32.partialorder %v5143, 0.0
        %vm5176 = vcmp.gt.f32.partialorder %v5144, 0.0
        %vm5177 = vcmp.gt.f32.partialorder %v5145, 0.0
        %vm5178 = vcmp.gt.f32.partialorder %v5146, 0.0
        %vm5179 = vcmp.gt.f32.partialorder %v5147, 0.0
        %vm5180 = vcmp.gt.f32.partialorder %v5148, 0.0
        %vm5181 = vcmp.gt.f32.partialorder %v5149, 0.0
        %vm5182 = vcmp.gt.f32.partialorder %v5150, 0.0
        %vm5183 = vcmp.gt.f32.partialorder %v5151, 0.0
        %vm5184 = vcmp.gt.f32.partialorder %v5152, 0.0
        %vm5185 = vcmp.gt.f32.partialorder %v5153, 0.0
        %vm5186 = vcmp.gt.f32.partialorder %v5154, 0.0
        %vm5187 = vcmp.gt.f32.partialorder %v5155, 0.0
        %vm5188 = vcmp.gt.f32.partialorder %v5156, 0.0
        %vm5189 = vcmp.gt.f32.partialorder %v5157, 0.0
        %vm5190 = vcmp.gt.f32.partialorder %v5158, 0.0
        %vm5191 = vcmp.gt.f32.partialorder %v5159, 0.0
        %vm5192 = vcmp.gt.f32.partialorder %v5160, 0.0
        %vm5193 = vcmp.gt.f32.partialorder %v5161, 0.0
        %vm5194 = vcmp.gt.f32.partialorder %v5162, 0.0
        %vm5195 = vcmp.gt.f32.partialorder %v5163, 0.0
        %vm5196 = vcmp.gt.f32.partialorder %v5164, 0.0
        %vm5197 = vcmp.gt.f32.partialorder %v5165, 0.0
        %vm5198 = vcmp.gt.f32.partialorder %v5166, 0.0
        %v5199 = vld [vmem:[%s5] sm:$0x1]
        %v5201 = vlaneseq
        %v5202 = vshrl.u32 %v5201, 7
        %v5203 = vsub.s32 0, %v5202
        %v5204 = vrot.slane %v5199, %v5203
        %v5206 = vmul.f32 %v5135, %v5204
        %v5207 = vmul.f32 %v5136, %v5204
        %v5208 = vmul.f32 %v5137, %v5204
        %v5209 = vmul.f32 %v5138, %v5204
        %v5210 = vmul.f32 %v5139, %v5204
        %v5211 = vmul.f32 %v5140, %v5204
        %v5212 = vmul.f32 %v5141, %v5204
        %v5213 = vmul.f32 %v5142, %v5204
        %v5214 = vmul.f32 %v5143, %v5204
        %v5215 = vmul.f32 %v5144, %v5204
        %v5216 = vmul.f32 %v5145, %v5204
        %v5217 = vmul.f32 %v5146, %v5204
        %v5218 = vmul.f32 %v5147, %v5204
        %v5219 = vmul.f32 %v5148, %v5204
        %v5220 = vmul.f32 %v5149, %v5204
        %v5221 = vmul.f32 %v5150, %v5204
        %v5222 = vmul.f32 %v5151, %v5204
        %v5223 = vmul.f32 %v5152, %v5204
        %v5224 = vmul.f32 %v5153, %v5204
        %v5225 = vmul.f32 %v5154, %v5204
        %v5226 = vmul.f32 %v5155, %v5204
        %v5227 = vmul.f32 %v5156, %v5204
        %v5228 = vmul.f32 %v5157, %v5204
        %v5229 = vmul.f32 %v5158, %v5204
        %v5230 = vmul.f32 %v5159, %v5204
        %v5231 = vmul.f32 %v5160, %v5204
        %v5232 = vmul.f32 %v5161, %v5204
        %v5233 = vmul.f32 %v5162, %v5204
        %v5234 = vmul.f32 %v5163, %v5204
        %v5235 = vmul.f32 %v5164, %v5204
        %v5236 = vmul.f32 %v5165, %v5204
        %v5237 = vmul.f32 %v5166, %v5204
        %v5238 = vsel %vm5167, %v5135, %v5206
        %v5239 = vsel %vm5168, %v5136, %v5207
        %v5240 = vsel %vm5169, %v5137, %v5208
        %v5241 = vsel %vm5170, %v5138, %v5209
        %v5242 = vsel %vm5171, %v5139, %v5210
        %v5243 = vsel %vm5172, %v5140, %v5211
        %v5244 = vsel %vm5173, %v5141, %v5212
        %v5245 = vsel %vm5174, %v5142, %v5213
        %v5246 = vsel %vm5175, %v5143, %v5214
        %v5247 = vsel %vm5176, %v5144, %v5215
        %v5248 = vsel %vm5177, %v5145, %v5216
        %v5249 = vsel %vm5178, %v5146, %v5217
        %v5250 = vsel %vm5179, %v5147, %v5218
        %v5251 = vsel %vm5180, %v5148, %v5219
        %v5252 = vsel %vm5181, %v5149, %v5220
        %v5253 = vsel %vm5182, %v5150, %v5221
        %v5254 = vsel %vm5183, %v5151, %v5222
        %v5255 = vsel %vm5184, %v5152, %v5223
        %v5256 = vsel %vm5185, %v5153, %v5224
        %v5257 = vsel %vm5186, %v5154, %v5225
        %v5258 = vsel %vm5187, %v5155, %v5226
        %v5259 = vsel %vm5188, %v5156, %v5227
        %v5260 = vsel %vm5189, %v5157, %v5228
        %v5261 = vsel %vm5190, %v5158, %v5229
        %v5262 = vsel %vm5191, %v5159, %v5230
        %v5263 = vsel %vm5192, %v5160, %v5231
        %v5264 = vsel %vm5193, %v5161, %v5232
        %v5265 = vsel %vm5194, %v5162, %v5233
        %v5266 = vsel %vm5195, %v5163, %v5234
        %v5267 = vsel %vm5196, %v5164, %v5235
        %v5268 = vsel %vm5197, %v5165, %v5236
        %v5269 = vsel %vm5198, %v5166, %v5237
        %5270 = vst [vmem:[%s512 + $0x1] sm:$0xff] %v5238
        %5271 = vst [vmem:[%s512 + $0x9] sm:$0xff] %v5239
        %5272 = vst [vmem:[%s512 + $0x19] sm:$0xff] %v5240
        %5273 = vst [vmem:[%s512 + $0x21] sm:$0xff] %v5241
        %5274 = vst [vmem:[%s512 + $0x31] sm:$0xff] %v5242
        %5275 = vst [vmem:[%s512 + $0x39] sm:$0xff] %v5243
        %5276 = vst [vmem:[%s512 + $0x49] sm:$0xff] %v5244
        %5277 = vst [vmem:[%s512 + $0x51] sm:$0xff] %v5245
        %5278 = vst [vmem:[%s512 + $0x61] sm:$0xff] %v5246
        %5279 = vst [vmem:[%s512 + $0x69] sm:$0xff] %v5247
        %5280 = vst [vmem:[%s512 + $0x79] sm:$0xff] %v5248
        %5281 = vst [vmem:[%s512 + $0x81] sm:$0xff] %v5249
        %5282 = vst [vmem:[%s512 + $0x91] sm:$0xff] %v5250
        %5283 = vst [vmem:[%s512 + $0x99] sm:$0xff] %v5251
        %5284 = vst [vmem:[%s512 + $0xa9] sm:$0xff] %v5252
        %5285 = vst [vmem:[%s512 + $0xb1] sm:$0xff] %v5253
        %5286 = vst [vmem:[%s512 + $0xc1] sm:$0xff] %v5254
        %5287 = vst [vmem:[%s512 + $0xc9] sm:$0xff] %v5255
        %5288 = vst [vmem:[%s512 + $0xd9] sm:$0xff] %v5256
        %5289 = vst [vmem:[%s512 + $0xe1] sm:$0xff] %v5257
        %5290 = vst [vmem:[%s512 + $0xf1] sm:$0xff] %v5258
        %5291 = vst [vmem:[%s512 + $0xf9] sm:$0xff] %v5259
        %5292 = vst [vmem:[%s512 + $0x109] sm:$0xff] %v5260
        %5293 = vst [vmem:[%s512 + $0x111] sm:$0xff] %v5261
        %5294 = vst [vmem:[%s512 + $0x121] sm:$0xff] %v5262
        %5295 = vst [vmem:[%s512 + $0x129] sm:$0xff] %v5263
        %5296 = vst [vmem:[%s512 + $0x139] sm:$0xff] %v5264
        %5297 = vst [vmem:[%s512 + $0x141] sm:$0xff] %v5265
        %5298 = vst [vmem:[%s512 + $0x151] sm:$0xff] %v5266
        %5299 = vst [vmem:[%s512 + $0x159] sm:$0xff] %v5267
        %5300 = vst [vmem:[%s512 + $0x169] sm:$0xff] %v5268
        %5301 = vst [vmem:[%s512 + $0x171] sm:$0xff] %v5269
        %v5302 = vld [vmem:[#allocation3] ss:$2 sm:$0xff]
        %s5303 = scalar_lea.vmem [#allocation3], 48
        %v5304 = vld [vmem:[%s5303] ss:$2 sm:$0xff]
        %s5305 = scalar_lea.vmem [#allocation3], 96
        %v5306 = vld [vmem:[%s5305] ss:$2 sm:$0xff]
        %s5307 = scalar_lea.vmem [#allocation3], 144
        %v5308 = vld [vmem:[%s5307] ss:$2 sm:$0xff]
        %s5309 = scalar_lea.vmem [#allocation3], 192
        %v5310 = vld [vmem:[%s5309] ss:$2 sm:$0xff]
        %s5311 = scalar_lea.vmem [#allocation3], 240
        %v5312 = vld [vmem:[%s5311] ss:$2 sm:$0xff]
        %s5313 = scalar_lea.vmem [#allocation3], 288
        %v5314 = vld [vmem:[%s5313] ss:$2 sm:$0xff]
        %s5315 = scalar_lea.vmem [#allocation3], 336
        %v5316 = vld [vmem:[%s5315] ss:$2 sm:$0xff]
        %v5317 = vpack.c.bf16 %v5304, %v5302
        %v5318 = vpack.c.bf16 %v5308, %v5306
        %v5319 = vpack.c.bf16 %v5312, %v5310
        %v5320 = vpack.c.bf16 %v5316, %v5314
        %s5321 = scalar_lea.vmem [#allocation3], 1
        %v5322 = vld [vmem:[%s5321] ss:$2 sm:$0xff]
        %s5323 = scalar_lea.vmem [#allocation3], 49
        %v5324 = vld [vmem:[%s5323] ss:$2 sm:$0xff]
        %s5325 = scalar_lea.vmem [#allocation3], 97
        %v5326 = vld [vmem:[%s5325] ss:$2 sm:$0xff]
        %s5327 = scalar_lea.vmem [#allocation3], 145
        %v5328 = vld [vmem:[%s5327] ss:$2 sm:$0xff]
        %s5329 = scalar_lea.vmem [#allocation3], 193
        %v5330 = vld [vmem:[%s5329] ss:$2 sm:$0xff]
        %s5331 = scalar_lea.vmem [#allocation3], 241
        %v5332 = vld [vmem:[%s5331] ss:$2 sm:$0xff]
        %s5333 = scalar_lea.vmem [#allocation3], 289
        %v5334 = vld [vmem:[%s5333] ss:$2 sm:$0xff]
        %s5335 = scalar_lea.vmem [#allocation3], 337
        %v5336 = vld [vmem:[%s5335] ss:$2 sm:$0xff]
        %v5337 = vpack.c.bf16 %v5324, %v5322
        %v5338 = vpack.c.bf16 %v5328, %v5326
        %v5339 = vpack.c.bf16 %v5332, %v5330
        %v5340 = vpack.c.bf16 %v5336, %v5334
        %v5341 = vld [vmem:[#allocation9] sm:$0xf]
        %v5342 = vld [vmem:[#allocation9 + $0x4] sm:$0xf]
        %v5343 = vld [vmem:[#allocation9 + $0x8] sm:$0xf]
        %v5344 = vld [vmem:[#allocation9 + $0xc] sm:$0xf]
        %v5345 = vld [vmem:[#allocation9 + $0x10] sm:$0xf]
        %v5346 = vld [vmem:[#allocation9 + $0x14] sm:$0xf]
        %v5347 = vld [vmem:[#allocation9 + $0x18] sm:$0xf]
        %v5348 = vld [vmem:[#allocation9 + $0x1c] sm:$0xf]
        %v5349 = vld [vmem:[#allocation9 + $0x20] sm:$0xf]
        %v5350 = vld [vmem:[#allocation9 + $0x24] sm:$0xf]
        %v5351 = vld [vmem:[#allocation9 + $0x28] sm:$0xf]
        %v5352 = vld [vmem:[#allocation9 + $0x2c] sm:$0xf]
        %v5353 = vld [vmem:[#allocation9 + $0x30] sm:$0xf]
        %v5354 = vld [vmem:[#allocation9 + $0x34] sm:$0xf]
        %v5355 = vld [vmem:[#allocation9 + $0x38] sm:$0xf]
        %v5356 = vld [vmem:[#allocation9 + $0x3c] sm:$0xf]
        %v5357 = vld [vmem:[#allocation9 + $0x40] sm:$0xf]
        %v5358 = vld [vmem:[#allocation9 + $0x44] sm:$0xf]
        %v5359 = vld [vmem:[#allocation9 + $0x48] sm:$0xf]
        %v5360 = vld [vmem:[#allocation9 + $0x4c] sm:$0xf]
        %v5361 = vld [vmem:[#allocation9 + $0x50] sm:$0xf]
        %v5362 = vld [vmem:[#allocation9 + $0x54] sm:$0xf]
        %v5363 = vld [vmem:[#allocation9 + $0x58] sm:$0xf]
        %v5364 = vld [vmem:[#allocation9 + $0x5c] sm:$0xf]
        %v5365 = vld [vmem:[#allocation9 + $0x60] sm:$0xf]
        %v5366 = vld [vmem:[#allocation9 + $0x64] sm:$0xf]
        %v5367 = vld [vmem:[#allocation9 + $0x68] sm:$0xf]
        %v5368 = vld [vmem:[#allocation9 + $0x6c] sm:$0xf]
        %v5369 = vld [vmem:[#allocation9 + $0x70] sm:$0xf]
        %v5370 = vld [vmem:[#allocation9 + $0x74] sm:$0xf]
        %v5371 = vld [vmem:[#allocation9 + $0x78] sm:$0xf]
        %v5372 = vld [vmem:[#allocation9 + $0x7c] sm:$0xf]
        %s5373 = scalar_lea.vmem [#allocation3], 2
        %v5374 = vld [vmem:[%s5373] ss:$2 sm:$0xff]
        %s5375 = scalar_lea.vmem [#allocation3], 50
        %v5376 = vld [vmem:[%s5375] ss:$2 sm:$0xff]
        %s5377 = scalar_lea.vmem [#allocation3], 98
        %v5378 = vld [vmem:[%s5377] ss:$2 sm:$0xff]
        %s5379 = scalar_lea.vmem [#allocation3], 146
        %v5380 = vld [vmem:[%s5379] ss:$2 sm:$0xff]
        %s5381 = scalar_lea.vmem [#allocation3], 194
        %v5382 = vld [vmem:[%s5381] ss:$2 sm:$0xff]
        %s5383 = scalar_lea.vmem [#allocation3], 242
        %v5384 = vld [vmem:[%s5383] ss:$2 sm:$0xff]
        %s5385 = scalar_lea.vmem [#allocation3], 290
        %v5386 = vld [vmem:[%s5385] ss:$2 sm:$0xff]
        %s5387 = scalar_lea.vmem [#allocation3], 338
        %v5388 = vld [vmem:[%s5387] ss:$2 sm:$0xff]
        %v5389 = vpack.c.bf16 %v5376, %v5374
        %v5390 = vpack.c.bf16 %v5380, %v5378
        %v5391 = vpack.c.bf16 %v5384, %v5382
        %v5392 = vpack.c.bf16 %v5388, %v5386
        %v5393 = vld [vmem:[%s512] ss:$2 sm:$0xff]
        %s5394 = scalar_lea.vmem %s512, 48 [#allocation3]
        %v5395 = vld [vmem:[%s5394] ss:$2 sm:$0xff]
        %s5396 = scalar_lea.vmem %s512, 96 [#allocation3]
        %v5397 = vld [vmem:[%s5396] ss:$2 sm:$0xff]
        %s5398 = scalar_lea.vmem %s512, 144 [#allocation3]
        %v5399 = vld [vmem:[%s5398] ss:$2 sm:$0xff]
        %s5400 = scalar_lea.vmem %s512, 192 [#allocation3]
        %v5401 = vld [vmem:[%s5400] ss:$2 sm:$0xff]
        %s5402 = scalar_lea.vmem %s512, 240 [#allocation3]
        %v5403 = vld [vmem:[%s5402] ss:$2 sm:$0xff]
        %s5404 = scalar_lea.vmem %s512, 288 [#allocation3]
        %v5405 = vld [vmem:[%s5404] ss:$2 sm:$0xff]
        %s5406 = scalar_lea.vmem %s512, 336 [#allocation3]
        %v5407 = vld [vmem:[%s5406] ss:$2 sm:$0xff]
        %v5408 = vpack.c.bf16 %v5395, %v5393
        %v5409 = vpack.c.bf16 %v5399, %v5397
        %v5410 = vpack.c.bf16 %v5403, %v5401
        %v5411 = vpack.c.bf16 %v5407, %v5405
        %v5412 = vld [vmem:[#allocation9 + $0x80] sm:$0xf]
        %v5413 = vld [vmem:[#allocation9 + $0x84] sm:$0xf]
        %v5414 = vld [vmem:[#allocation9 + $0x88] sm:$0xf]
        %v5415 = vld [vmem:[#allocation9 + $0x8c] sm:$0xf]
        %v5416 = vld [vmem:[#allocation9 + $0x90] sm:$0xf]
        %v5417 = vld [vmem:[#allocation9 + $0x94] sm:$0xf]
        %v5418 = vld [vmem:[#allocation9 + $0x98] sm:$0xf]
        %v5419 = vld [vmem:[#allocation9 + $0x9c] sm:$0xf]
        %v5420 = vld [vmem:[#allocation9 + $0xa0] sm:$0xf]
        %v5421 = vld [vmem:[#allocation9 + $0xa4] sm:$0xf]
        %v5422 = vld [vmem:[#allocation9 + $0xa8] sm:$0xf]
        %v5423 = vld [vmem:[#allocation9 + $0xac] sm:$0xf]
        %v5424 = vld [vmem:[#allocation9 + $0xb0] sm:$0xf]
        %v5425 = vld [vmem:[#allocation9 + $0xb4] sm:$0xf]
        %v5426 = vld [vmem:[#allocation9 + $0xb8] sm:$0xf]
        %v5427 = vld [vmem:[#allocation9 + $0xbc] sm:$0xf]
        %v5428 = vld [vmem:[#allocation9 + $0xc0] sm:$0xf]
        %v5429 = vld [vmem:[#allocation9 + $0xc4] sm:$0xf]
        %v5430 = vld [vmem:[#allocation9 + $0xc8] sm:$0xf]
        %v5431 = vld [vmem:[#allocation9 + $0xcc] sm:$0xf]
        %v5432 = vld [vmem:[#allocation9 + $0xd0] sm:$0xf]
        %v5433 = vld [vmem:[#allocation9 + $0xd4] sm:$0xf]
        %v5434 = vld [vmem:[#allocation9 + $0xd8] sm:$0xf]
        %v5435 = vld [vmem:[#allocation9 + $0xdc] sm:$0xf]
        %v5436 = vld [vmem:[#allocation9 + $0xe0] sm:$0xf]
        %v5437 = vld [vmem:[#allocation9 + $0xe4] sm:$0xf]
        %v5438 = vld [vmem:[#allocation9 + $0xe8] sm:$0xf]
        %v5439 = vld [vmem:[#allocation9 + $0xec] sm:$0xf]
        %v5440 = vld [vmem:[#allocation9 + $0xf0] sm:$0xf]
        %v5441 = vld [vmem:[#allocation9 + $0xf4] sm:$0xf]
        %v5442 = vld [vmem:[#allocation9 + $0xf8] sm:$0xf]
        %v5443 = vld [vmem:[#allocation9 + $0xfc] sm:$0xf]
        %v5476 = vunpack.c.l.b16 %v5412
        %v5477 = vunpack.c.l.b16 %v5413
        %v5478 = vunpack.c.l.b16 %v5414
        %v5479 = vunpack.c.l.b16 %v5415
        %v5480 = vunpack.c.l.b16 %v5416
        %v5481 = vunpack.c.l.b16 %v5417
        %v5482 = vunpack.c.l.b16 %v5418
        %v5483 = vunpack.c.l.b16 %v5419
        %v5484 = vunpack.c.l.b16 %v5420
        %v5485 = vunpack.c.l.b16 %v5421
        %v5486 = vunpack.c.l.b16 %v5422
        %v5487 = vunpack.c.l.b16 %v5423
        %v5488 = vunpack.c.l.b16 %v5424
        %v5489 = vunpack.c.l.b16 %v5425
        %v5490 = vunpack.c.l.b16 %v5426
        %v5491 = vunpack.c.l.b16 %v5427
        %v5492 = vunpack.c.l.b16 %v5428
        %v5493 = vunpack.c.l.b16 %v5429
        %v5494 = vunpack.c.l.b16 %v5430
        %v5495 = vunpack.c.l.b16 %v5431
        %v5496 = vunpack.c.l.b16 %v5432
        %v5497 = vunpack.c.l.b16 %v5433
        %v5498 = vunpack.c.l.b16 %v5434
        %v5499 = vunpack.c.l.b16 %v5435
        %v5500 = vunpack.c.l.b16 %v5436
        %v5501 = vunpack.c.l.b16 %v5437
        %v5502 = vunpack.c.l.b16 %v5438
        %v5503 = vunpack.c.l.b16 %v5439
        %v5504 = vunpack.c.l.b16 %v5440
        %v5505 = vunpack.c.l.b16 %v5441
        %v5506 = vunpack.c.l.b16 %v5442
        %v5507 = vunpack.c.l.b16 %v5443
        %v5508 = vpack.c.b16 %v5477, %v5476
        %v5509 = vpack.c.b16 %v5479, %v5478
        %v5510 = vpack.c.b16 %v5481, %v5480
        %v5511 = vpack.c.b16 %v5483, %v5482
        %v5512 = vpack.c.b16 %v5485, %v5484
        %v5513 = vpack.c.b16 %v5487, %v5486
        %v5514 = vpack.c.b16 %v5489, %v5488
        %v5515 = vpack.c.b16 %v5491, %v5490
        %v5516 = vpack.c.b16 %v5493, %v5492
        %v5517 = vpack.c.b16 %v5495, %v5494
        %v5518 = vpack.c.b16 %v5497, %v5496
        %v5519 = vpack.c.b16 %v5499, %v5498
        %v5520 = vpack.c.b16 %v5501, %v5500
        %v5521 = vpack.c.b16 %v5503, %v5502
        %v5522 = vpack.c.b16 %v5505, %v5504
        %v5523 = vpack.c.b16 %v5507, %v5506
        %5540 = vmatprep.subr.bf16.mxu0 0
        %5541 = vmatpush1.bf16.msra.mxu0 %v5508
        %5542 = vmatprep.subr.bf16.mxu0 0
        %5543 = vmatpush1.bf16.msra.mxu0 %v5509
        %5544 = vmatprep.subr.bf16.mxu0 0
        %5545 = vmatpush1.bf16.msra.mxu0 %v5510
        %5546 = vmatprep.subr.bf16.mxu0 0
        %5547 = vmatpush1.bf16.msra.mxu0 %v5511
        %5548 = vmatprep.subr.bf16.mxu0 0
        %5549 = vmatpush1.bf16.msra.mxu0 %v5512
        %5550 = vmatprep.subr.bf16.mxu0 0
        %5551 = vmatpush1.bf16.msra.mxu0 %v5513
        %5552 = vmatprep.subr.bf16.mxu0 0
        %5553 = vmatpush1.bf16.msra.mxu0 %v5514
        %5554 = vmatprep.subr.bf16.mxu0 0
        %5555 = vmatpush1.bf16.msra.mxu0 %v5515
        %5556 = vmatprep.subr.bf16.mxu0 0
        %5557 = vmatpush1.bf16.msra.mxu0 %v5516
        %5558 = vmatprep.subr.bf16.mxu0 0
        %5559 = vmatpush1.bf16.msra.mxu0 %v5517
        %5560 = vmatprep.subr.bf16.mxu0 0
        %5561 = vmatpush1.bf16.msra.mxu0 %v5518
        %5562 = vmatprep.subr.bf16.mxu0 0
        %5563 = vmatpush1.bf16.msra.mxu0 %v5519
        %5564 = vmatprep.subr.bf16.mxu0 0
        %5565 = vmatpush1.bf16.msra.mxu0 %v5520
        %5566 = vmatprep.subr.bf16.mxu0 0
        %5567 = vmatpush1.bf16.msra.mxu0 %v5521
        %5568 = vmatprep.subr.bf16.mxu0 0
        %5569 = vmatpush1.bf16.msra.mxu0 %v5522
        %5570 = vmatprep.subr.bf16.mxu0 0
        %5571 = vmatpush1.bf16.msra.mxu0 %v5523
        %5572 = vmatprep.mubr.bf16.mxu0 %v5408
        %5573 = vmatmul.mubr.bf16.gmra.mrb[0].mxu0 %v5389
        %v5574 = vpop.f32.mrb[0].mxu0
        %v5575 = vadd.f32 0.0, %v5574
        %v5576 = vpop.f32.mrb[0].mxu0
        %v5577 = vpop.f32.mrb[0].mxu0
        %v5578 = vadd.f32 0.0, %v5577
        %v5579 = vpop.f32.mrb[0].mxu0
        %5580 = vmatprep.mubr.bf16.mxu0 %v5409
        %5581 = vmatmul.mubr.bf16.gmra.mrb[0].mxu0 %v5390
        %v5582 = vpop.f32.mrb[0].mxu0
        %v5583 = vadd.f32 0.0, %v5582
        %v5584 = vpop.f32.mrb[0].mxu0
        %v5585 = vpop.f32.mrb[0].mxu0
        %v5586 = vadd.f32 0.0, %v5585
        %v5587 = vpop.f32.mrb[0].mxu0
        %5588 = vmatprep.mubr.bf16.mxu0 %v5410
        %5589 = vmatmul.mubr.bf16.gmra.mrb[0].mxu0 %v5391
        %v5590 = vpop.f32.mrb[0].mxu0
        %v5591 = vadd.f32 0.0, %v5590
        %v5592 = vpop.f32.mrb[0].mxu0
        %v5593 = vpop.f32.mrb[0].mxu0
        %v5594 = vadd.f32 0.0, %v5593
        %v5595 = vpop.f32.mrb[0].mxu0
        %5596 = vmatprep.mubr.bf16.mxu0 %v5411
        %5597 = vmatmul.mubr.bf16.gmra.mrb[0].mxu0 %v5392
        %v5598 = vpop.f32.mrb[0].mxu0
        %v5599 = vadd.f32 0.0, %v5598
        %v5600 = vpop.f32.mrb[0].mxu0
        %v5601 = vpop.f32.mrb[0].mxu0
        %v5602 = vadd.f32 0.0, %v5601
        %v5603 = vpop.f32.mrb[0].mxu0
        %5604 = vdwg.mxu0
        %v5637 = vunpack.c.l.b16 %v5341
        %v5638 = vunpack.c.l.b16 %v5342
        %v5639 = vunpack.c.l.b16 %v5343
        %v5640 = vunpack.c.l.b16 %v5344
        %v5641 = vunpack.c.l.b16 %v5345
        %v5642 = vunpack.c.l.b16 %v5346
        %v5643 = vunpack.c.l.b16 %v5347
        %v5644 = vunpack.c.l.b16 %v5348
        %v5645 = vunpack.c.l.b16 %v5349
        %v5646 = vunpack.c.l.b16 %v5350
        %v5647 = vunpack.c.l.b16 %v5351
        %v5648 = vunpack.c.l.b16 %v5352
        %v5649 = vunpack.c.l.b16 %v5353
        %v5650 = vunpack.c.l.b16 %v5354
        %v5651 = vunpack.c.l.b16 %v5355
        %v5652 = vunpack.c.l.b16 %v5356
        %v5653 = vunpack.c.l.b16 %v5357
        %v5654 = vunpack.c.l.b16 %v5358
        %v5655 = vunpack.c.l.b16 %v5359
        %v5656 = vunpack.c.l.b16 %v5360
        %v5657 = vunpack.c.l.b16 %v5361
        %v5658 = vunpack.c.l.b16 %v5362
        %v5659 = vunpack.c.l.b16 %v5363
        %v5660 = vunpack.c.l.b16 %v5364
        %v5661 = vunpack.c.l.b16 %v5365
        %v5662 = vunpack.c.l.b16 %v5366
        %v5663 = vunpack.c.l.b16 %v5367
        %v5664 = vunpack.c.l.b16 %v5368
        %v5665 = vunpack.c.l.b16 %v5369
        %v5666 = vunpack.c.l.b16 %v5370
        %v5667 = vunpack.c.l.b16 %v5371
        %v5668 = vunpack.c.l.b16 %v5372
        %v5669 = vpack.c.b16 %v5638, %v5637
        %v5670 = vpack.c.b16 %v5640, %v5639
        %v5671 = vpack.c.b16 %v5642, %v5641
        %v5672 = vpack.c.b16 %v5644, %v5643
        %v5673 = vpack.c.b16 %v5646, %v5645
        %v5674 = vpack.c.b16 %v5648, %v5647
        %v5675 = vpack.c.b16 %v5650, %v5649
        %v5676 = vpack.c.b16 %v5652, %v5651
        %v5677 = vpack.c.b16 %v5654, %v5653
        %v5678 = vpack.c.b16 %v5656, %v5655
        %v5679 = vpack.c.b16 %v5658, %v5657
        %v5680 = vpack.c.b16 %v5660, %v5659
        %v5681 = vpack.c.b16 %v5662, %v5661
        %v5682 = vpack.c.b16 %v5664, %v5663
        %v5683 = vpack.c.b16 %v5666, %v5665
        %v5684 = vpack.c.b16 %v5668, %v5667
        %5701 = vmatprep.subr.bf16.mxu0 0
        %5702 = vmatpush1.bf16.msra.mxu0 %v5669
        %5703 = vmatprep.subr.bf16.mxu0 0
        %5704 = vmatpush1.bf16.msra.mxu0 %v5670
        %5705 = vmatprep.subr.bf16.mxu0 0
        %5706 = vmatpush1.bf16.msra.mxu0 %v5671
        %5707 = vmatprep.subr.bf16.mxu0 0
        %5708 = vmatpush1.bf16.msra.mxu0 %v5672
        %5709 = vmatprep.subr.bf16.mxu0 0
        %5710 = vmatpush1.bf16.msra.mxu0 %v5673
        %5711 = vmatprep.subr.bf16.mxu0 0
        %5712 = vmatpush1.bf16.msra.mxu0 %v5674
        %5713 = vmatprep.subr.bf16.mxu0 0
        %5714 = vmatpush1.bf16.msra.mxu0 %v5675
        %5715 = vmatprep.subr.bf16.mxu0 0
        %5716 = vmatpush1.bf16.msra.mxu0 %v5676
        %5717 = vmatprep.subr.bf16.mxu0 0
        %5718 = vmatpush1.bf16.msra.mxu0 %v5677
        %5719 = vmatprep.subr.bf16.mxu0 0
        %5720 = vmatpush1.bf16.msra.mxu0 %v5678
        %5721 = vmatprep.subr.bf16.mxu0 0
        %5722 = vmatpush1.bf16.msra.mxu0 %v5679
        %5723 = vmatprep.subr.bf16.mxu0 0
        %5724 = vmatpush1.bf16.msra.mxu0 %v5680
        %5725 = vmatprep.subr.bf16.mxu0 0
        %5726 = vmatpush1.bf16.msra.mxu0 %v5681
        %5727 = vmatprep.subr.bf16.mxu0 0
        %5728 = vmatpush1.bf16.msra.mxu0 %v5682
        %5729 = vmatprep.subr.bf16.mxu0 0
        %5730 = vmatpush1.bf16.msra.mxu0 %v5683
        %5731 = vmatprep.subr.bf16.mxu0 0
        %5732 = vmatpush1.bf16.msra.mxu0 %v5684
        %5733 = vmatprep.mubr.bf16.mxu0 %v5337
        %5734 = vmatmul.mubr.bf16.gmra.mrb[0].mxu0 %v5317
        %v5735 = vpop.f32.mrb[0].mxu0
        %v5736 = vadd.f32 %v5575, %v5735
        %v5737 = vpop.f32.mrb[0].mxu0
        %v5738 = vpop.f32.mrb[0].mxu0
        %v5739 = vadd.f32 %v5578, %v5738
        %v5740 = vpop.f32.mrb[0].mxu0
        %5741 = vmatprep.mubr.bf16.mxu0 %v5338
        %5742 = vmatmul.mubr.bf16.gmra.mrb[0].mxu0 %v5318
        %v5743 = vpop.f32.mrb[0].mxu0
        %v5744 = vadd.f32 %v5583, %v5743
        %v5745 = vpop.f32.mrb[0].mxu0
        %v5746 = vpop.f32.mrb[0].mxu0
        %v5747 = vadd.f32 %v5586, %v5746
        %v5748 = vpop.f32.mrb[0].mxu0
        %5749 = vmatprep.mubr.bf16.mxu0 %v5339
        %5750 = vmatmul.mubr.bf16.gmra.mrb[0].mxu0 %v5319
        %v5751 = vpop.f32.mrb[0].mxu0
        %v5752 = vadd.f32 %v5591, %v5751
        %v5753 = vpop.f32.mrb[0].mxu0
        %v5754 = vpop.f32.mrb[0].mxu0
        %v5755 = vadd.f32 %v5594, %v5754
        %v5756 = vpop.f32.mrb[0].mxu0
        %5757 = vmatprep.mubr.bf16.mxu0 %v5340
        %5758 = vmatmul.mubr.bf16.gmra.mrb[0].mxu0 %v5320
        %v5759 = vpop.f32.mrb[0].mxu0
        %v5760 = vadd.f32 %v5599, %v5759
        %v5761 = vpop.f32.mrb[0].mxu0
        %v5762 = vpop.f32.mrb[0].mxu0
        %v5763 = vadd.f32 %v5602, %v5762
        %v5764 = vpop.f32.mrb[0].mxu0
        %5765 = vdwg.mxu0
        %s5766 = scalar_lea.vmem %s512, 1 [#allocation3]
        %v5767 = vld [vmem:[%s5766] ss:$2 sm:$0xff]
        %s5768 = scalar_lea.vmem %s512, 49 [#allocation3]
        %v5769 = vld [vmem:[%s5768] ss:$2 sm:$0xff]
        %s5770 = scalar_lea.vmem %s512, 97 [#allocation3]
        %v5771 = vld [vmem:[%s5770] ss:$2 sm:$0xff]
        %s5772 = scalar_lea.vmem %s512, 145 [#allocation3]
        %v5773 = vld [vmem:[%s5772] ss:$2 sm:$0xff]
        %s5774 = scalar_lea.vmem %s512, 193 [#allocation3]
        %v5775 = vld [vmem:[%s5774] ss:$2 sm:$0xff]
        %s5776 = scalar_lea.vmem %s512, 241 [#allocation3]
        %v5777 = vld [vmem:[%s5776] ss:$2 sm:$0xff]
        %s5778 = scalar_lea.vmem %s512, 289 [#allocation3]
        %v5779 = vld [vmem:[%s5778] ss:$2 sm:$0xff]
        %s5780 = scalar_lea.vmem %s512, 337 [#allocation3]
        %v5781 = vld [vmem:[%s5780] ss:$2 sm:$0xff]
        %v5782 = vpack.c.bf16 %v5769, %v5767
        %v5783 = vpack.c.bf16 %v5773, %v5771
        %v5784 = vpack.c.bf16 %v5777, %v5775
        %v5785 = vpack.c.bf16 %v5781, %v5779
        %s5786 = scalar_lea.vmem %s512, 2 [#allocation3]
        %v5787 = vld [vmem:[%s5786] ss:$2 sm:$0xff]
        %s5788 = scalar_lea.vmem %s512, 50 [#allocation3]
        %v5789 = vld [vmem:[%s5788] ss:$2 sm:$0xff]
        %s5790 = scalar_lea.vmem %s512, 98 [#allocation3]
        %v5791 = vld [vmem:[%s5790] ss:$2 sm:$0xff]
        %s5792 = scalar_lea.vmem %s512, 146 [#allocation3]
        %v5793 = vld [vmem:[%s5792] ss:$2 sm:$0xff]
        %s5794 = scalar_lea.vmem %s512, 194 [#allocation3]
        %v5795 = vld [vmem:[%s5794] ss:$2 sm:$0xff]
        %s5796 = scalar_lea.vmem %s512, 242 [#allocation3]
        %v5797 = vld [vmem:[%s5796] ss:$2 sm:$0xff]
        %s5798 = scalar_lea.vmem %s512, 290 [#allocation3]
        %v5799 = vld [vmem:[%s5798] ss:$2 sm:$0xff]
        %s5800 = scalar_lea.vmem %s512, 338 [#allocation3]
        %v5801 = vld [vmem:[%s5800] ss:$2 sm:$0xff]
        %v5802 = vpack.c.bf16 %v5789, %v5787
        %v5803 = vpack.c.bf16 %v5793, %v5791
        %v5804 = vpack.c.bf16 %v5797, %v5795
        %v5805 = vpack.c.bf16 %v5801, %v5799
        %v5806 = vld [vmem:[#allocation9 + $0x100] sm:$0xf]
        %v5807 = vld [vmem:[#allocation9 + $0x104] sm:$0xf]
        %v5808 = vld [vmem:[#allocation9 + $0x108] sm:$0xf]
        %v5809 = vld [vmem:[#allocation9 + $0x10c] sm:$0xf]
        %v5810 = vld [vmem:[#allocation9 + $0x110] sm:$0xf]
        %v5811 = vld [vmem:[#allocation9 + $0x114] sm:$0xf]
        %v5812 = vld [vmem:[#allocation9 + $0x118] sm:$0xf]
        %v5813 = vld [vmem:[#allocation9 + $0x11c] sm:$0xf]
        %v5814 = vld [vmem:[#allocation9 + $0x120] sm:$0xf]
        %v5815 = vld [vmem:[#allocation9 + $0x124] sm:$0xf]
        %v5816 = vld [vmem:[#allocation9 + $0x128] sm:$0xf]
        %v5817 = vld [vmem:[#allocation9 + $0x12c] sm:$0xf]
        %v5818 = vld [vmem:[#allocation9 + $0x130] sm:$0xf]
        %v5819 = vld [vmem:[#allocation9 + $0x134] sm:$0xf]
        %v5820 = vld [vmem:[#allocation9 + $0x138] sm:$0xf]
        %v5821 = vld [vmem:[#allocation9 + $0x13c] sm:$0xf]
        %v5822 = vld [vmem:[#allocation9 + $0x140] sm:$0xf]
        %v5823 = vld [vmem:[#allocation9 + $0x144] sm:$0xf]
        %v5824 = vld [vmem:[#allocation9 + $0x148] sm:$0xf]
        %v5825 = vld [vmem:[#allocation9 + $0x14c] sm:$0xf]
        %v5826 = vld [vmem:[#allocation9 + $0x150] sm:$0xf]
        %v5827 = vld [vmem:[#allocation9 + $0x154] sm:$0xf]
        %v5828 = vld [vmem:[#allocation9 + $0x158] sm:$0xf]
        %v5829 = vld [vmem:[#allocation9 + $0x15c] sm:$0xf]
        %v5830 = vld [vmem:[#allocation9 + $0x160] sm:$0xf]
        %v5831 = vld [vmem:[#allocation9 + $0x164] sm:$0xf]
        %v5832 = vld [vmem:[#allocation9 + $0x168] sm:$0xf]
        %v5833 = vld [vmem:[#allocation9 + $0x16c] sm:$0xf]
        %v5834 = vld [vmem:[#allocation9 + $0x170] sm:$0xf]
        %v5835 = vld [vmem:[#allocation9 + $0x174] sm:$0xf]
        %v5836 = vld [vmem:[#allocation9 + $0x178] sm:$0xf]
        %v5837 = vld [vmem:[#allocation9 + $0x17c] sm:$0xf]
        %v5870 = vunpack.c.l.b16 %v5806
        %v5871 = vunpack.c.l.b16 %v5807
        %v5872 = vunpack.c.l.b16 %v5808
        %v5873 = vunpack.c.l.b16 %v5809
        %v5874 = vunpack.c.l.b16 %v5810
        %v5875 = vunpack.c.l.b16 %v5811
        %v5876 = vunpack.c.l.b16 %v5812
        %v5877 = vunpack.c.l.b16 %v5813
        %v5878 = vunpack.c.l.b16 %v5814
        %v5879 = vunpack.c.l.b16 %v5815
        %v5880 = vunpack.c.l.b16 %v5816
        %v5881 = vunpack.c.l.b16 %v5817
        %v5882 = vunpack.c.l.b16 %v5818
        %v5883 = vunpack.c.l.b16 %v5819
        %v5884 = vunpack.c.l.b16 %v5820
        %v5885 = vunpack.c.l.b16 %v5821
        %v5886 = vunpack.c.l.b16 %v5822
        %v5887 = vunpack.c.l.b16 %v5823
        %v5888 = vunpack.c.l.b16 %v5824
        %v5889 = vunpack.c.l.b16 %v5825
        %v5890 = vunpack.c.l.b16 %v5826
        %v5891 = vunpack.c.l.b16 %v5827
        %v5892 = vunpack.c.l.b16 %v5828
        %v5893 = vunpack.c.l.b16 %v5829
        %v5894 = vunpack.c.l.b16 %v5830
        %v5895 = vunpack.c.l.b16 %v5831
        %v5896 = vunpack.c.l.b16 %v5832
        %v5897 = vunpack.c.l.b16 %v5833
        %v5898 = vunpack.c.l.b16 %v5834
        %v5899 = vunpack.c.l.b16 %v5835
        %v5900 = vunpack.c.l.b16 %v5836
        %v5901 = vunpack.c.l.b16 %v5837
        %v5902 = vpack.c.b16 %v5871, %v5870
        %v5903 = vpack.c.b16 %v5873, %v5872
        %v5904 = vpack.c.b16 %v5875, %v5874
        %v5905 = vpack.c.b16 %v5877, %v5876
        %v5906 = vpack.c.b16 %v5879, %v5878
        %v5907 = vpack.c.b16 %v5881, %v5880
        %v5908 = vpack.c.b16 %v5883, %v5882
        %v5909 = vpack.c.b16 %v5885, %v5884
        %v5910 = vpack.c.b16 %v5887, %v5886
        %v5911 = vpack.c.b16 %v5889, %v5888
        %v5912 = vpack.c.b16 %v5891, %v5890
        %v5913 = vpack.c.b16 %v5893, %v5892
        %v5914 = vpack.c.b16 %v5895, %v5894
        %v5915 = vpack.c.b16 %v5897, %v5896
        %v5916 = vpack.c.b16 %v5899, %v5898
        %v5917 = vpack.c.b16 %v5901, %v5900
        %5934 = vmatprep.subr.bf16.mxu0 0
        %5935 = vmatpush1.bf16.msra.mxu0 %v5902
        %5936 = vmatprep.subr.bf16.mxu0 0
        %5937 = vmatpush1.bf16.msra.mxu0 %v5903
        %5938 = vmatprep.subr.bf16.mxu0 0
        %5939 = vmatpush1.bf16.msra.mxu0 %v5904
        %5940 = vmatprep.subr.bf16.mxu0 0
        %5941 = vmatpush1.bf16.msra.mxu0 %v5905
        %5942 = vmatprep.subr.bf16.mxu0 0
        %5943 = vmatpush1.bf16.msra.mxu0 %v5906
        %5944 = vmatprep.subr.bf16.mxu0 0
        %5945 = vmatpush1.bf16.msra.mxu0 %v5907
        %5946 = vmatprep.subr.bf16.mxu0 0
        %5947 = vmatpush1.bf16.msra.mxu0 %v5908
        %5948 = vmatprep.subr.bf16.mxu0 0
        %5949 = vmatpush1.bf16.msra.mxu0 %v5909
        %5950 = vmatprep.subr.bf16.mxu0 0
        %5951 = vmatpush1.bf16.msra.mxu0 %v5910
        %5952 = vmatprep.subr.bf16.mxu0 0
        %5953 = vmatpush1.bf16.msra.mxu0 %v5911
        %5954 = vmatprep.subr.bf16.mxu0 0
        %5955 = vmatpush1.bf16.msra.mxu0 %v5912
        %5956 = vmatprep.subr.bf16.mxu0 0
        %5957 = vmatpush1.bf16.msra.mxu0 %v5913
        %5958 = vmatprep.subr.bf16.mxu0 0
        %5959 = vmatpush1.bf16.msra.mxu0 %v5914
        %5960 = vmatprep.subr.bf16.mxu0 0
        %5961 = vmatpush1.bf16.msra.mxu0 %v5915
        %5962 = vmatprep.subr.bf16.mxu0 0
        %5963 = vmatpush1.bf16.msra.mxu0 %v5916
        %5964 = vmatprep.subr.bf16.mxu0 0
        %5965 = vmatpush1.bf16.msra.mxu0 %v5917
        %5966 = vmatprep.mubr.bf16.mxu0 %v5802
        %5967 = vmatmul.mubr.bf16.gmra.mrb[0].mxu0 %v5782
        %v5968 = vpop.f32.mrb[0].mxu0
        %v5969 = vadd.f32 0.0, %v5968
        %v5970 = vpop.f32.mrb[0].mxu0
        %v5971 = vpop.f32.mrb[0].mxu0
        %v5972 = vadd.f32 0.0, %v5971
        %v5973 = vpop.f32.mrb[0].mxu0
        %5974 = vmatprep.mubr.bf16.mxu0 %v5803
        %5975 = vmatmul.mubr.bf16.gmra.mrb[0].mxu0 %v5783
        %v5976 = vpop.f32.mrb[0].mxu0
        %v5977 = vadd.f32 0.0, %v5976
        %v5978 = vpop.f32.mrb[0].mxu0
        %v5979 = vpop.f32.mrb[0].mxu0
        %v5980 = vadd.f32 0.0, %v5979
        %v5981 = vpop.f32.mrb[0].mxu0
        %5982 = vmatprep.mubr.bf16.mxu0 %v5804
        %5983 = vmatmul.mubr.bf16.gmra.mrb[0].mxu0 %v5784
        %v5984 = vpop.f32.mrb[0].mxu0
        %v5985 = vadd.f32 0.0, %v5984
        %v5986 = vpop.f32.mrb[0].mxu0
        %v5987 = vpop.f32.mrb[0].mxu0
        %v5988 = vadd.f32 0.0, %v5987
        %v5989 = vpop.f32.mrb[0].mxu0
        %5990 = vmatprep.mubr.bf16.mxu0 %v5805
        %5991 = vmatmul.mubr.bf16.gmra.mrb[0].mxu0 %v5785
        %v5992 = vpop.f32.mrb[0].mxu0
        %v5993 = vadd.f32 0.0, %v5992
        %v5994 = vpop.f32.mrb[0].mxu0
        %v5995 = vpop.f32.mrb[0].mxu0
        %v5996 = vadd.f32 0.0, %v5995
        %v5997 = vpop.f32.mrb[0].mxu0
        %5998 = vdwg.mxu0
        %v5999 = vadd.f32 %v5736, %v5969
        %v6000 = vadd.f32 %v5739, %v5972
        %v6001 = vadd.f32 %v5744, %v5977
        %v6002 = vadd.f32 %v5747, %v5980
        %v6003 = vadd.f32 %v5752, %v5985
        %v6004 = vadd.f32 %v5755, %v5988
        %v6005 = vadd.f32 %v5760, %v5993
        %v6006 = vadd.f32 %v5763, %v5996
        %s6007 = scalar_lea.vmem [#allocation3], 48
        %v6008 = vld [vmem:[%s6007] ss:$2 sm:$0xff]
        %s6009 = scalar_lea.vmem %s6007, 48 [#allocation3]
        %v6010 = vld [vmem:[%s6009] ss:$2 sm:$0xff]
        %s6011 = scalar_lea.vmem %s6007, 96 [#allocation3]
        %v6012 = vld [vmem:[%s6011] ss:$2 sm:$0xff]
        %s6013 = scalar_lea.vmem %s6007, 144 [#allocation3]
        %v6014 = vld [vmem:[%s6013] ss:$2 sm:$0xff]
        %s6015 = scalar_lea.vmem %s6007, 192 [#allocation3]
        %v6016 = vld [vmem:[%s6015] ss:$2 sm:$0xff]
        %s6017 = scalar_lea.vmem %s6007, 240 [#allocation3]
        %v6018 = vld [vmem:[%s6017] ss:$2 sm:$0xff]
        %s6019 = scalar_lea.vmem %s6007, 288 [#allocation3]
        %v6020 = vld [vmem:[%s6019] ss:$2 sm:$0xff]
        %s6021 = scalar_lea.vmem %s6007, 336 [#allocation3]
        %v6022 = vld [vmem:[%s6021] ss:$2 sm:$0xff]
        %v6023 = vpack.c.bf16 %v6010, %v6008
        %v6024 = vpack.c.bf16 %v6014, %v6012
        %v6025 = vpack.c.bf16 %v6018, %v6016
        %v6026 = vpack.c.bf16 %v6022, %v6020
        %s6027 = scalar_lea.vmem %s6007, 1 [#allocation3]
        %v6028 = vld [vmem:[%s6027] ss:$2 sm:$0xff]
        %s6029 = scalar_lea.vmem %s6007, 49 [#allocation3]
        %v6030 = vld [vmem:[%s6029] ss:$2 sm:$0xff]
        %s6031 = scalar_lea.vmem %s6007, 97 [#allocation3]
        %v6032 = vld [vmem:[%s6031] ss:$2 sm:$0xff]
        %s6033 = scalar_lea.vmem %s6007, 145 [#allocation3]
        %v6034 = vld [vmem:[%s6033] ss:$2 sm:$0xff]
        %s6035 = scalar_lea.vmem %s6007, 193 [#allocation3]
        %v6036 = vld [vmem:[%s6035] ss:$2 sm:$0xff]
        %s6037 = scalar_lea.vmem %s6007, 241 [#allocation3]
        %v6038 = vld [vmem:[%s6037] ss:$2 sm:$0xff]
        %s6039 = scalar_lea.vmem %s6007, 289 [#allocation3]
        %v6040 = vld [vmem:[%s6039] ss:$2 sm:$0xff]
        %s6041 = scalar_lea.vmem %s6007, 337 [#allocation3]
        %v6042 = vld [vmem:[%s6041] ss:$2 sm:$0xff]
        %v6043 = vpack.c.bf16 %v6030, %v6028
        %v6044 = vpack.c.bf16 %v6034, %v6032
        %v6045 = vpack.c.bf16 %v6038, %v6036
        %v6046 = vpack.c.bf16 %v6042, %v6040
        %v6047 = vld [vmem:[#allocation9 + $0x180] sm:$0xf]
        %v6048 = vld [vmem:[#allocation9 + $0x184] sm:$0xf]
        %v6049 = vld [vmem:[#allocation9 + $0x188] sm:$0xf]
        %v6050 = vld [vmem:[#allocation9 + $0x18c] sm:$0xf]
        %v6051 = vld [vmem:[#allocation9 + $0x190] sm:$0xf]
        %v6052 = vld [vmem:[#allocation9 + $0x194] sm:$0xf]
        %v6053 = vld [vmem:[#allocation9 + $0x198] sm:$0xf]
        %v6054 = vld [vmem:[#allocation9 + $0x19c] sm:$0xf]
        %v6055 = vld [vmem:[#allocation9 + $0x1a0] sm:$0xf]
        %v6056 = vld [vmem:[#allocation9 + $0x1a4] sm:$0xf]
        %v6057 = vld [vmem:[#allocation9 + $0x1a8] sm:$0xf]
        %v6058 = vld [vmem:[#allocation9 + $0x1ac] sm:$0xf]
        %v6059 = vld [vmem:[#allocation9 + $0x1b0] sm:$0xf]
        %v6060 = vld [vmem:[#allocation9 + $0x1b4] sm:$0xf]
        %v6061 = vld [vmem:[#allocation9 + $0x1b8] sm:$0xf]
        %v6062 = vld [vmem:[#allocation9 + $0x1bc] sm:$0xf]
        %v6063 = vld [vmem:[#allocation9 + $0x1c0] sm:$0xf]
        %v6064 = vld [vmem:[#allocation9 + $0x1c4] sm:$0xf]
        %v6065 = vld [vmem:[#allocation9 + $0x1c8] sm:$0xf]
        %v6066 = vld [vmem:[#allocation9 + $0x1cc] sm:$0xf]
        %v6067 = vld [vmem:[#allocation9 + $0x1d0] sm:$0xf]
        %v6068 = vld [vmem:[#allocation9 + $0x1d4] sm:$0xf]
        %v6069 = vld [vmem:[#allocation9 + $0x1d8] sm:$0xf]
        %v6070 = vld [vmem:[#allocation9 + $0x1dc] sm:$0xf]
        %v6071 = vld [vmem:[#allocation9 + $0x1e0] sm:$0xf]
        %v6072 = vld [vmem:[#allocation9 + $0x1e4] sm:$0xf]
        %v6073 = vld [vmem:[#allocation9 + $0x1e8] sm:$0xf]
        %v6074 = vld [vmem:[#allocation9 + $0x1ec] sm:$0xf]
        %v6075 = vld [vmem:[#allocation9 + $0x1f0] sm:$0xf]
        %v6076 = vld [vmem:[#allocation9 + $0x1f4] sm:$0xf]
        %v6077 = vld [vmem:[#allocation9 + $0x1f8] sm:$0xf]
        %v6078 = vld [vmem:[#allocation9 + $0x1fc] sm:$0xf]
        %v6111 = vunpack.c.l.b16 %v6047
        %v6112 = vunpack.c.l.b16 %v6048
        %v6113 = vunpack.c.l.b16 %v6049
        %v6114 = vunpack.c.l.b16 %v6050
        %v6115 = vunpack.c.l.b16 %v6051
        %v6116 = vunpack.c.l.b16 %v6052
        %v6117 = vunpack.c.l.b16 %v6053
        %v6118 = vunpack.c.l.b16 %v6054
        %v6119 = vunpack.c.l.b16 %v6055
        %v6120 = vunpack.c.l.b16 %v6056
        %v6121 = vunpack.c.l.b16 %v6057
        %v6122 = vunpack.c.l.b16 %v6058
        %v6123 = vunpack.c.l.b16 %v6059
        %v6124 = vunpack.c.l.b16 %v6060
        %v6125 = vunpack.c.l.b16 %v6061
        %v6126 = vunpack.c.l.b16 %v6062
        %v6127 = vunpack.c.l.b16 %v6063
        %v6128 = vunpack.c.l.b16 %v6064
        %v6129 = vunpack.c.l.b16 %v6065
        %v6130 = vunpack.c.l.b16 %v6066
        %v6131 = vunpack.c.l.b16 %v6067
        %v6132 = vunpack.c.l.b16 %v6068
        %v6133 = vunpack.c.l.b16 %v6069
        %v6134 = vunpack.c.l.b16 %v6070
        %v6135 = vunpack.c.l.b16 %v6071
        %v6136 = vunpack.c.l.b16 %v6072
        %v6137 = vunpack.c.l.b16 %v6073
        %v6138 = vunpack.c.l.b16 %v6074
        %v6139 = vunpack.c.l.b16 %v6075
        %v6140 = vunpack.c.l.b16 %v6076
        %v6141 = vunpack.c.l.b16 %v6077
        %v6142 = vunpack.c.l.b16 %v6078
        %v6143 = vpack.c.b16 %v6112, %v6111
        %v6144 = vpack.c.b16 %v6114, %v6113
        %v6145 = vpack.c.b16 %v6116, %v6115
        %v6146 = vpack.c.b16 %v6118, %v6117
        %v6147 = vpack.c.b16 %v6120, %v6119
        %v6148 = vpack.c.b16 %v6122, %v6121
        %v6149 = vpack.c.b16 %v6124, %v6123
        %v6150 = vpack.c.b16 %v6126, %v6125
        %v6151 = vpack.c.b16 %v6128, %v6127
        %v6152 = vpack.c.b16 %v6130, %v6129
        %v6153 = vpack.c.b16 %v6132, %v6131
        %v6154 = vpack.c.b16 %v6134, %v6133
        %v6155 = vpack.c.b16 %v6136, %v6135
        %v6156 = vpack.c.b16 %v6138, %v6137
        %v6157 = vpack.c.b16 %v6140, %v6139
        %v6158 = vpack.c.b16 %v6142, %v6141
        %6175 = vmatprep.subr.bf16.mxu0 0
        %6176 = vmatpush1.bf16.msra.mxu0 %v6143
        %6177 = vmatprep.subr.bf16.mxu0 0
        %6178 = vmatpush1.bf16.msra.mxu0 %v6144
        %6179 = vmatprep.subr.bf16.mxu0 0
        %6180 = vmatpush1.bf16.msra.mxu0 %v6145
        %6181 = vmatprep.subr.bf16.mxu0 0
        %6182 = vmatpush1.bf16.msra.mxu0 %v6146
        %6183 = vmatprep.subr.bf16.mxu0 0
        %6184 = vmatpush1.bf16.msra.mxu0 %v6147
        %6185 = vmatprep.subr.bf16.mxu0 0
        %6186 = vmatpush1.bf16.msra.mxu0 %v6148
        %6187 = vmatprep.subr.bf16.mxu0 0
        %6188 = vmatpush1.bf16.msra.mxu0 %v6149
        %6189 = vmatprep.subr.bf16.mxu0 0
        %6190 = vmatpush1.bf16.msra.mxu0 %v6150
        %6191 = vmatprep.subr.bf16.mxu0 0
        %6192 = vmatpush1.bf16.msra.mxu0 %v6151
        %6193 = vmatprep.subr.bf16.mxu0 0
        %6194 = vmatpush1.bf16.msra.mxu0 %v6152
        %6195 = vmatprep.subr.bf16.mxu0 0
        %6196 = vmatpush1.bf16.msra.mxu0 %v6153
        %6197 = vmatprep.subr.bf16.mxu0 0
        %6198 = vmatpush1.bf16.msra.mxu0 %v6154
        %6199 = vmatprep.subr.bf16.mxu0 0
        %6200 = vmatpush1.bf16.msra.mxu0 %v6155
        %6201 = vmatprep.subr.bf16.mxu0 0
        %6202 = vmatpush1.bf16.msra.mxu0 %v6156
        %6203 = vmatprep.subr.bf16.mxu0 0
        %6204 = vmatpush1.bf16.msra.mxu0 %v6157
        %6205 = vmatprep.subr.bf16.mxu0 0
        %6206 = vmatpush1.bf16.msra.mxu0 %v6158
        %6207 = vmatprep.mubr.bf16.mxu0 %v6043
        %6208 = vmatmul.mubr.bf16.gmra.mrb[0].mxu0 %v6023
        %v6209 = vpop.f32.mrb[0].mxu0
        %v6210 = vadd.f32 0.0, %v6209
        %v6211 = vpop.f32.mrb[0].mxu0
        %v6212 = vpop.f32.mrb[0].mxu0
        %v6213 = vadd.f32 0.0, %v6212
        %v6214 = vpop.f32.mrb[0].mxu0
        %6215 = vmatprep.mubr.bf16.mxu0 %v6044
        %6216 = vmatmul.mubr.bf16.gmra.mrb[0].mxu0 %v6024
        %v6217 = vpop.f32.mrb[0].mxu0
        %v6218 = vadd.f32 0.0, %v6217
        %v6219 = vpop.f32.mrb[0].mxu0
        %v6220 = vpop.f32.mrb[0].mxu0
        %v6221 = vadd.f32 0.0, %v6220
        %v6222 = vpop.f32.mrb[0].mxu0
        %6223 = vmatprep.mubr.bf16.mxu0 %v6045
        %6224 = vmatmul.mubr.bf16.gmra.mrb[0].mxu0 %v6025
        %v6225 = vpop.f32.mrb[0].mxu0
        %v6226 = vadd.f32 0.0, %v6225
        %v6227 = vpop.f32.mrb[0].mxu0
        %v6228 = vpop.f32.mrb[0].mxu0
        %v6229 = vadd.f32 0.0, %v6228
        %v6230 = vpop.f32.mrb[0].mxu0
        %6231 = vmatprep.mubr.bf16.mxu0 %v6046
        %6232 = vmatmul.mubr.bf16.gmra.mrb[0].mxu0 %v6026
        %v6233 = vpop.f32.mrb[0].mxu0
        %v6234 = vadd.f32 0.0, %v6233
        %v6235 = vpop.f32.mrb[0].mxu0
        %v6236 = vpop.f32.mrb[0].mxu0
        %v6237 = vadd.f32 0.0, %v6236
        %v6238 = vpop.f32.mrb[0].mxu0
        %6239 = vdwg.mxu0
        %v6240 = vadd.f32 %v5999, %v6210
        %v6241 = vadd.f32 %v6000, %v6213
        %v6242 = vadd.f32 %v6001, %v6218
        %v6243 = vadd.f32 %v6002, %v6221
        %v6244 = vadd.f32 %v6003, %v6226
        %v6245 = vadd.f32 %v6004, %v6229
        %v6246 = vadd.f32 %v6005, %v6234
        %v6247 = vadd.f32 %v6006, %v6237
        %s6248 = scalar_lea.vmem %s6007, 2 [#allocation3]
        %v6249 = vld [vmem:[%s6248] ss:$2 sm:$0xff]
        %s6250 = scalar_lea.vmem %s6007, 50 [#allocation3]
        %v6251 = vld [vmem:[%s6250] ss:$2 sm:$0xff]
        %s6252 = scalar_lea.vmem %s6007, 98 [#allocation3]
        %v6253 = vld [vmem:[%s6252] ss:$2 sm:$0xff]
        %s6254 = scalar_lea.vmem %s6007, 146 [#allocation3]
        %v6255 = vld [vmem:[%s6254] ss:$2 sm:$0xff]
        %s6256 = scalar_lea.vmem %s6007, 194 [#allocation3]
        %v6257 = vld [vmem:[%s6256] ss:$2 sm:$0xff]
        %s6258 = scalar_lea.vmem %s6007, 242 [#allocation3]
        %v6259 = vld [vmem:[%s6258] ss:$2 sm:$0xff]
        %s6260 = scalar_lea.vmem %s6007, 290 [#allocation3]
        %v6261 = vld [vmem:[%s6260] ss:$2 sm:$0xff]
        %s6262 = scalar_lea.vmem %s6007, 338 [#allocation3]
        %v6263 = vld [vmem:[%s6262] ss:$2 sm:$0xff]
        %v6264 = vpack.c.bf16 %v6251, %v6249
        %v6265 = vpack.c.bf16 %v6255, %v6253
        %v6266 = vpack.c.bf16 %v6259, %v6257
        %v6267 = vpack.c.bf16 %v6263, %v6261
        %v6268 = vld [vmem:[#allocation9 + $0x200] sm:$0xf]
        %v6269 = vld [vmem:[#allocation9 + $0x204] sm:$0xf]
        %v6270 = vld [vmem:[#allocation9 + $0x208] sm:$0xf]
        %v6271 = vld [vmem:[#allocation9 + $0x20c] sm:$0xf]
        %v6272 = vld [vmem:[#allocation9 + $0x210] sm:$0xf]
        %v6273 = vld [vmem:[#allocation9 + $0x214] sm:$0xf]
        %v6274 = vld [vmem:[#allocation9 + $0x218] sm:$0xf]
        %v6275 = vld [vmem:[#allocation9 + $0x21c] sm:$0xf]
        %v6276 = vld [vmem:[#allocation9 + $0x220] sm:$0xf]
        %v6277 = vld [vmem:[#allocation9 + $0x224] sm:$0xf]
        %v6278 = vld [vmem:[#allocation9 + $0x228] sm:$0xf]
        %v6279 = vld [vmem:[#allocation9 + $0x22c] sm:$0xf]
        %v6280 = vld [vmem:[#allocation9 + $0x230] sm:$0xf]
        %v6281 = vld [vmem:[#allocation9 + $0x234] sm:$0xf]
        %v6282 = vld [vmem:[#allocation9 + $0x238] sm:$0xf]
        %v6283 = vld [vmem:[#allocation9 + $0x23c] sm:$0xf]
        %v6300 = vunpack.c.l.b16 %v6268
        %v6301 = vunpack.c.l.b16 %v6269
        %v6302 = vunpack.c.l.b16 %v6270
        %v6303 = vunpack.c.l.b16 %v6271
        %v6304 = vunpack.c.l.b16 %v6272
        %v6305 = vunpack.c.l.b16 %v6273
        %v6306 = vunpack.c.l.b16 %v6274
        %v6307 = vunpack.c.l.b16 %v6275
        %v6308 = vunpack.c.l.b16 %v6276
        %v6309 = vunpack.c.l.b16 %v6277
        %v6310 = vunpack.c.l.b16 %v6278
        %v6311 = vunpack.c.l.b16 %v6279
        %v6312 = vunpack.c.l.b16 %v6280
        %v6313 = vunpack.c.l.b16 %v6281
        %v6314 = vunpack.c.l.b16 %v6282
        %v6315 = vunpack.c.l.b16 %v6283
        %v6316 = vpack.c.b16 %v6301, %v6300
        %v6317 = vpack.c.b16 %v6303, %v6302
        %v6318 = vpack.c.b16 %v6305, %v6304
        %v6319 = vpack.c.b16 %v6307, %v6306
        %v6320 = vpack.c.b16 %v6309, %v6308
        %v6321 = vpack.c.b16 %v6311, %v6310
        %v6322 = vpack.c.b16 %v6313, %v6312
        %v6323 = vpack.c.b16 %v6315, %v6314
        %6332 = vmatprep.subr.bf16.mxu0 0
        %6333 = vmatpush1.bf16.msra.mxu0 %v6316
        %6334 = vmatprep.subr.bf16.mxu0 0
        %6335 = vmatpush1.bf16.msra.mxu0 %v6317
        %6336 = vmatprep.subr.bf16.mxu0 0
        %6337 = vmatpush1.bf16.msra.mxu0 %v6318
        %6338 = vmatprep.subr.bf16.mxu0 0
        %6339 = vmatpush1.bf16.msra.mxu0 %v6319
        %6340 = vmatprep.subr.bf16.mxu0 0
        %6341 = vmatpush1.bf16.msra.mxu0 %v6320
        %6342 = vmatprep.subr.bf16.mxu0 0
        %6343 = vmatpush1.bf16.msra.mxu0 %v6321
        %6344 = vmatprep.subr.bf16.mxu0 0
        %6345 = vmatpush1.bf16.msra.mxu0 %v6322
        %6346 = vmatprep.subr.bf16.mxu0 0
        %6347 = vmatpush1.bf16.msra.mxu0 %v6323
        %6348 = vmatprep.subr.bf16.mxu0 0
        %6349 = vmatpush1.bf16.msra.mxu0 0
        %6350 = vmatprep.subr.bf16.mxu0 0
        %6351 = vmatpush1.bf16.msra.mxu0 0
        %6352 = vmatprep.subr.bf16.mxu0 0
        %6353 = vmatpush1.bf16.msra.mxu0 0
        %6354 = vmatprep.subr.bf16.mxu0 0
        %6355 = vmatpush1.bf16.msra.mxu0 0
        %6356 = vmatprep.subr.bf16.mxu0 0
        %6357 = vmatpush1.bf16.msra.mxu0 0
        %6358 = vmatprep.subr.bf16.mxu0 0
        %6359 = vmatpush1.bf16.msra.mxu0 0
        %6360 = vmatprep.subr.bf16.mxu0 0
        %6361 = vmatpush1.bf16.msra.mxu0 0
        %6362 = vmatprep.subr.bf16.mxu0 0
        %6363 = vmatpush1.bf16.msra.mxu0 0
        %6364 = vmatprep.mubr.bf16.mxu0 0
        %6365 = vmatmul.mubr.bf16.gmra.mrb[0].mxu0 %v6264
        %v6366 = vpop.f32.mrb[0].mxu0
        %v6367 = vadd.f32 0.0, %v6366
        %v6368 = vpop.f32.mrb[0].mxu0
        %v6369 = vpop.f32.mrb[0].mxu0
        %v6370 = vadd.f32 0.0, %v6369
        %v6371 = vpop.f32.mrb[0].mxu0
        %6372 = vmatprep.mubr.bf16.mxu0 0
        %6373 = vmatmul.mubr.bf16.gmra.mrb[0].mxu0 %v6265
        %v6374 = vpop.f32.mrb[0].mxu0
        %v6375 = vadd.f32 0.0, %v6374
        %v6376 = vpop.f32.mrb[0].mxu0
        %v6377 = vpop.f32.mrb[0].mxu0
        %v6378 = vadd.f32 0.0, %v6377
        %v6379 = vpop.f32.mrb[0].mxu0
        %6380 = vmatprep.mubr.bf16.mxu0 0
        %6381 = vmatmul.mubr.bf16.gmra.mrb[0].mxu0 %v6266
        %v6382 = vpop.f32.mrb[0].mxu0
        %v6383 = vadd.f32 0.0, %v6382
        %v6384 = vpop.f32.mrb[0].mxu0
        %v6385 = vpop.f32.mrb[0].mxu0
        %v6386 = vadd.f32 0.0, %v6385
        %v6387 = vpop.f32.mrb[0].mxu0
        %6388 = vmatprep.mubr.bf16.mxu0 0
        %6389 = vmatmul.mubr.bf16.gmra.mrb[0].mxu0 %v6267
        %v6390 = vpop.f32.mrb[0].mxu0
        %v6391 = vadd.f32 0.0, %v6390
        %v6392 = vpop.f32.mrb[0].mxu0
        %v6393 = vpop.f32.mrb[0].mxu0
        %v6394 = vadd.f32 0.0, %v6393
        %v6395 = vpop.f32.mrb[0].mxu0
        %6396 = vdwg.mxu0
        %v6397 = vadd.f32 %v6240, %v6367
        %v6398 = vadd.f32 %v6241, %v6370
        %v6399 = vadd.f32 %v6242, %v6375
        %v6400 = vadd.f32 %v6243, %v6378
        %v6401 = vadd.f32 %v6244, %v6383
        %v6402 = vadd.f32 %v6245, %v6386
        %v6403 = vadd.f32 %v6246, %v6391
        %v6404 = vadd.f32 %v6247, %v6394
        %v6405 = vld [vmem:[%s6] sm:$0x1]
        %v6407 = vlaneseq
        %v6408 = vshrl.u32 %v6407, 7
        %v6409 = vsub.s32 0, %v6408
        %v6410 = vrot.slane %v6405, %v6409
        %v6412 = vadd.f32 %v6397, %v6410
        %v6413 = vadd.f32 %v6398, %v6410
        %v6414 = vadd.f32 %v6399, %v6410
        %v6415 = vadd.f32 %v6400, %v6410
        %v6416 = vadd.f32 %v6401, %v6410
        %v6417 = vadd.f32 %v6402, %v6410
        %v6418 = vadd.f32 %v6403, %v6410
        %v6419 = vadd.f32 %v6404, %v6410
        %v6420 = vld [vmem:[%s348] ss:$2 sm:$0xff]
        %s6421 = scalar_lea.vmem %s348, 32 [#allocation4]
        %v6422 = vld [vmem:[%s6421] ss:$2 sm:$0xff]
        %s6423 = scalar_lea.vmem %s348, 64 [#allocation4]
        %v6424 = vld [vmem:[%s6423] ss:$2 sm:$0xff]
        %s6425 = scalar_lea.vmem %s348, 96 [#allocation4]
        %v6426 = vld [vmem:[%s6425] ss:$2 sm:$0xff]
        %s6427 = scalar_lea.vmem %s348, 128 [#allocation4]
        %v6428 = vld [vmem:[%s6427] ss:$2 sm:$0xff]
        %s6429 = scalar_lea.vmem %s348, 160 [#allocation4]
        %v6430 = vld [vmem:[%s6429] ss:$2 sm:$0xff]
        %s6431 = scalar_lea.vmem %s348, 192 [#allocation4]
        %v6432 = vld [vmem:[%s6431] ss:$2 sm:$0xff]
        %s6433 = scalar_lea.vmem %s348, 224 [#allocation4]
        %v6434 = vld [vmem:[%s6433] ss:$2 sm:$0xff]
        %v6435 = vpack.c.bf16 %v6422, %v6420
        %v6436 = vpack.c.bf16 %v6426, %v6424
        %v6437 = vpack.c.bf16 %v6430, %v6428
        %v6438 = vpack.c.bf16 %v6434, %v6432
        %v6439 = vld [vmem:[#allocation10] sm:$0xf]
        %v6440 = vld [vmem:[#allocation10 + $0x4] sm:$0xf]
        %v6441 = vld [vmem:[#allocation10 + $0x8] sm:$0xf]
        %v6442 = vld [vmem:[#allocation10 + $0xc] sm:$0xf]
        %v6443 = vld [vmem:[#allocation10 + $0x10] sm:$0xf]
        %v6444 = vld [vmem:[#allocation10 + $0x14] sm:$0xf]
        %v6445 = vld [vmem:[#allocation10 + $0x18] sm:$0xf]
        %v6446 = vld [vmem:[#allocation10 + $0x1c] sm:$0xf]
        %v6447 = vld [vmem:[#allocation10 + $0x20] sm:$0xf]
        %v6448 = vld [vmem:[#allocation10 + $0x24] sm:$0xf]
        %v6449 = vld [vmem:[#allocation10 + $0x28] sm:$0xf]
        %v6450 = vld [vmem:[#allocation10 + $0x2c] sm:$0xf]
        %v6451 = vld [vmem:[#allocation10 + $0x30] sm:$0xf]
        %v6452 = vld [vmem:[#allocation10 + $0x34] sm:$0xf]
        %v6453 = vld [vmem:[#allocation10 + $0x38] sm:$0xf]
        %v6454 = vld [vmem:[#allocation10 + $0x3c] sm:$0xf]
        %v6455 = vld [vmem:[%s8] sm:$0x1]
        %v6457 = vlaneseq
        %v6458 = vshrl.u32 %v6457, 7
        %v6459 = vsub.s32 0, %v6458
        %v6460 = vrot.slane %v6455, %v6459
        %v6478 = vunpack.c.l.b16 %v6439
        %v6479 = vunpack.c.l.b16 %v6440
        %v6480 = vunpack.c.l.b16 %v6441
        %v6481 = vunpack.c.l.b16 %v6442
        %v6482 = vunpack.c.l.b16 %v6443
        %v6483 = vunpack.c.l.b16 %v6444
        %v6484 = vunpack.c.l.b16 %v6445
        %v6485 = vunpack.c.l.b16 %v6446
        %v6486 = vunpack.c.l.b16 %v6447
        %v6487 = vunpack.c.l.b16 %v6448
        %v6488 = vunpack.c.l.b16 %v6449
        %v6489 = vunpack.c.l.b16 %v6450
        %v6490 = vunpack.c.l.b16 %v6451
        %v6491 = vunpack.c.l.b16 %v6452
        %v6492 = vunpack.c.l.b16 %v6453
        %v6493 = vunpack.c.l.b16 %v6454
        %v6494 = vpack.c.b16 %v6479, %v6478
        %v6495 = vpack.c.b16 %v6481, %v6480
        %v6496 = vpack.c.b16 %v6483, %v6482
        %v6497 = vpack.c.b16 %v6485, %v6484
        %v6498 = vpack.c.b16 %v6487, %v6486
        %v6499 = vpack.c.b16 %v6489, %v6488
        %v6500 = vpack.c.b16 %v6491, %v6490
        %v6501 = vpack.c.b16 %v6493, %v6492
        %6510 = vmatprep.subr.bf16.mxu0 0
        %6511 = vmatpush1.bf16.msra.mxu0 %v6494
        %6512 = vmatprep.subr.bf16.mxu0 0
        %6513 = vmatpush1.bf16.msra.mxu0 %v6495
        %6514 = vmatprep.subr.bf16.mxu0 0
        %6515 = vmatpush1.bf16.msra.mxu0 %v6496
        %6516 = vmatprep.subr.bf16.mxu0 0
        %6517 = vmatpush1.bf16.msra.mxu0 %v6497
        %6518 = vmatprep.subr.bf16.mxu0 0
        %6519 = vmatpush1.bf16.msra.mxu0 %v6498
        %6520 = vmatprep.subr.bf16.mxu0 0
        %6521 = vmatpush1.bf16.msra.mxu0 %v6499
        %6522 = vmatprep.subr.bf16.mxu0 0
        %6523 = vmatpush1.bf16.msra.mxu0 %v6500
        %6524 = vmatprep.subr.bf16.mxu0 0
        %6525 = vmatpush1.bf16.msra.mxu0 %v6501
        %6526 = vmatprep.subr.bf16.mxu0 0
        %6527 = vmatpush1.bf16.msra.mxu0 0
        %6528 = vmatprep.subr.bf16.mxu0 0
        %6529 = vmatpush1.bf16.msra.mxu0 0
        %6530 = vmatprep.subr.bf16.mxu0 0
        %6531 = vmatpush1.bf16.msra.mxu0 0
        %6532 = vmatprep.subr.bf16.mxu0 0
        %6533 = vmatpush1.bf16.msra.mxu0 0
        %6534 = vmatprep.subr.bf16.mxu0 0
        %6535 = vmatpush1.bf16.msra.mxu0 0
        %6536 = vmatprep.subr.bf16.mxu0 0
        %6537 = vmatpush1.bf16.msra.mxu0 0
        %6538 = vmatprep.subr.bf16.mxu0 0
        %6539 = vmatpush1.bf16.msra.mxu0 0
        %6540 = vmatprep.subr.bf16.mxu0 0
        %6541 = vmatpush1.bf16.msra.mxu0 0
        %6542 = vmatprep.mubr.bf16.mxu0 0
        %6543 = vmatmul.mubr.bf16.gmra.mrb[0].mxu0 %v6435
        %v6544 = vpop.f32.mrb[0].mxu0
        %v6545 = vadd.f32 %v6460, %v6544
        %v6546 = vpop.f32.mrb[0].mxu0
        %v6547 = vpop.f32.mrb[0].mxu0
        %v6548 = vadd.f32 %v6460, %v6547
        %v6549 = vpop.f32.mrb[0].mxu0
        %6550 = vmatprep.mubr.bf16.mxu0 0
        %6551 = vmatmul.mubr.bf16.gmra.mrb[0].mxu0 %v6436
        %v6552 = vpop.f32.mrb[0].mxu0
        %v6553 = vadd.f32 %v6460, %v6552
        %v6554 = vpop.f32.mrb[0].mxu0
        %v6555 = vpop.f32.mrb[0].mxu0
        %v6556 = vadd.f32 %v6460, %v6555
        %v6557 = vpop.f32.mrb[0].mxu0
        %6558 = vmatprep.mubr.bf16.mxu0 0
        %6559 = vmatmul.mubr.bf16.gmra.mrb[0].mxu0 %v6437
        %v6560 = vpop.f32.mrb[0].mxu0
        %v6561 = vadd.f32 %v6460, %v6560
        %v6562 = vpop.f32.mrb[0].mxu0
        %v6563 = vpop.f32.mrb[0].mxu0
        %v6564 = vadd.f32 %v6460, %v6563
        %v6565 = vpop.f32.mrb[0].mxu0
        %6566 = vmatprep.mubr.bf16.mxu0 0
        %6567 = vmatmul.mubr.bf16.gmra.mrb[0].mxu0 %v6438
        %v6568 = vpop.f32.mrb[0].mxu0
        %v6569 = vadd.f32 %v6460, %v6568
        %v6570 = vpop.f32.mrb[0].mxu0
        %v6571 = vpop.f32.mrb[0].mxu0
        %v6572 = vadd.f32 %v6460, %v6571
        %v6573 = vpop.f32.mrb[0].mxu0
        %6574 = vdwg.mxu0
        %v6575 = vadd.f32 %v6412, %v6545
        %v6576 = vadd.f32 %v6413, %v6548
        %v6577 = vadd.f32 %v6414, %v6553
        %v6578 = vadd.f32 %v6415, %v6556
        %v6579 = vadd.f32 %v6416, %v6561
        %v6580 = vadd.f32 %v6417, %v6564
        %v6581 = vadd.f32 %v6418, %v6569
        %v6582 = vadd.f32 %v6419, %v6572
        %6583 = vst [vmem:[%s394] sm:$0xff] %v6575
        %6584 = vst [vmem:[%s394 + $0x8] sm:$0xff] %v6576
        %6585 = vst [vmem:[%s394 + $0x10] sm:$0xff] %v6577
        %6586 = vst [vmem:[%s394 + $0x18] sm:$0xff] %v6578
        %6587 = vst [vmem:[%s394 + $0x20] sm:$0xff] %v6579
        %6588 = vst [vmem:[%s394 + $0x28] sm:$0xff] %v6580
        %6589 = vst [vmem:[%s394 + $0x30] sm:$0xff] %v6581
        %6590 = vst [vmem:[%s394 + $0x38] sm:$0xff] %v6582
        %s6591 = sand.u32 %s230, 1
        %s6592 = scalar_lea.sflag [#allocation6], %s6591
        %s6593 = sand.u32 %s230, 1
        %s6594 = smul.addr %s6593, 64
        %s6595 = scalar_lea.vmem [#allocation12], %s6594
        // Predicated region
        $region73: #{tpu_custom_call.1} parent=55 // pred_check
          %p6596 = pneg %p240
        $region74: #{tpu_custom_call.1} parent=55 // pred_check_branch
          %6598 = sbr.rel (%p6596) target = $region76
        $region75: #{tpu_custom_call.1} parent=55 // pred_region
          %s6600 = ssub.s32 1024, 1024
          %6601 = vsyncadd %s6592, %s6600
          %s6602 = smul.addr %s28, 8
          %s6603 = smul.addr %s6602, 128
          %s6604 = scalar_lea.hbm %s9, %s6603
          %s6605 = sshll.u32 %s6595, 4
          %s6606 = int_to_ptr.vmem [resolvable:$true] %s6605
          %6611 = dma.vmem_to_hbm [thread:$0]  %s6606, 1024, %s6604, %s6592, 128, 128, 8
        $region76: #{tpu_custom_call.1} parent=55 // pred_fallthru
          _
      $region56: #{tpu_custom_call.1} parent=5 // pred_fallthru
        _
      %p6612 = scmp.le.s32.totalorder 2, %s23
      // Predicated region
      $region77: #{tpu_custom_call.1} parent=5 // pred_check
        %p6613 = pneg %p6612
      $region78: #{tpu_custom_call.1} parent=5 // pred_check_branch
        %6615 = sbr.rel (%p6613) target = $region80
      $region79: #{tpu_custom_call.1} parent=5 // pred_region
        %s6616 = ssub.s32 %s23, 2
        // Predicated region
        $region81: #{tpu_custom_call.1} parent=79 // pred_check
          %p6617 = pneg %p246
        $region82: #{tpu_custom_call.1} parent=79 // pred_check_branch
          %6619 = sbr.rel (%p6617) target = $region84
        $region83: #{tpu_custom_call.1} parent=79 // pred_region
          %s6620 = sand.u32 %s231, 1
          %s6621 = scalar_lea.sflag [#allocation6], %s6620
          %s6622 = sand.u32 %s231, 1
          %s6623 = smul.addr %s6622, 64
          %s6624 = scalar_lea.vmem [#allocation12], %s6623
          %6625 = dma.done %s6621, 1024
        $region84: #{tpu_custom_call.1} parent=79 // pred_fallthru
          _
      $region80: #{tpu_custom_call.1} parent=5 // pred_fallthru
        _
    $region6: #{tpu_custom_call.1} parent=1 // loop_footer
      %s27 = sadd.s32 1, %s23
    $region7: #{tpu_custom_call.1} parent=1 // loop_footer_branch
      %22 = sbr.rel target = $region3
    $region8: #{tpu_custom_call.1} parent=1 // loop_exit
      _
    %6626 = vsyncpa [#allocation5], 1
    %s6627 = scalar_lea.sflag [#allocation5], 1
    %6628 = vsyncpa %s6627, 1
    %6629 = vsyncpa [#allocation8], 1
    %6630 = vsyncpa [#allocation11], 1
    %6631 = vsyncpa [#allocation6], 1
    %s6632 = scalar_lea.sflag [#allocation6], 1
    %6633 = vsyncpa %s6632, 1

</llo_original>
